<compile_context>
chip_gen: v7x
topology: tpu7x:2x2x1
jax: 0.10.0
libtpu: 0.0.40
codegen_flags: <defaults>
</compile_context>

<pallas_src>
import math

import jax
import jax.numpy as jnp
import numpy as np
from jax import lax
from jax.experimental import pallas as pl
from jax.experimental.pallas import tpu as pltpu


# ----------------------------------------------------------------------------
# Deterministic Haar reconstruction filters (pywt coefficients, hardcoded).
# Mirrors create_wavelet_filter(..., 'haar', ...) -> rec_filters exactly.
# Only used by the pure-JAX reference; the kernel bakes in the +/-0.5 values.
# ----------------------------------------------------------------------------
def make_haar_rec_filters():
    s = 1.0 / math.sqrt(2.0)
    rec_lo = jnp.array([s, s], dtype=jnp.float32)
    rec_hi = jnp.array([s, -s], dtype=jnp.float32)
    return jnp.stack(
        [
            jnp.outer(rec_lo, rec_lo),
            jnp.outer(rec_hi, rec_lo),
            jnp.outer(rec_lo, rec_hi),
            jnp.outer(rec_hi, rec_hi),
        ],
        axis=0,
    )  # (4, 2, 2)


# ----------------------------------------------------------------------------
# Kernel bodies.
# ----------------------------------------------------------------------------
def _butterfly(x_ref):
    # x_ref: (TBC, 4, TH, W) -- the 4 sub-bands of TBC channels.
    # y[2i+a, 2j+b] = 0.5 * (x0 + (-1)^a x1 + (-1)^b x2 + (-1)^(a+b) x3)
    x0 = x_ref[:, 0].astype(jnp.float32)
    x1 = x_ref[:, 1].astype(jnp.float32)
    x2 = x_ref[:, 2].astype(jnp.float32)
    x3 = x_ref[:, 3].astype(jnp.float32)
    u = x0 + x1          # even output rows
    d = x0 - x1          # odd output rows
    s = x2 + x3          # even output cols
    t = x2 - x3          # odd output cols
    p00 = (u + s) * 0.5  # y[2i  , 2j  ]
    p01 = (u - s) * 0.5  # y[2i  , 2j+1]
    p10 = (d + t) * 0.5  # y[2i+1, 2j  ]
    p11 = (d - t) * 0.5  # y[2i+1, 2j+1]
    return p00, p01, p10, p11


def _idwt_fused_kernel(x_ref, o_ref):
    # o_ref: (TBC, TH, 4*W).  Row i of a channel holds
    # [y[2i, 0:2w] | y[2i+1, 0:2w]], so the (B*C, h, 4w) output array is a
    # pure bitcast-reshape away from (B, C, 2h, 2w).
    p00, p01, p10, p11 = _butterfly(x_ref)
    tbc, th, w = p00.shape
    even = jnp.stack([p00, p01], axis=-1).reshape(tbc, th, 2 * w)  # lane interleave
    odd = jnp.stack([p10, p11], axis=-1).reshape(tbc, th, 2 * w)
    o_ref[...] = jnp.concatenate([even, odd], axis=-1).astype(o_ref.dtype)


def _idwt_poly_kernel(x_ref, o_ref):
    # Fallback: o_ref (TBC, 4, TH, W); plane 2a+b = polyphase y[2i+a, 2j+b].
    p00, p01, p10, p11 = _butterfly(x_ref)
    o_ref[:, 0] = p00.astype(o_ref.dtype)
    o_ref[:, 1] = p01.astype(o_ref.dtype)
    o_ref[:, 2] = p10.astype(o_ref.dtype)
    o_ref[:, 3] = p11.astype(o_ref.dtype)


# ----------------------------------------------------------------------------
# Tiling heuristic: ~2 MiB input blocks (output block is the same size),
# rows tiled in multiples of 8, several channels batched per grid step.
# Double-buffered in+out -> ~8 MiB VMEM, safe on every TPU generation.
# ----------------------------------------------------------------------------
_TARGET_BLOCK_BYTES = 2 << 20


def _pick_tiles(n_bc, h, w, itemsize):
    row_bytes = 4 * w * itemsize  # one row across the 4 sub-bands
    th = h
    if h % 8 == 0:
        best = None
        d = 8
        while d <= h:
            if h % d == 0 and d * row_bytes <= _TARGET_BLOCK_BYTES:
                best = d
            d += 8
        th = best if best is not None else 8
    per_ch = 4 * th * w * itemsize
    tbc = 1
    for cand in range(1, n_bc + 1):
        if n_bc % cand == 0 and cand * per_ch <= _TARGET_BLOCK_BYTES:
            tbc = cand
    return tbc, th


def _idwt_pallas_fused(x_flat, h, w):
    n_bc = x_flat.shape[0]
    tbc, th = _pick_tiles(n_bc, h, w, x_flat.dtype.itemsize)
    grid = (n_bc // tbc, h // th)
    return pl.pallas_call(
        _idwt_fused_kernel,
        out_shape=jax.ShapeDtypeStruct((n_bc, h, 4 * w), x_flat.dtype),
        grid=grid,
        in_specs=[pl.BlockSpec((tbc, 4, th, w), lambda i, r: (i, 0, r, 0))],
        out_specs=pl.BlockSpec((tbc, th, 4 * w), lambda i, r: (i, r, 0)),
        compiler_params=pltpu.CompilerParams(
            dimension_semantics=("parallel", "parallel")
        ),
    )(x_flat)


def _idwt_pallas_poly(x_flat, h, w):
    n_bc = x_flat.shape[0]
    tbc, th = _pick_tiles(n_bc, h, w, x_flat.dtype.itemsize)
    grid = (n_bc // tbc, h // th)
    return pl.pallas_call(
        _idwt_poly_kernel,
        out_shape=jax.ShapeDtypeStruct((n_bc, 4, h, w), x_flat.dtype),
        grid=grid,
        in_specs=[pl.BlockSpec((tbc, 4, th, w), lambda i, r: (i, 0, r, 0))],
        out_specs=pl.BlockSpec((tbc, 4, th, w), lambda i, r: (i, 0, r, 0)),
        compiler_params=pltpu.CompilerParams(
            dimension_semantics=("parallel", "parallel")
        ),
    )(x_flat)


# ----------------------------------------------------------------------------
# Pure-JAX reference implementing the exact PyTorch conv_transpose2d semantics
# (lhs-dilated forward conv with flipped kernel), used to validate the kernel.
# ----------------------------------------------------------------------------
def reference_idwt(x, rec_filters):
    B, C4, h, w = x.shape
    C = C4 // 4
    k = rec_filters.shape[-1]
    pad = k // 2 - 1
    w_fwd = jnp.broadcast_to(rec_filters[:, ::-1, ::-1][None], (C, 4, k, k))
    return lax.conv_general_dilated(
        x,
        w_fwd,
        window_strides=(1, 1),
        padding=((k - 1 - pad, k - 1 - pad), (k - 1 - pad, k - 1 - pad)),
        lhs_dilation=(2, 2),
        dimension_numbers=("NCHW", "OIHW", "NCHW"),
        feature_group_count=C,
    )


# ----------------------------------------------------------------------------
# One-time cached capability probe for the fused in-kernel lane interleave.
# ----------------------------------------------------------------------------
_FUSED_OK = None


def _fused_store_supported():
    global _FUSED_OK
    if _FUSED_OK is None:
        try:
            b, c, hh, ww = 2, 2, 8, 16
            xt = (
                jnp.arange(b * 4 * c * hh * ww, dtype=jnp.float32).reshape(
                    b, 4 * c, hh, ww
                )
                * 0.01
                - 2.0
            )
            got = _idwt_pallas_fused(xt.reshape(b * c, 4, hh, ww), hh, ww)
            got = got.reshape(b, c, 2 * hh, 2 * ww)
            want = reference_idwt(xt, make_haar_rec_filters())
            _FUSED_OK = bool(
                np.allclose(np.asarray(got), np.asarray(want), atol=1e-4, rtol=1e-5)
            )
        except Exception:
            _FUSED_OK = False
    return _FUSED_OK


# ----------------------------------------------------------------------------
# Public wrapper (forward pass of Conv_IDWT_2D with wave='haar').
# ----------------------------------------------------------------------------
def new_idwt_2d(x):
    """x: (B, 4*C, h, w) -> (B, C, 2h, 2w), inverse 2D Haar wavelet transform."""
    B, C4, h, w = x.shape
    assert C4 % 4 == 0, "input channel count must be a multiple of 4"
    C = C4 // 4
    x_flat = x.reshape(B * C, 4, h, w)  # pure metadata reshape

    if _fused_store_supported():
        try:
            out = _idwt_pallas_fused(x_flat, h, w)      # (B*C, h, 4w)
            return out.reshape(B, C, 2 * h, 2 * w)      # pure bitcast reshape
        except Exception:
            pass  # fall back below

    # Fallback: polyphase output + one XLA reassembly pass.
    out = _idwt_pallas_poly(x_flat, h, w)               # (B*C, 4, h, w)
    return (
        out.reshape(B, C, 2, 2, h, w)
        .transpose(0, 1, 4, 2, 5, 3)
        .reshape(B, C, 2 * h, 2 * w)
    )


if __name__ == "__main__":
    B, C, h, w = 2, 4, 16, 16  # input has 4*C = 16 channels; output is (B, C, 32, 32)
    key = jax.random.PRNGKey(0)
    x = jax.random.normal(key, (B, 4 * C, h, w), dtype=jnp.float32)

    y = jax.block_until_ready(new_idwt_2d(x))
    y_ref = jax.block_until_ready(reference_idwt(x, make_haar_rec_filters()))

    assert y.shape == (B, C, 2 * h, 2 * w), y.shape
    np.testing.assert_allclose(np.asarray(y), np.asarray(y_ref), atol=1e-5, rtol=1e-5)

    print("KERNEL_OK")
</pallas_src>

<mosaic_0001>
module attributes {stable_mosaic.version = 11 : i64} {
  func.func @_idwt_fused_kernel(%arg0: i32, %arg1: i32, %arg2: memref<4x4x8x16xf32, #tpu.memory_space<vmem>>, %arg3: memref<4x8x64xf32, #tpu.memory_space<vmem>>) attributes {dimension_semantics = [#tpu.dimension_semantics<parallel>, #tpu.dimension_semantics<parallel>], iteration_bounds = array<i64: 1, 1>, scalar_prefetch = 0 : i64, scratch_operands = 0 : i64, tpu.core_type = #tpu.core_type<tc>, window_params = [{transform_indices = @transform_0, window_bounds = array<i64: 4, 4, 8, 16>}, {transform_indices = @transform_1, window_bounds = array<i64: 4, 8, 64>}]} {
    %c0 = arith.constant 0 : index
    %c0_0 = arith.constant 0 : index
    %c0_1 = arith.constant 0 : index
    %c0_2 = arith.constant 0 : index
    %0 = vector.load %arg2[%c0, %c0_0, %c0_1, %c0_2] : memref<4x4x8x16xf32, #tpu.memory_space<vmem>>, vector<4x1x8x16xf32>
    %1 = vector.shape_cast %0 : vector<4x1x8x16xf32> to vector<4x8x16xf32>
    %c0_3 = arith.constant 0 : index
    %c1 = arith.constant 1 : index
    %c0_4 = arith.constant 0 : index
    %c0_5 = arith.constant 0 : index
    %2 = vector.load %arg2[%c0_3, %c1, %c0_4, %c0_5] : memref<4x4x8x16xf32, #tpu.memory_space<vmem>>, vector<4x1x8x16xf32>
    %3 = vector.shape_cast %2 : vector<4x1x8x16xf32> to vector<4x8x16xf32>
    %c0_6 = arith.constant 0 : index
    %c2 = arith.constant 2 : index
    %c0_7 = arith.constant 0 : index
    %c0_8 = arith.constant 0 : index
    %4 = vector.load %arg2[%c0_6, %c2, %c0_7, %c0_8] : memref<4x4x8x16xf32, #tpu.memory_space<vmem>>, vector<4x1x8x16xf32>
    %5 = vector.shape_cast %4 : vector<4x1x8x16xf32> to vector<4x8x16xf32>
    %c0_9 = arith.constant 0 : index
    %c3 = arith.constant 3 : index
    %c0_10 = arith.constant 0 : index
    %c0_11 = arith.constant 0 : index
    %6 = vector.load %arg2[%c0_9, %c3, %c0_10, %c0_11] : memref<4x4x8x16xf32, #tpu.memory_space<vmem>>, vector<4x1x8x16xf32>
    %7 = vector.shape_cast %6 : vector<4x1x8x16xf32> to vector<4x8x16xf32>
    %8 = arith.addf %1, %3 : vector<4x8x16xf32>
    %9 = arith.subf %1, %3 : vector<4x8x16xf32>
    %10 = arith.addf %5, %7 : vector<4x8x16xf32>
    %11 = arith.subf %5, %7 : vector<4x8x16xf32>
    %12 = arith.addf %8, %10 : vector<4x8x16xf32>
    %cst = arith.constant 5.000000e-01 : f32
    %13 = vector.broadcast %cst : f32 to vector<4x8x16xf32>
    %14 = arith.mulf %12, %13 : vector<4x8x16xf32>
    %15 = arith.subf %8, %10 : vector<4x8x16xf32>
    %cst_12 = arith.constant 5.000000e-01 : f32
    %16 = vector.broadcast %cst_12 : f32 to vector<4x8x16xf32>
    %17 = arith.mulf %15, %16 : vector<4x8x16xf32>
    %18 = arith.addf %9, %11 : vector<4x8x16xf32>
    %cst_13 = arith.constant 5.000000e-01 : f32
    %19 = vector.broadcast %cst_13 : f32 to vector<4x8x16xf32>
    %20 = arith.mulf %18, %19 : vector<4x8x16xf32>
    %21 = arith.subf %9, %11 : vector<4x8x16xf32>
    %cst_14 = arith.constant 5.000000e-01 : f32
    %22 = vector.broadcast %cst_14 : f32 to vector<4x8x16xf32>
    %23 = arith.mulf %21, %22 : vector<4x8x16xf32>
    %24 = vector.shape_cast %14 : vector<4x8x16xf32> to vector<4x8x16x1xf32>
    %25 = vector.shape_cast %17 : vector<4x8x16xf32> to vector<4x8x16x1xf32>
    %26 = tpu.concatenate %24, %25 in 3 : vector<4x8x16x1xf32>, vector<4x8x16x1xf32> -> vector<4x8x16x2xf32>
    %27 = vector.shape_cast %26 : vector<4x8x16x2xf32> to vector<4x8x32xf32>
    %28 = vector.shape_cast %20 : vector<4x8x16xf32> to vector<4x8x16x1xf32>
    %29 = vector.shape_cast %23 : vector<4x8x16xf32> to vector<4x8x16x1xf32>
    %30 = tpu.concatenate %28, %29 in 3 : vector<4x8x16x1xf32>, vector<4x8x16x1xf32> -> vector<4x8x16x2xf32>
    %31 = vector.shape_cast %30 : vector<4x8x16x2xf32> to vector<4x8x32xf32>
    %32 = tpu.concatenate %27, %31 in 2 : vector<4x8x32xf32>, vector<4x8x32xf32> -> vector<4x8x64xf32>
    %c0_15 = arith.constant 0 : index
    %c0_16 = arith.constant 0 : index
    %c0_17 = arith.constant 0 : index
    %33 = vector.load %arg3[%c0_15, %c0_16, %c0_17] : memref<4x8x64xf32, #tpu.memory_space<vmem>>, vector<4x8x64xf32>
    tpu.vector_store %arg3[%c0_15, %c0_16, %c0_17], %32 {strides = array<i32>} : memref<4x8x64xf32, #tpu.memory_space<vmem>>, vector<4x8x64xf32>,
    return
  }
  func.func @transform_0(%arg0: i32, %arg1: i32) -> (i32, i32, i32, i32) {
    %c0_i32 = arith.constant 0 : i32
    %c0_i32_0 = arith.constant 0 : i32
    %c0_i32_1 = arith.constant 0 : i32
    return %arg0, %c0_i32, %arg1, %c0_i32_0 : i32, i32, i32, i32
  }
  func.func @transform_1(%arg0: i32, %arg1: i32) -> (i32, i32, i32) {
    %c0_i32 = arith.constant 0 : i32
    %c0_i32_0 = arith.constant 0 : i32
    return %arg0, %arg1, %c0_i32 : i32, i32, i32
  }
}

module attributes {stable_mosaic.version = 11 : i64} {
  func.func @_idwt_poly_kernel(%arg0: i32, %arg1: i32, %arg2: memref<8x4x16x16xf32, #tpu.memory_space<vmem>>, %arg3: memref<8x4x16x16xf32, #tpu.memory_space<vmem>>) attributes {dimension_semantics = [#tpu.dimension_semantics<parallel>, #tpu.dimension_semantics<parallel>], iteration_bounds = array<i64: 1, 1>, scalar_prefetch = 0 : i64, scratch_operands = 0 : i64, tpu.core_type = #tpu.core_type<tc>, window_params = [{transform_indices = @transform_0, window_bounds = array<i64: 8, 4, 16, 16>}, {transform_indices = @transform_1, window_bounds = array<i64: 8, 4, 16, 16>}]} {
    %c0 = arith.constant 0 : index
    %c0_0 = arith.constant 0 : index
    %c0_1 = arith.constant 0 : index
    %c0_2 = arith.constant 0 : index
    %0 = vector.load %arg2[%c0, %c0_0, %c0_1, %c0_2] : memref<8x4x16x16xf32, #tpu.memory_space<vmem>>, vector<8x1x16x16xf32>
    %1 = vector.shape_cast %0 : vector<8x1x16x16xf32> to vector<8x16x16xf32>
    %c0_3 = arith.constant 0 : index
    %c1 = arith.constant 1 : index
    %c0_4 = arith.constant 0 : index
    %c0_5 = arith.constant 0 : index
    %2 = vector.load %arg2[%c0_3, %c1, %c0_4, %c0_5] : memref<8x4x16x16xf32, #tpu.memory_space<vmem>>, vector<8x1x16x16xf32>
    %3 = vector.shape_cast %2 : vector<8x1x16x16xf32> to vector<8x16x16xf32>
    %c0_6 = arith.constant 0 : index
    %c2 = arith.constant 2 : index
    %c0_7 = arith.constant 0 : index
    %c0_8 = arith.constant 0 : index
    %4 = vector.load %arg2[%c0_6, %c2, %c0_7, %c0_8] : memref<8x4x16x16xf32, #tpu.memory_space<vmem>>, vector<8x1x16x16xf32>
    %5 = vector.shape_cast %4 : vector<8x1x16x16xf32> to vector<8x16x16xf32>
    %c0_9 = arith.constant 0 : index
    %c3 = arith.constant 3 : index
    %c0_10 = arith.constant 0 : index
    %c0_11 = arith.constant 0 : index
    %6 = vector.load %arg2[%c0_9, %c3, %c0_10, %c0_11] : memref<8x4x16x16xf32, #tpu.memory_space<vmem>>, vector<8x1x16x16xf32>
    %7 = vector.shape_cast %6 : vector<8x1x16x16xf32> to vector<8x16x16xf32>
    %8 = arith.addf %1, %3 : vector<8x16x16xf32>
    %9 = arith.subf %1, %3 : vector<8x16x16xf32>
    %10 = arith.addf %5, %7 : vector<8x16x16xf32>
    %11 = arith.subf %5, %7 : vector<8x16x16xf32>
    %12 = arith.addf %8, %10 : vector<8x16x16xf32>
    %cst = arith.constant 5.000000e-01 : f32
    %13 = vector.broadcast %cst : f32 to vector<8x16x16xf32>
    %14 = arith.mulf %12, %13 : vector<8x16x16xf32>
    %15 = arith.subf %8, %10 : vector<8x16x16xf32>
    %cst_12 = arith.constant 5.000000e-01 : f32
    %16 = vector.broadcast %cst_12 : f32 to vector<8x16x16xf32>
    %17 = arith.mulf %15, %16 : vector<8x16x16xf32>
    %18 = arith.addf %9, %11 : vector<8x16x16xf32>
    %cst_13 = arith.constant 5.000000e-01 : f32
    %19 = vector.broadcast %cst_13 : f32 to vector<8x16x16xf32>
    %20 = arith.mulf %18, %19 : vector<8x16x16xf32>
    %21 = arith.subf %9, %11 : vector<8x16x16xf32>
    %cst_14 = arith.constant 5.000000e-01 : f32
    %22 = vector.broadcast %cst_14 : f32 to vector<8x16x16xf32>
    %23 = arith.mulf %21, %22 : vector<8x16x16xf32>
    %c0_15 = arith.constant 0 : index
    %c0_16 = arith.constant 0 : index
    %c0_17 = arith.constant 0 : index
    %c0_18 = arith.constant 0 : index
    %24 = vector.load %arg3[%c0_15, %c0_16, %c0_17, %c0_18] : memref<8x4x16x16xf32, #tpu.memory_space<vmem>>, vector<8x1x16x16xf32>
    %25 = vector.shape_cast %24 : vector<8x1x16x16xf32> to vector<8x16x16xf32>
    %26 = vector.shape_cast %14 : vector<8x16x16xf32> to vector<8x1x16x16xf32>
    tpu.vector_store %arg3[%c0_15, %c0_16, %c0_17, %c0_18], %26 {strides = array<i32>} : memref<8x4x16x16xf32, #tpu.memory_space<vmem>>, vector<8x1x16x16xf32>,
    %c0_19 = arith.constant 0 : index
    %c1_20 = arith.constant 1 : index
    %c0_21 = arith.constant 0 : index
    %c0_22 = arith.constant 0 : index
    %27 = vector.load %arg3[%c0_19, %c1_20, %c0_21, %c0_22] : memref<8x4x16x16xf32, #tpu.memory_space<vmem>>, vector<8x1x16x16xf32>
    %28 = vector.shape_cast %27 : vector<8x1x16x16xf32> to vector<8x16x16xf32>
    %29 = vector.shape_cast %17 : vector<8x16x16xf32> to vector<8x1x16x16xf32>
    tpu.vector_store %arg3[%c0_19, %c1_20, %c0_21, %c0_22], %29 {strides = array<i32>} : memref<8x4x16x16xf32, #tpu.memory_space<vmem>>, vector<8x1x16x16xf32>,
    %c0_23 = arith.constant 0 : index
    %c2_24 = arith.constant 2 : index
    %c0_25 = arith.constant 0 : index
    %c0_26 = arith.constant 0 : index
    %30 = vector.load %arg3[%c0_23, %c2_24, %c0_25, %c0_26] : memref<8x4x16x16xf32, #tpu.memory_space<vmem>>, vector<8x1x16x16xf32>
    %31 = vector.shape_cast %30 : vector<8x1x16x16xf32> to vector<8x16x16xf32>
    %32 = vector.shape_cast %20 : vector<8x16x16xf32> to vector<8x1x16x16xf32>
    tpu.vector_store %arg3[%c0_23, %c2_24, %c0_25, %c0_26], %32 {strides = array<i32>} : memref<8x4x16x16xf32, #tpu.memory_space<vmem>>, vector<8x1x16x16xf32>,
    %c0_27 = arith.constant 0 : index
    %c3_28 = arith.constant 3 : index
    %c0_29 = arith.constant 0 : index
    %c0_30 = arith.constant 0 : index
    %33 = vector.load %arg3[%c0_27, %c3_28, %c0_29, %c0_30] : memref<8x4x16x16xf32, #tpu.memory_space<vmem>>, vector<8x1x16x16xf32>
    %34 = vector.shape_cast %33 : vector<8x1x16x16xf32> to vector<8x16x16xf32>
    %35 = vector.shape_cast %23 : vector<8x16x16xf32> to vector<8x1x16x16xf32>
    tpu.vector_store %arg3[%c0_27, %c3_28, %c0_29, %c0_30], %35 {strides = array<i32>} : memref<8x4x16x16xf32, #tpu.memory_space<vmem>>, vector<8x1x16x16xf32>,
    return
  }
  func.func @transform_0(%arg0: i32, %arg1: i32) -> (i32, i32, i32, i32) {
    %c0_i32 = arith.constant 0 : i32
    %c0_i32_0 = arith.constant 0 : i32
    %c0_i32_1 = arith.constant 0 : i32
    return %arg0, %c0_i32, %arg1, %c0_i32_0 : i32, i32, i32, i32
  }
  func.func @transform_1(%arg0: i32, %arg1: i32) -> (i32, i32, i32, i32) {
    %c0_i32 = arith.constant 0 : i32
    %c0_i32_0 = arith.constant 0 : i32
    %c0_i32_1 = arith.constant 0 : i32
    return %arg0, %c0_i32, %arg1, %c0_i32_0 : i32, i32, i32, i32
  }
}

</mosaic_0001>

<llo_original>
// kernel: tpu_custom_call.1
$region0: #{tpu_custom_call.1}
  #allocation0 [shape = 'u32[]', space=smem, size = 0x4, offset = 0x4, fixed_abs, tag = 'smem constant byte address 0x4 - core index']
  #allocation1 [shape = 'u32[144,128]{1,0:T(1,128)}', space=vmem, size = 0x12000, scoped, tag = 'internal scratch']
  %s0 = inlined_call_operand.hbm [shape: f32[4,4,8,16], index: 0, kind: input, shape index: {}]
  %s1 = inlined_call_operand.hbm [shape: f32[4,8,64], index: 1, kind: output, shape index: {}]
  %s2 = sld [smem:[#allocation0]]
  $region18: #{tpu_custom_call.1} parent=0
    _
  %s4 = ssub.s32 1, %s2
  %s5 = scalar_select 0, %s4, %s2
  $region1: #{tpu_custom_call.1} parent=0
    #allocation2 [shape = 'u8[65536]{0}', space=vmem, size = 0x10000, scoped, tag = 'input window, operand 0, single buffered']
    #allocation3 [shape = 's32[1]{0}', space=sflag, size = 0x4, scoped, tag = 'scoped memory for tpu_custom_call.1']
    #allocation4 [shape = 's32[1]{0}', space=sflag, size = 0x4, scoped, tag = 'scoped memory for tpu_custom_call.1']
    #allocation5 [shape = 'u8[16384]{0}', space=vmem, size = 0x4000, scoped, tag = 'output window, operand 0, single buffered']
    %6 = vsyncpa [#allocation3], 0
    %7 = vsyncpa [#allocation4], 0
    // Predicated region
    $region2: #{tpu_custom_call.1} parent=1 // pred_check
      _
    $region3: #{tpu_custom_call.1} parent=1 // pred_check_branch
      %9 = sbr.rel (0) target = $region5
    $region4: #{tpu_custom_call.1} parent=1 // pred_region
      %s11 = ssub.s32 2048, 2048
      %12 = vsyncadd [#allocation3], %s11
      %s13 = sshll.u32 [#allocation2], 4
      %s14 = int_to_ptr.vmem [resolvable:$true] %s13
      %19 = dma.hbm_to_vmem [thread:$0]  %s0, 2048, %s14, [#allocation3], 128, 128, 8
    $region5: #{tpu_custom_call.1} parent=1 // pred_fallthru
      _
    // Predicated region
    $region6: #{tpu_custom_call.1} parent=1 // pred_check
      _
    $region7: #{tpu_custom_call.1} parent=1 // pred_check_branch
      %21 = sbr.rel (0) target = $region9
    $region8: #{tpu_custom_call.1} parent=1 // pred_region
      %22 = dma.done [#allocation3], 2048
    $region9: #{tpu_custom_call.1} parent=1 // pred_fallthru
      _
    %v23 = vld [vmem:[#allocation2] sm:$0xff]
    %v24 = vld [vmem:[#allocation2 + $0x20] sm:$0xff]
    %v25 = vld [vmem:[#allocation2 + $0x40] sm:$0xff]
    %v26 = vld [vmem:[#allocation2 + $0x60] sm:$0xff]
    %s27 = scalar_lea.vmem [#allocation2], 8
    %v28 = vld [vmem:[%s27] sm:$0xff]
    %v29 = vld [vmem:[%s27 + $0x20] sm:$0xff]
    %v30 = vld [vmem:[%s27 + $0x40] sm:$0xff]
    %v31 = vld [vmem:[%s27 + $0x60] sm:$0xff]
    %s32 = scalar_lea.vmem [#allocation2], 16
    %v33 = vld [vmem:[%s32] sm:$0xff]
    %v34 = vld [vmem:[%s32 + $0x20] sm:$0xff]
    %v35 = vld [vmem:[%s32 + $0x40] sm:$0xff]
    %v36 = vld [vmem:[%s32 + $0x60] sm:$0xff]
    %s37 = scalar_lea.vmem [#allocation2], 24
    %v38 = vld [vmem:[%s37] sm:$0xff]
    %v39 = vld [vmem:[%s37 + $0x20] sm:$0xff]
    %v40 = vld [vmem:[%s37 + $0x40] sm:$0xff]
    %v41 = vld [vmem:[%s37 + $0x60] sm:$0xff]
    %v42 = vadd.f32 %v23, %v28
    %v43 = vadd.f32 %v24, %v29
    %v44 = vadd.f32 %v25, %v30
    %v45 = vadd.f32 %v26, %v31
    %v46 = vsub.f32 %v23, %v28
    %v47 = vsub.f32 %v24, %v29
    %v48 = vsub.f32 %v25, %v30
    %v49 = vsub.f32 %v26, %v31
    %v50 = vadd.f32 %v33, %v38
    %v51 = vadd.f32 %v34, %v39
    %v52 = vadd.f32 %v35, %v40
    %v53 = vadd.f32 %v36, %v41
    %v54 = vsub.f32 %v33, %v38
    %v55 = vsub.f32 %v34, %v39
    %v56 = vsub.f32 %v35, %v40
    %v57 = vsub.f32 %v36, %v41
    %v58 = vadd.f32 %v42, %v50
    %v59 = vadd.f32 %v43, %v51
    %v60 = vadd.f32 %v44, %v52
    %v61 = vadd.f32 %v45, %v53
    %v62 = vmul.f32 %v58, 0.5
    %v63 = vmul.f32 %v59, 0.5
    %v64 = vmul.f32 %v60, 0.5
    %v65 = vmul.f32 %v61, 0.5
    %v66 = vsub.f32 %v42, %v50
    %v67 = vsub.f32 %v43, %v51
    %v68 = vsub.f32 %v44, %v52
    %v69 = vsub.f32 %v45, %v53
    %v70 = vmul.f32 %v66, 0.5
    %v71 = vmul.f32 %v67, 0.5
    %v72 = vmul.f32 %v68, 0.5
    %v73 = vmul.f32 %v69, 0.5
    %v74 = vadd.f32 %v46, %v54
    %v75 = vadd.f32 %v47, %v55
    %v76 = vadd.f32 %v48, %v56
    %v77 = vadd.f32 %v49, %v57
    %v78 = vmul.f32 %v74, 0.5
    %v79 = vmul.f32 %v75, 0.5
    %v80 = vmul.f32 %v76, 0.5
    %v81 = vmul.f32 %v77, 0.5
    %v82 = vsub.f32 %v46, %v54
    %v83 = vsub.f32 %v47, %v55
    %v84 = vsub.f32 %v48, %v56
    %v85 = vsub.f32 %v49, %v57
    %v86 = vmul.f32 %v82, 0.5
    %v87 = vmul.f32 %v83, 0.5
    %v88 = vmul.f32 %v84, 0.5
    %v89 = vmul.f32 %v85, 0.5
    %v90 = vlaneseq
    %v91 = vshrl.u32 %v90, 7
    %v92 = vsub.s32 0, %v91
    %v93 = vrot.slane %v62, %v92
    %95 = vbcast.lane.b32.xlu0 %v93, 256
    %v96 = vpop.permute.xlu0 %95
    %s98 = sor.u32 256, 8
    %99 = vbcast.lane.b32.xlu0 %v93, %s98
    %v100 = vpop.permute.xlu0 %99
    %v101 = vlaneseq
    %v102 = vshrl.u32 %v101, 7
    %v103 = vsub.s32 1, %v102
    %v104 = vrot.slane %v62, %v103
    %106 = vbcast.lane.b32.xlu0 %v104, 256
    %v107 = vpop.permute.xlu0 %106
    %s109 = sor.u32 256, 8
    %110 = vbcast.lane.b32.xlu0 %v104, %s109
    %v111 = vpop.permute.xlu0 %110
    %v112 = vlaneseq
    %v113 = vshrl.u32 %v112, 7
    %v114 = vsub.s32 2, %v113
    %v115 = vrot.slane %v62, %v114
    %117 = vbcast.lane.b32.xlu0 %v115, 256
    %v118 = vpop.permute.xlu0 %117
    %s120 = sor.u32 256, 8
    %121 = vbcast.lane.b32.xlu0 %v115, %s120
    %v122 = vpop.permute.xlu0 %121
    %v123 = vlaneseq
    %v124 = vshrl.u32 %v123, 7
    %v125 = vsub.s32 3, %v124
    %v126 = vrot.slane %v62, %v125
    %128 = vbcast.lane.b32.xlu0 %v126, 256
    %v129 = vpop.permute.xlu0 %128
    %s131 = sor.u32 256, 8
    %132 = vbcast.lane.b32.xlu0 %v126, %s131
    %v133 = vpop.permute.xlu0 %132
    %v134 = vlaneseq
    %v135 = vshrl.u32 %v134, 7
    %v136 = vsub.s32 4, %v135
    %v137 = vrot.slane %v62, %v136
    %139 = vbcast.lane.b32.xlu0 %v137, 256
    %v140 = vpop.permute.xlu0 %139
    %s142 = sor.u32 256, 8
    %143 = vbcast.lane.b32.xlu0 %v137, %s142
    %v144 = vpop.permute.xlu0 %143
    %v145 = vlaneseq
    %v146 = vshrl.u32 %v145, 7
    %v147 = vsub.s32 5, %v146
    %v148 = vrot.slane %v62, %v147
    %150 = vbcast.lane.b32.xlu0 %v148, 256
    %v151 = vpop.permute.xlu0 %150
    %s153 = sor.u32 256, 8
    %154 = vbcast.lane.b32.xlu0 %v148, %s153
    %v155 = vpop.permute.xlu0 %154
    %v156 = vlaneseq
    %v157 = vshrl.u32 %v156, 7
    %v158 = vsub.s32 6, %v157
    %v159 = vrot.slane %v62, %v158
    %161 = vbcast.lane.b32.xlu0 %v159, 256
    %v162 = vpop.permute.xlu0 %161
    %s164 = sor.u32 256, 8
    %165 = vbcast.lane.b32.xlu0 %v159, %s164
    %v166 = vpop.permute.xlu0 %165
    %v167 = vlaneseq
    %v168 = vshrl.u32 %v167, 7
    %v169 = vsub.s32 7, %v168
    %v170 = vrot.slane %v62, %v169
    %172 = vbcast.lane.b32.xlu0 %v170, 256
    %v173 = vpop.permute.xlu0 %172
    %s175 = sor.u32 256, 8
    %176 = vbcast.lane.b32.xlu0 %v170, %s175
    %v177 = vpop.permute.xlu0 %176
    %v178 = vlaneseq
    %v179 = vshrl.u32 %v178, 7
    %v180 = vsub.s32 0, %v179
    %v181 = vrot.slane %v63, %v180
    %183 = vbcast.lane.b32.xlu0 %v181, 256
    %v184 = vpop.permute.xlu0 %183
    %s186 = sor.u32 256, 8
    %187 = vbcast.lane.b32.xlu0 %v181, %s186
    %v188 = vpop.permute.xlu0 %187
    %v189 = vlaneseq
    %v190 = vshrl.u32 %v189, 7
    %v191 = vsub.s32 1, %v190
    %v192 = vrot.slane %v63, %v191
    %194 = vbcast.lane.b32.xlu0 %v192, 256
    %v195 = vpop.permute.xlu0 %194
    %s197 = sor.u32 256, 8
    %198 = vbcast.lane.b32.xlu0 %v192, %s197
    %v199 = vpop.permute.xlu0 %198
    %v200 = vlaneseq
    %v201 = vshrl.u32 %v200, 7
    %v202 = vsub.s32 2, %v201
    %v203 = vrot.slane %v63, %v202
    %205 = vbcast.lane.b32.xlu0 %v203, 256
    %v206 = vpop.permute.xlu0 %205
    %s208 = sor.u32 256, 8
    %209 = vbcast.lane.b32.xlu0 %v203, %s208
    %v210 = vpop.permute.xlu0 %209
    %v211 = vlaneseq
    %v212 = vshrl.u32 %v211, 7
    %v213 = vsub.s32 3, %v212
    %v214 = vrot.slane %v63, %v213
    %216 = vbcast.lane.b32.xlu0 %v214, 256
    %v217 = vpop.permute.xlu0 %216
    %s219 = sor.u32 256, 8
    %220 = vbcast.lane.b32.xlu0 %v214, %s219
    %v221 = vpop.permute.xlu0 %220
    %v222 = vlaneseq
    %v223 = vshrl.u32 %v222, 7
    %v224 = vsub.s32 4, %v223
    %v225 = vrot.slane %v63, %v224
    %227 = vbcast.lane.b32.xlu0 %v225, 256
    %v228 = vpop.permute.xlu0 %227
    %s230 = sor.u32 256, 8
    %231 = vbcast.lane.b32.xlu0 %v225, %s230
    %v232 = vpop.permute.xlu0 %231
    %v233 = vlaneseq
    %v234 = vshrl.u32 %v233, 7
    %v235 = vsub.s32 5, %v234
    %v236 = vrot.slane %v63, %v235
    %238 = vbcast.lane.b32.xlu0 %v236, 256
    %v239 = vpop.permute.xlu0 %238
    %s241 = sor.u32 256, 8
    %242 = vbcast.lane.b32.xlu0 %v236, %s241
    %v243 = vpop.permute.xlu0 %242
    %v244 = vlaneseq
    %v245 = vshrl.u32 %v244, 7
    %v246 = vsub.s32 6, %v245
    %v247 = vrot.slane %v63, %v246
    %249 = vbcast.lane.b32.xlu0 %v247, 256
    %v250 = vpop.permute.xlu0 %249
    %s252 = sor.u32 256, 8
    %253 = vbcast.lane.b32.xlu0 %v247, %s252
    %v254 = vpop.permute.xlu0 %253
    %v255 = vlaneseq
    %v256 = vshrl.u32 %v255, 7
    %v257 = vsub.s32 7, %v256
    %v258 = vrot.slane %v63, %v257
    %260 = vbcast.lane.b32.xlu0 %v258, 256
    %v261 = vpop.permute.xlu0 %260
    %s263 = sor.u32 256, 8
    %264 = vbcast.lane.b32.xlu0 %v258, %s263
    %v265 = vpop.permute.xlu0 %264
    %v266 = vlaneseq
    %v267 = vshrl.u32 %v266, 7
    %v268 = vsub.s32 0, %v267
    %v269 = vrot.slane %v64, %v268
    %271 = vbcast.lane.b32.xlu0 %v269, 256
    %v272 = vpop.permute.xlu0 %271
    %s274 = sor.u32 256, 8
    %275 = vbcast.lane.b32.xlu0 %v269, %s274
    %v276 = vpop.permute.xlu0 %275
    %v277 = vlaneseq
    %v278 = vshrl.u32 %v277, 7
    %v279 = vsub.s32 1, %v278
    %v280 = vrot.slane %v64, %v279
    %282 = vbcast.lane.b32.xlu0 %v280, 256
    %v283 = vpop.permute.xlu0 %282
    %s285 = sor.u32 256, 8
    %286 = vbcast.lane.b32.xlu0 %v280, %s285
    %v287 = vpop.permute.xlu0 %286
    %v288 = vlaneseq
    %v289 = vshrl.u32 %v288, 7
    %v290 = vsub.s32 2, %v289
    %v291 = vrot.slane %v64, %v290
    %293 = vbcast.lane.b32.xlu0 %v291, 256
    %v294 = vpop.permute.xlu0 %293
    %s296 = sor.u32 256, 8
    %297 = vbcast.lane.b32.xlu0 %v291, %s296
    %v298 = vpop.permute.xlu0 %297
    %v299 = vlaneseq
    %v300 = vshrl.u32 %v299, 7
    %v301 = vsub.s32 3, %v300
    %v302 = vrot.slane %v64, %v301
    %304 = vbcast.lane.b32.xlu0 %v302, 256
    %v305 = vpop.permute.xlu0 %304
    %s307 = sor.u32 256, 8
    %308 = vbcast.lane.b32.xlu0 %v302, %s307
    %v309 = vpop.permute.xlu0 %308
    %v310 = vlaneseq
    %v311 = vshrl.u32 %v310, 7
    %v312 = vsub.s32 4, %v311
    %v313 = vrot.slane %v64, %v312
    %315 = vbcast.lane.b32.xlu0 %v313, 256
    %v316 = vpop.permute.xlu0 %315
    %s318 = sor.u32 256, 8
    %319 = vbcast.lane.b32.xlu0 %v313, %s318
    %v320 = vpop.permute.xlu0 %319
    %v321 = vlaneseq
    %v322 = vshrl.u32 %v321, 7
    %v323 = vsub.s32 5, %v322
    %v324 = vrot.slane %v64, %v323
    %326 = vbcast.lane.b32.xlu0 %v324, 256
    %v327 = vpop.permute.xlu0 %326
    %s329 = sor.u32 256, 8
    %330 = vbcast.lane.b32.xlu0 %v324, %s329
    %v331 = vpop.permute.xlu0 %330
    %v332 = vlaneseq
    %v333 = vshrl.u32 %v332, 7
    %v334 = vsub.s32 6, %v333
    %v335 = vrot.slane %v64, %v334
    %337 = vbcast.lane.b32.xlu0 %v335, 256
    %v338 = vpop.permute.xlu0 %337
    %s340 = sor.u32 256, 8
    %341 = vbcast.lane.b32.xlu0 %v335, %s340
    %v342 = vpop.permute.xlu0 %341
    %v343 = vlaneseq
    %v344 = vshrl.u32 %v343, 7
    %v345 = vsub.s32 7, %v344
    %v346 = vrot.slane %v64, %v345
    %348 = vbcast.lane.b32.xlu0 %v346, 256
    %v349 = vpop.permute.xlu0 %348
    %s351 = sor.u32 256, 8
    %352 = vbcast.lane.b32.xlu0 %v346, %s351
    %v353 = vpop.permute.xlu0 %352
    %v354 = vlaneseq
    %v355 = vshrl.u32 %v354, 7
    %v356 = vsub.s32 0, %v355
    %v357 = vrot.slane %v65, %v356
    %359 = vbcast.lane.b32.xlu0 %v357, 256
    %v360 = vpop.permute.xlu0 %359
    %s362 = sor.u32 256, 8
    %363 = vbcast.lane.b32.xlu0 %v357, %s362
    %v364 = vpop.permute.xlu0 %363
    %v365 = vlaneseq
    %v366 = vshrl.u32 %v365, 7
    %v367 = vsub.s32 1, %v366
    %v368 = vrot.slane %v65, %v367
    %370 = vbcast.lane.b32.xlu0 %v368, 256
    %v371 = vpop.permute.xlu0 %370
    %s373 = sor.u32 256, 8
    %374 = vbcast.lane.b32.xlu0 %v368, %s373
    %v375 = vpop.permute.xlu0 %374
    %v376 = vlaneseq
    %v377 = vshrl.u32 %v376, 7
    %v378 = vsub.s32 2, %v377
    %v379 = vrot.slane %v65, %v378
    %381 = vbcast.lane.b32.xlu0 %v379, 256
    %v382 = vpop.permute.xlu0 %381
    %s384 = sor.u32 256, 8
    %385 = vbcast.lane.b32.xlu0 %v379, %s384
    %v386 = vpop.permute.xlu0 %385
    %v387 = vlaneseq
    %v388 = vshrl.u32 %v387, 7
    %v389 = vsub.s32 3, %v388
    %v390 = vrot.slane %v65, %v389
    %392 = vbcast.lane.b32.xlu0 %v390, 256
    %v393 = vpop.permute.xlu0 %392
    %s395 = sor.u32 256, 8
    %396 = vbcast.lane.b32.xlu0 %v390, %s395
    %v397 = vpop.permute.xlu0 %396
    %v398 = vlaneseq
    %v399 = vshrl.u32 %v398, 7
    %v400 = vsub.s32 4, %v399
    %v401 = vrot.slane %v65, %v400
    %403 = vbcast.lane.b32.xlu0 %v401, 256
    %v404 = vpop.permute.xlu0 %403
    %s406 = sor.u32 256, 8
    %407 = vbcast.lane.b32.xlu0 %v401, %s406
    %v408 = vpop.permute.xlu0 %407
    %v409 = vlaneseq
    %v410 = vshrl.u32 %v409, 7
    %v411 = vsub.s32 5, %v410
    %v412 = vrot.slane %v65, %v411
    %414 = vbcast.lane.b32.xlu0 %v412, 256
    %v415 = vpop.permute.xlu0 %414
    %s417 = sor.u32 256, 8
    %418 = vbcast.lane.b32.xlu0 %v412, %s417
    %v419 = vpop.permute.xlu0 %418
    %v420 = vlaneseq
    %v421 = vshrl.u32 %v420, 7
    %v422 = vsub.s32 6, %v421
    %v423 = vrot.slane %v65, %v422
    %425 = vbcast.lane.b32.xlu0 %v423, 256
    %v426 = vpop.permute.xlu0 %425
    %s428 = sor.u32 256, 8
    %429 = vbcast.lane.b32.xlu0 %v423, %s428
    %v430 = vpop.permute.xlu0 %429
    %v431 = vlaneseq
    %v432 = vshrl.u32 %v431, 7
    %v433 = vsub.s32 7, %v432
    %v434 = vrot.slane %v65, %v433
    %436 = vbcast.lane.b32.xlu0 %v434, 256
    %v437 = vpop.permute.xlu0 %436
    %s439 = sor.u32 256, 8
    %440 = vbcast.lane.b32.xlu0 %v434, %s439
    %v441 = vpop.permute.xlu0 %440
    %v442 = vlaneseq
    %v443 = vshrl.u32 %v442, 7
    %v444 = vsub.s32 0, %v443
    %v445 = vrot.slane %v70, %v444
    %447 = vbcast.lane.b32.xlu0 %v445, 256
    %v448 = vpop.permute.xlu0 %447
    %s450 = sor.u32 256, 8
    %451 = vbcast.lane.b32.xlu0 %v445, %s450
    %v452 = vpop.permute.xlu0 %451
    %v453 = vlaneseq
    %v454 = vshrl.u32 %v453, 7
    %v455 = vsub.s32 1, %v454
    %v456 = vrot.slane %v70, %v455
    %458 = vbcast.lane.b32.xlu0 %v456, 256
    %v459 = vpop.permute.xlu0 %458
    %s461 = sor.u32 256, 8
    %462 = vbcast.lane.b32.xlu0 %v456, %s461
    %v463 = vpop.permute.xlu0 %462
    %v464 = vlaneseq
    %v465 = vshrl.u32 %v464, 7
    %v466 = vsub.s32 2, %v465
    %v467 = vrot.slane %v70, %v466
    %469 = vbcast.lane.b32.xlu0 %v467, 256
    %v470 = vpop.permute.xlu0 %469
    %s472 = sor.u32 256, 8
    %473 = vbcast.lane.b32.xlu0 %v467, %s472
    %v474 = vpop.permute.xlu0 %473
    %v475 = vlaneseq
    %v476 = vshrl.u32 %v475, 7
    %v477 = vsub.s32 3, %v476
    %v478 = vrot.slane %v70, %v477
    %480 = vbcast.lane.b32.xlu0 %v478, 256
    %v481 = vpop.permute.xlu0 %480
    %s483 = sor.u32 256, 8
    %484 = vbcast.lane.b32.xlu0 %v478, %s483
    %v485 = vpop.permute.xlu0 %484
    %v486 = vlaneseq
    %v487 = vshrl.u32 %v486, 7
    %v488 = vsub.s32 4, %v487
    %v489 = vrot.slane %v70, %v488
    %491 = vbcast.lane.b32.xlu0 %v489, 256
    %v492 = vpop.permute.xlu0 %491
    %s494 = sor.u32 256, 8
    %495 = vbcast.lane.b32.xlu0 %v489, %s494
    %v496 = vpop.permute.xlu0 %495
    %v497 = vlaneseq
    %v498 = vshrl.u32 %v497, 7
    %v499 = vsub.s32 5, %v498
    %v500 = vrot.slane %v70, %v499
    %502 = vbcast.lane.b32.xlu0 %v500, 256
    %v503 = vpop.permute.xlu0 %502
    %s505 = sor.u32 256, 8
    %506 = vbcast.lane.b32.xlu0 %v500, %s505
    %v507 = vpop.permute.xlu0 %506
    %v508 = vlaneseq
    %v509 = vshrl.u32 %v508, 7
    %v510 = vsub.s32 6, %v509
    %v511 = vrot.slane %v70, %v510
    %513 = vbcast.lane.b32.xlu0 %v511, 256
    %v514 = vpop.permute.xlu0 %513
    %s516 = sor.u32 256, 8
    %517 = vbcast.lane.b32.xlu0 %v511, %s516
    %v518 = vpop.permute.xlu0 %517
    %v519 = vlaneseq
    %v520 = vshrl.u32 %v519, 7
    %v521 = vsub.s32 7, %v520
    %v522 = vrot.slane %v70, %v521
    %524 = vbcast.lane.b32.xlu0 %v522, 256
    %v525 = vpop.permute.xlu0 %524
    %s527 = sor.u32 256, 8
    %528 = vbcast.lane.b32.xlu0 %v522, %s527
    %v529 = vpop.permute.xlu0 %528
    %v530 = vlaneseq
    %v531 = vshrl.u32 %v530, 7
    %v532 = vsub.s32 0, %v531
    %v533 = vrot.slane %v71, %v532
    %535 = vbcast.lane.b32.xlu0 %v533, 256
    %v536 = vpop.permute.xlu0 %535
    %s538 = sor.u32 256, 8
    %539 = vbcast.lane.b32.xlu0 %v533, %s538
    %v540 = vpop.permute.xlu0 %539
    %v541 = vlaneseq
    %v542 = vshrl.u32 %v541, 7
    %v543 = vsub.s32 1, %v542
    %v544 = vrot.slane %v71, %v543
    %546 = vbcast.lane.b32.xlu0 %v544, 256
    %v547 = vpop.permute.xlu0 %546
    %s549 = sor.u32 256, 8
    %550 = vbcast.lane.b32.xlu0 %v544, %s549
    %v551 = vpop.permute.xlu0 %550
    %v552 = vlaneseq
    %v553 = vshrl.u32 %v552, 7
    %v554 = vsub.s32 2, %v553
    %v555 = vrot.slane %v71, %v554
    %557 = vbcast.lane.b32.xlu0 %v555, 256
    %v558 = vpop.permute.xlu0 %557
    %s560 = sor.u32 256, 8
    %561 = vbcast.lane.b32.xlu0 %v555, %s560
    %v562 = vpop.permute.xlu0 %561
    %v563 = vlaneseq
    %v564 = vshrl.u32 %v563, 7
    %v565 = vsub.s32 3, %v564
    %v566 = vrot.slane %v71, %v565
    %568 = vbcast.lane.b32.xlu0 %v566, 256
    %v569 = vpop.permute.xlu0 %568
    %s571 = sor.u32 256, 8
    %572 = vbcast.lane.b32.xlu0 %v566, %s571
    %v573 = vpop.permute.xlu0 %572
    %v574 = vlaneseq
    %v575 = vshrl.u32 %v574, 7
    %v576 = vsub.s32 4, %v575
    %v577 = vrot.slane %v71, %v576
    %579 = vbcast.lane.b32.xlu0 %v577, 256
    %v580 = vpop.permute.xlu0 %579
    %s582 = sor.u32 256, 8
    %583 = vbcast.lane.b32.xlu0 %v577, %s582
    %v584 = vpop.permute.xlu0 %583
    %v585 = vlaneseq
    %v586 = vshrl.u32 %v585, 7
    %v587 = vsub.s32 5, %v586
    %v588 = vrot.slane %v71, %v587
    %590 = vbcast.lane.b32.xlu0 %v588, 256
    %v591 = vpop.permute.xlu0 %590
    %s593 = sor.u32 256, 8
    %594 = vbcast.lane.b32.xlu0 %v588, %s593
    %v595 = vpop.permute.xlu0 %594
    %v596 = vlaneseq
    %v597 = vshrl.u32 %v596, 7
    %v598 = vsub.s32 6, %v597
    %v599 = vrot.slane %v71, %v598
    %601 = vbcast.lane.b32.xlu0 %v599, 256
    %v602 = vpop.permute.xlu0 %601
    %s604 = sor.u32 256, 8
    %605 = vbcast.lane.b32.xlu0 %v599, %s604
    %v606 = vpop.permute.xlu0 %605
    %v607 = vlaneseq
    %v608 = vshrl.u32 %v607, 7
    %v609 = vsub.s32 7, %v608
    %v610 = vrot.slane %v71, %v609
    %612 = vbcast.lane.b32.xlu0 %v610, 256
    %v613 = vpop.permute.xlu0 %612
    %s615 = sor.u32 256, 8
    %616 = vbcast.lane.b32.xlu0 %v610, %s615
    %v617 = vpop.permute.xlu0 %616
    %v618 = vlaneseq
    %v619 = vshrl.u32 %v618, 7
    %v620 = vsub.s32 0, %v619
    %v621 = vrot.slane %v72, %v620
    %623 = vbcast.lane.b32.xlu0 %v621, 256
    %v624 = vpop.permute.xlu0 %623
    %s626 = sor.u32 256, 8
    %627 = vbcast.lane.b32.xlu0 %v621, %s626
    %v628 = vpop.permute.xlu0 %627
    %v629 = vlaneseq
    %v630 = vshrl.u32 %v629, 7
    %v631 = vsub.s32 1, %v630
    %v632 = vrot.slane %v72, %v631
    %634 = vbcast.lane.b32.xlu0 %v632, 256
    %v635 = vpop.permute.xlu0 %634
    %s637 = sor.u32 256, 8
    %638 = vbcast.lane.b32.xlu0 %v632, %s637
    %v639 = vpop.permute.xlu0 %638
    %v640 = vlaneseq
    %v641 = vshrl.u32 %v640, 7
    %v642 = vsub.s32 2, %v641
    %v643 = vrot.slane %v72, %v642
    %645 = vbcast.lane.b32.xlu0 %v643, 256
    %v646 = vpop.permute.xlu0 %645
    %s648 = sor.u32 256, 8
    %649 = vbcast.lane.b32.xlu0 %v643, %s648
    %v650 = vpop.permute.xlu0 %649
    %v651 = vlaneseq
    %v652 = vshrl.u32 %v651, 7
    %v653 = vsub.s32 3, %v652
    %v654 = vrot.slane %v72, %v653
    %656 = vbcast.lane.b32.xlu0 %v654, 256
    %v657 = vpop.permute.xlu0 %656
    %s659 = sor.u32 256, 8
    %660 = vbcast.lane.b32.xlu0 %v654, %s659
    %v661 = vpop.permute.xlu0 %660
    %v662 = vlaneseq
    %v663 = vshrl.u32 %v662, 7
    %v664 = vsub.s32 4, %v663
    %v665 = vrot.slane %v72, %v664
    %667 = vbcast.lane.b32.xlu0 %v665, 256
    %v668 = vpop.permute.xlu0 %667
    %s670 = sor.u32 256, 8
    %671 = vbcast.lane.b32.xlu0 %v665, %s670
    %v672 = vpop.permute.xlu0 %671
    %v673 = vlaneseq
    %v674 = vshrl.u32 %v673, 7
    %v675 = vsub.s32 5, %v674
    %v676 = vrot.slane %v72, %v675
    %678 = vbcast.lane.b32.xlu0 %v676, 256
    %v679 = vpop.permute.xlu0 %678
    %s681 = sor.u32 256, 8
    %682 = vbcast.lane.b32.xlu0 %v676, %s681
    %v683 = vpop.permute.xlu0 %682
    %v684 = vlaneseq
    %v685 = vshrl.u32 %v684, 7
    %v686 = vsub.s32 6, %v685
    %v687 = vrot.slane %v72, %v686
    %689 = vbcast.lane.b32.xlu0 %v687, 256
    %v690 = vpop.permute.xlu0 %689
    %s692 = sor.u32 256, 8
    %693 = vbcast.lane.b32.xlu0 %v687, %s692
    %v694 = vpop.permute.xlu0 %693
    %v695 = vlaneseq
    %v696 = vshrl.u32 %v695, 7
    %v697 = vsub.s32 7, %v696
    %v698 = vrot.slane %v72, %v697
    %700 = vbcast.lane.b32.xlu0 %v698, 256
    %v701 = vpop.permute.xlu0 %700
    %s703 = sor.u32 256, 8
    %704 = vbcast.lane.b32.xlu0 %v698, %s703
    %v705 = vpop.permute.xlu0 %704
    %v706 = vlaneseq
    %v707 = vshrl.u32 %v706, 7
    %v708 = vsub.s32 0, %v707
    %v709 = vrot.slane %v73, %v708
    %711 = vbcast.lane.b32.xlu0 %v709, 256
    %v712 = vpop.permute.xlu0 %711
    %s714 = sor.u32 256, 8
    %715 = vbcast.lane.b32.xlu0 %v709, %s714
    %v716 = vpop.permute.xlu0 %715
    %v717 = vlaneseq
    %v718 = vshrl.u32 %v717, 7
    %v719 = vsub.s32 1, %v718
    %v720 = vrot.slane %v73, %v719
    %722 = vbcast.lane.b32.xlu0 %v720, 256
    %v723 = vpop.permute.xlu0 %722
    %s725 = sor.u32 256, 8
    %726 = vbcast.lane.b32.xlu0 %v720, %s725
    %v727 = vpop.permute.xlu0 %726
    %v728 = vlaneseq
    %v729 = vshrl.u32 %v728, 7
    %v730 = vsub.s32 2, %v729
    %v731 = vrot.slane %v73, %v730
    %733 = vbcast.lane.b32.xlu0 %v731, 256
    %v734 = vpop.permute.xlu0 %733
    %s736 = sor.u32 256, 8
    %737 = vbcast.lane.b32.xlu0 %v731, %s736
    %v738 = vpop.permute.xlu0 %737
    %v739 = vlaneseq
    %v740 = vshrl.u32 %v739, 7
    %v741 = vsub.s32 3, %v740
    %v742 = vrot.slane %v73, %v741
    %744 = vbcast.lane.b32.xlu0 %v742, 256
    %v745 = vpop.permute.xlu0 %744
    %s747 = sor.u32 256, 8
    %748 = vbcast.lane.b32.xlu0 %v742, %s747
    %v749 = vpop.permute.xlu0 %748
    %v750 = vlaneseq
    %v751 = vshrl.u32 %v750, 7
    %v752 = vsub.s32 4, %v751
    %v753 = vrot.slane %v73, %v752
    %755 = vbcast.lane.b32.xlu0 %v753, 256
    %v756 = vpop.permute.xlu0 %755
    %s758 = sor.u32 256, 8
    %759 = vbcast.lane.b32.xlu0 %v753, %s758
    %v760 = vpop.permute.xlu0 %759
    %v761 = vlaneseq
    %v762 = vshrl.u32 %v761, 7
    %v763 = vsub.s32 5, %v762
    %v764 = vrot.slane %v73, %v763
    %766 = vbcast.lane.b32.xlu0 %v764, 256
    %v767 = vpop.permute.xlu0 %766
    %s769 = sor.u32 256, 8
    %770 = vbcast.lane.b32.xlu0 %v764, %s769
    %v771 = vpop.permute.xlu0 %770
    %v772 = vlaneseq
    %v773 = vshrl.u32 %v772, 7
    %v774 = vsub.s32 6, %v773
    %v775 = vrot.slane %v73, %v774
    %777 = vbcast.lane.b32.xlu0 %v775, 256
    %v778 = vpop.permute.xlu0 %777
    %s780 = sor.u32 256, 8
    %781 = vbcast.lane.b32.xlu0 %v775, %s780
    %v782 = vpop.permute.xlu0 %781
    %v783 = vlaneseq
    %v784 = vshrl.u32 %v783, 7
    %v785 = vsub.s32 7, %v784
    %v786 = vrot.slane %v73, %v785
    %788 = vbcast.lane.b32.xlu0 %v786, 256
    %v789 = vpop.permute.xlu0 %788
    %s791 = sor.u32 256, 8
    %792 = vbcast.lane.b32.xlu0 %v786, %s791
    %v793 = vpop.permute.xlu0 %792
    %vm794 = vcmask 7168
    %v795 = vsel %vm794, %v96, %v448
    %v796 = vsel %vm794, %v100, %v452
    %v797 = vsel %vm794, %v107, %v459
    %v798 = vsel %vm794, %v111, %v463
    %v799 = vsel %vm794, %v118, %v470
    %v800 = vsel %vm794, %v122, %v474
    %v801 = vsel %vm794, %v129, %v481
    %v802 = vsel %vm794, %v133, %v485
    %v803 = vsel %vm794, %v140, %v492
    %v804 = vsel %vm794, %v144, %v496
    %v805 = vsel %vm794, %v151, %v503
    %v806 = vsel %vm794, %v155, %v507
    %v807 = vsel %vm794, %v162, %v514
    %v808 = vsel %vm794, %v166, %v518
    %v809 = vsel %vm794, %v173, %v525
    %v810 = vsel %vm794, %v177, %v529
    %v811 = vsel %vm794, %v184, %v536
    %v812 = vsel %vm794, %v188, %v540
    %v813 = vsel %vm794, %v195, %v547
    %v814 = vsel %vm794, %v199, %v551
    %v815 = vsel %vm794, %v206, %v558
    %v816 = vsel %vm794, %v210, %v562
    %v817 = vsel %vm794, %v217, %v569
    %v818 = vsel %vm794, %v221, %v573
    %v819 = vsel %vm794, %v228, %v580
    %v820 = vsel %vm794, %v232, %v584
    %v821 = vsel %vm794, %v239, %v591
    %v822 = vsel %vm794, %v243, %v595
    %v823 = vsel %vm794, %v250, %v602
    %v824 = vsel %vm794, %v254, %v606
    %v825 = vsel %vm794, %v261, %v613
    %v826 = vsel %vm794, %v265, %v617
    %v827 = vsel %vm794, %v272, %v624
    %v828 = vsel %vm794, %v276, %v628
    %v829 = vsel %vm794, %v283, %v635
    %v830 = vsel %vm794, %v287, %v639
    %v831 = vsel %vm794, %v294, %v646
    %v832 = vsel %vm794, %v298, %v650
    %v833 = vsel %vm794, %v305, %v657
    %v834 = vsel %vm794, %v309, %v661
    %v835 = vsel %vm794, %v316, %v668
    %v836 = vsel %vm794, %v320, %v672
    %v837 = vsel %vm794, %v327, %v679
    %v838 = vsel %vm794, %v331, %v683
    %v839 = vsel %vm794, %v338, %v690
    %v840 = vsel %vm794, %v342, %v694
    %v841 = vsel %vm794, %v349, %v701
    %v842 = vsel %vm794, %v353, %v705
    %v843 = vsel %vm794, %v360, %v712
    %v844 = vsel %vm794, %v364, %v716
    %v845 = vsel %vm794, %v371, %v723
    %v846 = vsel %vm794, %v375, %v727
    %v847 = vsel %vm794, %v382, %v734
    %v848 = vsel %vm794, %v386, %v738
    %v849 = vsel %vm794, %v393, %v745
    %v850 = vsel %vm794, %v397, %v749
    %v851 = vsel %vm794, %v404, %v756
    %v852 = vsel %vm794, %v408, %v760
    %v853 = vsel %vm794, %v415, %v767
    %v854 = vsel %vm794, %v419, %v771
    %v855 = vsel %vm794, %v426, %v778
    %v856 = vsel %vm794, %v430, %v782
    %v857 = vsel %vm794, %v437, %v789
    %v858 = vsel %vm794, %v441, %v793
    %v859 = vcombine.low %v795, %v799
    %v860 = vcombine.high %v795, %v799
    %v862 = vunpack.c.l.s4 1983009808
    %v863 = vunpack.c.0.s8 %v862
    %v864 = vlaneseq
    %v865 = vshrl.u32 %v864, 7
    %v866 = vsub.s32 %v863, %v865
    %v867 = vrot.slane %v859, %v866
    %v869 = vunpack.c.l.s4 1983009808
    %v870 = vunpack.c.0.s8 %v869
    %v871 = vlaneseq
    %v872 = vshrl.u32 %v871, 7
    %v873 = vsub.s32 %v870, %v872
    %v874 = vrot.slane %v860, %v873
    %v875 = vcombine.low %v797, %v801
    %v876 = vcombine.high %v797, %v801
    %v878 = vunpack.c.l.s4 1983009808
    %v879 = vunpack.c.0.s8 %v878
    %v880 = vlaneseq
    %v881 = vshrl.u32 %v880, 7
    %v882 = vsub.s32 %v879, %v881
    %v883 = vrot.slane %v875, %v882
    %v885 = vunpack.c.l.s4 1983009808
    %v886 = vunpack.c.0.s8 %v885
    %v887 = vlaneseq
    %v888 = vshrl.u32 %v887, 7
    %v889 = vsub.s32 %v886, %v888
    %v890 = vrot.slane %v876, %v889
    %v891 = vcombine.low %v803, %v807
    %v892 = vcombine.high %v803, %v807
    %v894 = vunpack.c.l.s4 1983009808
    %v895 = vunpack.c.0.s8 %v894
    %v896 = vlaneseq
    %v897 = vshrl.u32 %v896, 7
    %v898 = vsub.s32 %v895, %v897
    %v899 = vrot.slane %v891, %v898
    %v901 = vunpack.c.l.s4 1983009808
    %v902 = vunpack.c.0.s8 %v901
    %v903 = vlaneseq
    %v904 = vshrl.u32 %v903, 7
    %v905 = vsub.s32 %v902, %v904
    %v906 = vrot.slane %v892, %v905
    %v907 = vcombine.low %v805, %v809
    %v908 = vcombine.high %v805, %v809
    %v910 = vunpack.c.l.s4 1983009808
    %v911 = vunpack.c.0.s8 %v910
    %v912 = vlaneseq
    %v913 = vshrl.u32 %v912, 7
    %v914 = vsub.s32 %v911, %v913
    %v915 = vrot.slane %v907, %v914
    %v917 = vunpack.c.l.s4 1983009808
    %v918 = vunpack.c.0.s8 %v917
    %v919 = vlaneseq
    %v920 = vshrl.u32 %v919, 7
    %v921 = vsub.s32 %v918, %v920
    %v922 = vrot.slane %v908, %v921
    %v923 = vcombine.low %v867, %v883
    %v924 = vcombine.high %v867, %v883
    %v926 = vunpack.c.l.s4 1934713408
    %v927 = vunpack.c.0.s8 %v926
    %v928 = vlaneseq
    %v929 = vshrl.u32 %v928, 7
    %v930 = vsub.s32 %v927, %v929
    %v931 = vrot.slane %v923, %v930
    %v933 = vunpack.c.l.s4 1934713408
    %v934 = vunpack.c.0.s8 %v933
    %v935 = vlaneseq
    %v936 = vshrl.u32 %v935, 7
    %v937 = vsub.s32 %v934, %v936
    %v938 = vrot.slane %v924, %v937
    %v939 = vcombine.low %v874, %v890
    %v940 = vcombine.high %v874, %v890
    %v942 = vunpack.c.l.s4 1934713408
    %v943 = vunpack.c.0.s8 %v942
    %v944 = vlaneseq
    %v945 = vshrl.u32 %v944, 7
    %v946 = vsub.s32 %v943, %v945
    %v947 = vrot.slane %v939, %v946
    %v949 = vunpack.c.l.s4 1934713408
    %v950 = vunpack.c.0.s8 %v949
    %v951 = vlaneseq
    %v952 = vshrl.u32 %v951, 7
    %v953 = vsub.s32 %v950, %v952
    %v954 = vrot.slane %v940, %v953
    %v955 = vcombine.low %v899, %v915
    %v956 = vcombine.high %v899, %v915
    %v958 = vunpack.c.l.s4 1934713408
    %v959 = vunpack.c.0.s8 %v958
    %v960 = vlaneseq
    %v961 = vshrl.u32 %v960, 7
    %v962 = vsub.s32 %v959, %v961
    %v963 = vrot.slane %v955, %v962
    %v965 = vunpack.c.l.s4 1934713408
    %v966 = vunpack.c.0.s8 %v965
    %v967 = vlaneseq
    %v968 = vshrl.u32 %v967, 7
    %v969 = vsub.s32 %v966, %v968
    %v970 = vrot.slane %v956, %v969
    %v971 = vcombine.low %v906, %v922
    %v972 = vcombine.high %v906, %v922
    %v974 = vunpack.c.l.s4 1934713408
    %v975 = vunpack.c.0.s8 %v974
    %v976 = vlaneseq
    %v977 = vshrl.u32 %v976, 7
    %v978 = vsub.s32 %v975, %v977
    %v979 = vrot.slane %v971, %v978
    %v981 = vunpack.c.l.s4 1934713408
    %v982 = vunpack.c.0.s8 %v981
    %v983 = vlaneseq
    %v984 = vshrl.u32 %v983, 7
    %v985 = vsub.s32 %v982, %v984
    %v986 = vrot.slane %v972, %v985
    %v987 = vcombine.low %v931, %v963
    %v988 = vcombine.high %v931, %v963
    %v989 = vcombine.low %v938, %v970
    %v990 = vcombine.high %v938, %v970
    %v991 = vcombine.low %v947, %v979
    %v992 = vcombine.high %v947, %v979
    %v993 = vcombine.low %v954, %v986
    %v994 = vcombine.high %v954, %v986
    %v995 = vcombine.low %v796, %v800
    %v996 = vcombine.high %v796, %v800
    %v998 = vunpack.c.l.s4 1983009808
    %v999 = vunpack.c.0.s8 %v998
    %v1000 = vlaneseq
    %v1001 = vshrl.u32 %v1000, 7
    %v1002 = vsub.s32 %v999, %v1001
    %v1003 = vrot.slane %v995, %v1002
    %v1005 = vunpack.c.l.s4 1983009808
    %v1006 = vunpack.c.0.s8 %v1005
    %v1007 = vlaneseq
    %v1008 = vshrl.u32 %v1007, 7
    %v1009 = vsub.s32 %v1006, %v1008
    %v1010 = vrot.slane %v996, %v1009
    %v1011 = vcombine.low %v798, %v802
    %v1012 = vcombine.high %v798, %v802
    %v1014 = vunpack.c.l.s4 1983009808
    %v1015 = vunpack.c.0.s8 %v1014
    %v1016 = vlaneseq
    %v1017 = vshrl.u32 %v1016, 7
    %v1018 = vsub.s32 %v1015, %v1017
    %v1019 = vrot.slane %v1011, %v1018
    %v1021 = vunpack.c.l.s4 1983009808
    %v1022 = vunpack.c.0.s8 %v1021
    %v1023 = vlaneseq
    %v1024 = vshrl.u32 %v1023, 7
    %v1025 = vsub.s32 %v1022, %v1024
    %v1026 = vrot.slane %v1012, %v1025
    %v1027 = vcombine.low %v804, %v808
    %v1028 = vcombine.high %v804, %v808
    %v1030 = vunpack.c.l.s4 1983009808
    %v1031 = vunpack.c.0.s8 %v1030
    %v1032 = vlaneseq
    %v1033 = vshrl.u32 %v1032, 7
    %v1034 = vsub.s32 %v1031, %v1033
    %v1035 = vrot.slane %v1027, %v1034
    %v1037 = vunpack.c.l.s4 1983009808
    %v1038 = vunpack.c.0.s8 %v1037
    %v1039 = vlaneseq
    %v1040 = vshrl.u32 %v1039, 7
    %v1041 = vsub.s32 %v1038, %v1040
    %v1042 = vrot.slane %v1028, %v1041
    %v1043 = vcombine.low %v806, %v810
    %v1044 = vcombine.high %v806, %v810
    %v1046 = vunpack.c.l.s4 1983009808
    %v1047 = vunpack.c.0.s8 %v1046
    %v1048 = vlaneseq
    %v1049 = vshrl.u32 %v1048, 7
    %v1050 = vsub.s32 %v1047, %v1049
    %v1051 = vrot.slane %v1043, %v1050
    %v1053 = vunpack.c.l.s4 1983009808
    %v1054 = vunpack.c.0.s8 %v1053
    %v1055 = vlaneseq
    %v1056 = vshrl.u32 %v1055, 7
    %v1057 = vsub.s32 %v1054, %v1056
    %v1058 = vrot.slane %v1044, %v1057
    %v1059 = vcombine.low %v1003, %v1019
    %v1060 = vcombine.high %v1003, %v1019
    %v1062 = vunpack.c.l.s4 1934713408
    %v1063 = vunpack.c.0.s8 %v1062
    %v1064 = vlaneseq
    %v1065 = vshrl.u32 %v1064, 7
    %v1066 = vsub.s32 %v1063, %v1065
    %v1067 = vrot.slane %v1059, %v1066
    %v1069 = vunpack.c.l.s4 1934713408
    %v1070 = vunpack.c.0.s8 %v1069
    %v1071 = vlaneseq
    %v1072 = vshrl.u32 %v1071, 7
    %v1073 = vsub.s32 %v1070, %v1072
    %v1074 = vrot.slane %v1060, %v1073
    %v1075 = vcombine.low %v1010, %v1026
    %v1076 = vcombine.high %v1010, %v1026
    %v1078 = vunpack.c.l.s4 1934713408
    %v1079 = vunpack.c.0.s8 %v1078
    %v1080 = vlaneseq
    %v1081 = vshrl.u32 %v1080, 7
    %v1082 = vsub.s32 %v1079, %v1081
    %v1083 = vrot.slane %v1075, %v1082
    %v1085 = vunpack.c.l.s4 1934713408
    %v1086 = vunpack.c.0.s8 %v1085
    %v1087 = vlaneseq
    %v1088 = vshrl.u32 %v1087, 7
    %v1089 = vsub.s32 %v1086, %v1088
    %v1090 = vrot.slane %v1076, %v1089
    %v1091 = vcombine.low %v1035, %v1051
    %v1092 = vcombine.high %v1035, %v1051
    %v1094 = vunpack.c.l.s4 1934713408
    %v1095 = vunpack.c.0.s8 %v1094
    %v1096 = vlaneseq
    %v1097 = vshrl.u32 %v1096, 7
    %v1098 = vsub.s32 %v1095, %v1097
    %v1099 = vrot.slane %v1091, %v1098
    %v1101 = vunpack.c.l.s4 1934713408
    %v1102 = vunpack.c.0.s8 %v1101
    %v1103 = vlaneseq
    %v1104 = vshrl.u32 %v1103, 7
    %v1105 = vsub.s32 %v1102, %v1104
    %v1106 = vrot.slane %v1092, %v1105
    %v1107 = vcombine.low %v1042, %v1058
    %v1108 = vcombine.high %v1042, %v1058
    %v1110 = vunpack.c.l.s4 1934713408
    %v1111 = vunpack.c.0.s8 %v1110
    %v1112 = vlaneseq
    %v1113 = vshrl.u32 %v1112, 7
    %v1114 = vsub.s32 %v1111, %v1113
    %v1115 = vrot.slane %v1107, %v1114
    %v1117 = vunpack.c.l.s4 1934713408
    %v1118 = vunpack.c.0.s8 %v1117
    %v1119 = vlaneseq
    %v1120 = vshrl.u32 %v1119, 7
    %v1121 = vsub.s32 %v1118, %v1120
    %v1122 = vrot.slane %v1108, %v1121
    %v1123 = vcombine.low %v1067, %v1099
    %v1124 = vcombine.high %v1067, %v1099
    %v1125 = vcombine.low %v1074, %v1106
    %v1126 = vcombine.high %v1074, %v1106
    %v1127 = vcombine.low %v1083, %v1115
    %v1128 = vcombine.high %v1083, %v1115
    %v1129 = vcombine.low %v1090, %v1122
    %v1130 = vcombine.high %v1090, %v1122
    %v1131 = vcombine.low %v811, %v815
    %v1132 = vcombine.high %v811, %v815
    %v1134 = vunpack.c.l.s4 1983009808
    %v1135 = vunpack.c.0.s8 %v1134
    %v1136 = vlaneseq
    %v1137 = vshrl.u32 %v1136, 7
    %v1138 = vsub.s32 %v1135, %v1137
    %v1139 = vrot.slane %v1131, %v1138
    %v1141 = vunpack.c.l.s4 1983009808
    %v1142 = vunpack.c.0.s8 %v1141
    %v1143 = vlaneseq
    %v1144 = vshrl.u32 %v1143, 7
    %v1145 = vsub.s32 %v1142, %v1144
    %v1146 = vrot.slane %v1132, %v1145
    %v1147 = vcombine.low %v813, %v817
    %v1148 = vcombine.high %v813, %v817
    %v1150 = vunpack.c.l.s4 1983009808
    %v1151 = vunpack.c.0.s8 %v1150
    %v1152 = vlaneseq
    %v1153 = vshrl.u32 %v1152, 7
    %v1154 = vsub.s32 %v1151, %v1153
    %v1155 = vrot.slane %v1147, %v1154
    %v1157 = vunpack.c.l.s4 1983009808
    %v1158 = vunpack.c.0.s8 %v1157
    %v1159 = vlaneseq
    %v1160 = vshrl.u32 %v1159, 7
    %v1161 = vsub.s32 %v1158, %v1160
    %v1162 = vrot.slane %v1148, %v1161
    %v1163 = vcombine.low %v819, %v823
    %v1164 = vcombine.high %v819, %v823
    %v1166 = vunpack.c.l.s4 1983009808
    %v1167 = vunpack.c.0.s8 %v1166
    %v1168 = vlaneseq
    %v1169 = vshrl.u32 %v1168, 7
    %v1170 = vsub.s32 %v1167, %v1169
    %v1171 = vrot.slane %v1163, %v1170
    %v1173 = vunpack.c.l.s4 1983009808
    %v1174 = vunpack.c.0.s8 %v1173
    %v1175 = vlaneseq
    %v1176 = vshrl.u32 %v1175, 7
    %v1177 = vsub.s32 %v1174, %v1176
    %v1178 = vrot.slane %v1164, %v1177
    %v1179 = vcombine.low %v821, %v825
    %v1180 = vcombine.high %v821, %v825
    %v1182 = vunpack.c.l.s4 1983009808
    %v1183 = vunpack.c.0.s8 %v1182
    %v1184 = vlaneseq
    %v1185 = vshrl.u32 %v1184, 7
    %v1186 = vsub.s32 %v1183, %v1185
    %v1187 = vrot.slane %v1179, %v1186
    %v1189 = vunpack.c.l.s4 1983009808
    %v1190 = vunpack.c.0.s8 %v1189
    %v1191 = vlaneseq
    %v1192 = vshrl.u32 %v1191, 7
    %v1193 = vsub.s32 %v1190, %v1192
    %v1194 = vrot.slane %v1180, %v1193
    %v1195 = vcombine.low %v1139, %v1155
    %v1196 = vcombine.high %v1139, %v1155
    %v1198 = vunpack.c.l.s4 1934713408
    %v1199 = vunpack.c.0.s8 %v1198
    %v1200 = vlaneseq
    %v1201 = vshrl.u32 %v1200, 7
    %v1202 = vsub.s32 %v1199, %v1201
    %v1203 = vrot.slane %v1195, %v1202
    %v1205 = vunpack.c.l.s4 1934713408
    %v1206 = vunpack.c.0.s8 %v1205
    %v1207 = vlaneseq
    %v1208 = vshrl.u32 %v1207, 7
    %v1209 = vsub.s32 %v1206, %v1208
    %v1210 = vrot.slane %v1196, %v1209
    %v1211 = vcombine.low %v1146, %v1162
    %v1212 = vcombine.high %v1146, %v1162
    %v1214 = vunpack.c.l.s4 1934713408
    %v1215 = vunpack.c.0.s8 %v1214
    %v1216 = vlaneseq
    %v1217 = vshrl.u32 %v1216, 7
    %v1218 = vsub.s32 %v1215, %v1217
    %v1219 = vrot.slane %v1211, %v1218
    %v1221 = vunpack.c.l.s4 1934713408
    %v1222 = vunpack.c.0.s8 %v1221
    %v1223 = vlaneseq
    %v1224 = vshrl.u32 %v1223, 7
    %v1225 = vsub.s32 %v1222, %v1224
    %v1226 = vrot.slane %v1212, %v1225
    %v1227 = vcombine.low %v1171, %v1187
    %v1228 = vcombine.high %v1171, %v1187
    %v1230 = vunpack.c.l.s4 1934713408
    %v1231 = vunpack.c.0.s8 %v1230
    %v1232 = vlaneseq
    %v1233 = vshrl.u32 %v1232, 7
    %v1234 = vsub.s32 %v1231, %v1233
    %v1235 = vrot.slane %v1227, %v1234
    %v1237 = vunpack.c.l.s4 1934713408
    %v1238 = vunpack.c.0.s8 %v1237
    %v1239 = vlaneseq
    %v1240 = vshrl.u32 %v1239, 7
    %v1241 = vsub.s32 %v1238, %v1240
    %v1242 = vrot.slane %v1228, %v1241
    %v1243 = vcombine.low %v1178, %v1194
    %v1244 = vcombine.high %v1178, %v1194
    %v1246 = vunpack.c.l.s4 1934713408
    %v1247 = vunpack.c.0.s8 %v1246
    %v1248 = vlaneseq
    %v1249 = vshrl.u32 %v1248, 7
    %v1250 = vsub.s32 %v1247, %v1249
    %v1251 = vrot.slane %v1243, %v1250
    %v1253 = vunpack.c.l.s4 1934713408
    %v1254 = vunpack.c.0.s8 %v1253
    %v1255 = vlaneseq
    %v1256 = vshrl.u32 %v1255, 7
    %v1257 = vsub.s32 %v1254, %v1256
    %v1258 = vrot.slane %v1244, %v1257
    %v1259 = vcombine.low %v1203, %v1235
    %v1260 = vcombine.high %v1203, %v1235
    %v1261 = vcombine.low %v1210, %v1242
    %v1262 = vcombine.high %v1210, %v1242
    %v1263 = vcombine.low %v1219, %v1251
    %v1264 = vcombine.high %v1219, %v1251
    %v1265 = vcombine.low %v1226, %v1258
    %v1266 = vcombine.high %v1226, %v1258
    %v1267 = vcombine.low %v812, %v816
    %v1268 = vcombine.high %v812, %v816
    %v1270 = vunpack.c.l.s4 1983009808
    %v1271 = vunpack.c.0.s8 %v1270
    %v1272 = vlaneseq
    %v1273 = vshrl.u32 %v1272, 7
    %v1274 = vsub.s32 %v1271, %v1273
    %v1275 = vrot.slane %v1267, %v1274
    %v1277 = vunpack.c.l.s4 1983009808
    %v1278 = vunpack.c.0.s8 %v1277
    %v1279 = vlaneseq
    %v1280 = vshrl.u32 %v1279, 7
    %v1281 = vsub.s32 %v1278, %v1280
    %v1282 = vrot.slane %v1268, %v1281
    %v1283 = vcombine.low %v814, %v818
    %v1284 = vcombine.high %v814, %v818
    %v1286 = vunpack.c.l.s4 1983009808
    %v1287 = vunpack.c.0.s8 %v1286
    %v1288 = vlaneseq
    %v1289 = vshrl.u32 %v1288, 7
    %v1290 = vsub.s32 %v1287, %v1289
    %v1291 = vrot.slane %v1283, %v1290
    %v1293 = vunpack.c.l.s4 1983009808
    %v1294 = vunpack.c.0.s8 %v1293
    %v1295 = vlaneseq
    %v1296 = vshrl.u32 %v1295, 7
    %v1297 = vsub.s32 %v1294, %v1296
    %v1298 = vrot.slane %v1284, %v1297
    %v1299 = vcombine.low %v820, %v824
    %v1300 = vcombine.high %v820, %v824
    %v1302 = vunpack.c.l.s4 1983009808
    %v1303 = vunpack.c.0.s8 %v1302
    %v1304 = vlaneseq
    %v1305 = vshrl.u32 %v1304, 7
    %v1306 = vsub.s32 %v1303, %v1305
    %v1307 = vrot.slane %v1299, %v1306
    %v1309 = vunpack.c.l.s4 1983009808
    %v1310 = vunpack.c.0.s8 %v1309
    %v1311 = vlaneseq
    %v1312 = vshrl.u32 %v1311, 7
    %v1313 = vsub.s32 %v1310, %v1312
    %v1314 = vrot.slane %v1300, %v1313
    %v1315 = vcombine.low %v822, %v826
    %v1316 = vcombine.high %v822, %v826
    %v1318 = vunpack.c.l.s4 1983009808
    %v1319 = vunpack.c.0.s8 %v1318
    %v1320 = vlaneseq
    %v1321 = vshrl.u32 %v1320, 7
    %v1322 = vsub.s32 %v1319, %v1321
    %v1323 = vrot.slane %v1315, %v1322
    %v1325 = vunpack.c.l.s4 1983009808
    %v1326 = vunpack.c.0.s8 %v1325
    %v1327 = vlaneseq
    %v1328 = vshrl.u32 %v1327, 7
    %v1329 = vsub.s32 %v1326, %v1328
    %v1330 = vrot.slane %v1316, %v1329
    %v1331 = vcombine.low %v1275, %v1291
    %v1332 = vcombine.high %v1275, %v1291
    %v1334 = vunpack.c.l.s4 1934713408
    %v1335 = vunpack.c.0.s8 %v1334
    %v1336 = vlaneseq
    %v1337 = vshrl.u32 %v1336, 7
    %v1338 = vsub.s32 %v1335, %v1337
    %v1339 = vrot.slane %v1331, %v1338
    %v1341 = vunpack.c.l.s4 1934713408
    %v1342 = vunpack.c.0.s8 %v1341
    %v1343 = vlaneseq
    %v1344 = vshrl.u32 %v1343, 7
    %v1345 = vsub.s32 %v1342, %v1344
    %v1346 = vrot.slane %v1332, %v1345
    %v1347 = vcombine.low %v1282, %v1298
    %v1348 = vcombine.high %v1282, %v1298
    %v1350 = vunpack.c.l.s4 1934713408
    %v1351 = vunpack.c.0.s8 %v1350
    %v1352 = vlaneseq
    %v1353 = vshrl.u32 %v1352, 7
    %v1354 = vsub.s32 %v1351, %v1353
    %v1355 = vrot.slane %v1347, %v1354
    %v1357 = vunpack.c.l.s4 1934713408
    %v1358 = vunpack.c.0.s8 %v1357
    %v1359 = vlaneseq
    %v1360 = vshrl.u32 %v1359, 7
    %v1361 = vsub.s32 %v1358, %v1360
    %v1362 = vrot.slane %v1348, %v1361
    %v1363 = vcombine.low %v1307, %v1323
    %v1364 = vcombine.high %v1307, %v1323
    %v1366 = vunpack.c.l.s4 1934713408
    %v1367 = vunpack.c.0.s8 %v1366
    %v1368 = vlaneseq
    %v1369 = vshrl.u32 %v1368, 7
    %v1370 = vsub.s32 %v1367, %v1369
    %v1371 = vrot.slane %v1363, %v1370
    %v1373 = vunpack.c.l.s4 1934713408
    %v1374 = vunpack.c.0.s8 %v1373
    %v1375 = vlaneseq
    %v1376 = vshrl.u32 %v1375, 7
    %v1377 = vsub.s32 %v1374, %v1376
    %v1378 = vrot.slane %v1364, %v1377
    %v1379 = vcombine.low %v1314, %v1330
    %v1380 = vcombine.high %v1314, %v1330
    %v1382 = vunpack.c.l.s4 1934713408
    %v1383 = vunpack.c.0.s8 %v1382
    %v1384 = vlaneseq
    %v1385 = vshrl.u32 %v1384, 7
    %v1386 = vsub.s32 %v1383, %v1385
    %v1387 = vrot.slane %v1379, %v1386
    %v1389 = vunpack.c.l.s4 1934713408
    %v1390 = vunpack.c.0.s8 %v1389
    %v1391 = vlaneseq
    %v1392 = vshrl.u32 %v1391, 7
    %v1393 = vsub.s32 %v1390, %v1392
    %v1394 = vrot.slane %v1380, %v1393
    %v1395 = vcombine.low %v1339, %v1371
    %v1396 = vcombine.high %v1339, %v1371
    %v1397 = vcombine.low %v1346, %v1378
    %v1398 = vcombine.high %v1346, %v1378
    %v1399 = vcombine.low %v1355, %v1387
    %v1400 = vcombine.high %v1355, %v1387
    %v1401 = vcombine.low %v1362, %v1394
    %v1402 = vcombine.high %v1362, %v1394
    %v1403 = vcombine.low %v827, %v831
    %v1404 = vcombine.high %v827, %v831
    %v1406 = vunpack.c.l.s4 1983009808
    %v1407 = vunpack.c.0.s8 %v1406
    %v1408 = vlaneseq
    %v1409 = vshrl.u32 %v1408, 7
    %v1410 = vsub.s32 %v1407, %v1409
    %v1411 = vrot.slane %v1403, %v1410
    %v1413 = vunpack.c.l.s4 1983009808
    %v1414 = vunpack.c.0.s8 %v1413
    %v1415 = vlaneseq
    %v1416 = vshrl.u32 %v1415, 7
    %v1417 = vsub.s32 %v1414, %v1416
    %v1418 = vrot.slane %v1404, %v1417
    %v1419 = vcombine.low %v829, %v833
    %v1420 = vcombine.high %v829, %v833
    %v1422 = vunpack.c.l.s4 1983009808
    %v1423 = vunpack.c.0.s8 %v1422
    %v1424 = vlaneseq
    %v1425 = vshrl.u32 %v1424, 7
    %v1426 = vsub.s32 %v1423, %v1425
    %v1427 = vrot.slane %v1419, %v1426
    %v1429 = vunpack.c.l.s4 1983009808
    %v1430 = vunpack.c.0.s8 %v1429
    %v1431 = vlaneseq
    %v1432 = vshrl.u32 %v1431, 7
    %v1433 = vsub.s32 %v1430, %v1432
    %v1434 = vrot.slane %v1420, %v1433
    %v1435 = vcombine.low %v835, %v839
    %v1436 = vcombine.high %v835, %v839
    %v1438 = vunpack.c.l.s4 1983009808
    %v1439 = vunpack.c.0.s8 %v1438
    %v1440 = vlaneseq
    %v1441 = vshrl.u32 %v1440, 7
    %v1442 = vsub.s32 %v1439, %v1441
    %v1443 = vrot.slane %v1435, %v1442
    %v1445 = vunpack.c.l.s4 1983009808
    %v1446 = vunpack.c.0.s8 %v1445
    %v1447 = vlaneseq
    %v1448 = vshrl.u32 %v1447, 7
    %v1449 = vsub.s32 %v1446, %v1448
    %v1450 = vrot.slane %v1436, %v1449
    %v1451 = vcombine.low %v837, %v841
    %v1452 = vcombine.high %v837, %v841
    %v1454 = vunpack.c.l.s4 1983009808
    %v1455 = vunpack.c.0.s8 %v1454
    %v1456 = vlaneseq
    %v1457 = vshrl.u32 %v1456, 7
    %v1458 = vsub.s32 %v1455, %v1457
    %v1459 = vrot.slane %v1451, %v1458
    %v1461 = vunpack.c.l.s4 1983009808
    %v1462 = vunpack.c.0.s8 %v1461
    %v1463 = vlaneseq
    %v1464 = vshrl.u32 %v1463, 7
    %v1465 = vsub.s32 %v1462, %v1464
    %v1466 = vrot.slane %v1452, %v1465
    %v1467 = vcombine.low %v1411, %v1427
    %v1468 = vcombine.high %v1411, %v1427
    %v1470 = vunpack.c.l.s4 1934713408
    %v1471 = vunpack.c.0.s8 %v1470
    %v1472 = vlaneseq
    %v1473 = vshrl.u32 %v1472, 7
    %v1474 = vsub.s32 %v1471, %v1473
    %v1475 = vrot.slane %v1467, %v1474
    %v1477 = vunpack.c.l.s4 1934713408
    %v1478 = vunpack.c.0.s8 %v1477
    %v1479 = vlaneseq
    %v1480 = vshrl.u32 %v1479, 7
    %v1481 = vsub.s32 %v1478, %v1480
    %v1482 = vrot.slane %v1468, %v1481
    %v1483 = vcombine.low %v1418, %v1434
    %v1484 = vcombine.high %v1418, %v1434
    %v1486 = vunpack.c.l.s4 1934713408
    %v1487 = vunpack.c.0.s8 %v1486
    %v1488 = vlaneseq
    %v1489 = vshrl.u32 %v1488, 7
    %v1490 = vsub.s32 %v1487, %v1489
    %v1491 = vrot.slane %v1483, %v1490
    %v1493 = vunpack.c.l.s4 1934713408
    %v1494 = vunpack.c.0.s8 %v1493
    %v1495 = vlaneseq
    %v1496 = vshrl.u32 %v1495, 7
    %v1497 = vsub.s32 %v1494, %v1496
    %v1498 = vrot.slane %v1484, %v1497
    %v1499 = vcombine.low %v1443, %v1459
    %v1500 = vcombine.high %v1443, %v1459
    %v1502 = vunpack.c.l.s4 1934713408
    %v1503 = vunpack.c.0.s8 %v1502
    %v1504 = vlaneseq
    %v1505 = vshrl.u32 %v1504, 7
    %v1506 = vsub.s32 %v1503, %v1505
    %v1507 = vrot.slane %v1499, %v1506
    %v1509 = vunpack.c.l.s4 1934713408
    %v1510 = vunpack.c.0.s8 %v1509
    %v1511 = vlaneseq
    %v1512 = vshrl.u32 %v1511, 7
    %v1513 = vsub.s32 %v1510, %v1512
    %v1514 = vrot.slane %v1500, %v1513
    %v1515 = vcombine.low %v1450, %v1466
    %v1516 = vcombine.high %v1450, %v1466
    %v1518 = vunpack.c.l.s4 1934713408
    %v1519 = vunpack.c.0.s8 %v1518
    %v1520 = vlaneseq
    %v1521 = vshrl.u32 %v1520, 7
    %v1522 = vsub.s32 %v1519, %v1521
    %v1523 = vrot.slane %v1515, %v1522
    %v1525 = vunpack.c.l.s4 1934713408
    %v1526 = vunpack.c.0.s8 %v1525
    %v1527 = vlaneseq
    %v1528 = vshrl.u32 %v1527, 7
    %v1529 = vsub.s32 %v1526, %v1528
    %v1530 = vrot.slane %v1516, %v1529
    %v1531 = vcombine.low %v1475, %v1507
    %v1532 = vcombine.high %v1475, %v1507
    %v1533 = vcombine.low %v1482, %v1514
    %v1534 = vcombine.high %v1482, %v1514
    %v1535 = vcombine.low %v1491, %v1523
    %v1536 = vcombine.high %v1491, %v1523
    %v1537 = vcombine.low %v1498, %v1530
    %v1538 = vcombine.high %v1498, %v1530
    %v1539 = vcombine.low %v828, %v832
    %v1540 = vcombine.high %v828, %v832
    %v1542 = vunpack.c.l.s4 1983009808
    %v1543 = vunpack.c.0.s8 %v1542
    %v1544 = vlaneseq
    %v1545 = vshrl.u32 %v1544, 7
    %v1546 = vsub.s32 %v1543, %v1545
    %v1547 = vrot.slane %v1539, %v1546
    %v1549 = vunpack.c.l.s4 1983009808
    %v1550 = vunpack.c.0.s8 %v1549
    %v1551 = vlaneseq
    %v1552 = vshrl.u32 %v1551, 7
    %v1553 = vsub.s32 %v1550, %v1552
    %v1554 = vrot.slane %v1540, %v1553
    %v1555 = vcombine.low %v830, %v834
    %v1556 = vcombine.high %v830, %v834
    %v1558 = vunpack.c.l.s4 1983009808
    %v1559 = vunpack.c.0.s8 %v1558
    %v1560 = vlaneseq
    %v1561 = vshrl.u32 %v1560, 7
    %v1562 = vsub.s32 %v1559, %v1561
    %v1563 = vrot.slane %v1555, %v1562
    %v1565 = vunpack.c.l.s4 1983009808
    %v1566 = vunpack.c.0.s8 %v1565
    %v1567 = vlaneseq
    %v1568 = vshrl.u32 %v1567, 7
    %v1569 = vsub.s32 %v1566, %v1568
    %v1570 = vrot.slane %v1556, %v1569
    %v1571 = vcombine.low %v836, %v840
    %v1572 = vcombine.high %v836, %v840
    %v1574 = vunpack.c.l.s4 1983009808
    %v1575 = vunpack.c.0.s8 %v1574
    %v1576 = vlaneseq
    %v1577 = vshrl.u32 %v1576, 7
    %v1578 = vsub.s32 %v1575, %v1577
    %v1579 = vrot.slane %v1571, %v1578
    %v1581 = vunpack.c.l.s4 1983009808
    %v1582 = vunpack.c.0.s8 %v1581
    %v1583 = vlaneseq
    %v1584 = vshrl.u32 %v1583, 7
    %v1585 = vsub.s32 %v1582, %v1584
    %v1586 = vrot.slane %v1572, %v1585
    %v1587 = vcombine.low %v838, %v842
    %v1588 = vcombine.high %v838, %v842
    %v1590 = vunpack.c.l.s4 1983009808
    %v1591 = vunpack.c.0.s8 %v1590
    %v1592 = vlaneseq
    %v1593 = vshrl.u32 %v1592, 7
    %v1594 = vsub.s32 %v1591, %v1593
    %v1595 = vrot.slane %v1587, %v1594
    %v1597 = vunpack.c.l.s4 1983009808
    %v1598 = vunpack.c.0.s8 %v1597
    %v1599 = vlaneseq
    %v1600 = vshrl.u32 %v1599, 7
    %v1601 = vsub.s32 %v1598, %v1600
    %v1602 = vrot.slane %v1588, %v1601
    %v1603 = vcombine.low %v1547, %v1563
    %v1604 = vcombine.high %v1547, %v1563
    %v1606 = vunpack.c.l.s4 1934713408
    %v1607 = vunpack.c.0.s8 %v1606
    %v1608 = vlaneseq
    %v1609 = vshrl.u32 %v1608, 7
    %v1610 = vsub.s32 %v1607, %v1609
    %v1611 = vrot.slane %v1603, %v1610
    %v1613 = vunpack.c.l.s4 1934713408
    %v1614 = vunpack.c.0.s8 %v1613
    %v1615 = vlaneseq
    %v1616 = vshrl.u32 %v1615, 7
    %v1617 = vsub.s32 %v1614, %v1616
    %v1618 = vrot.slane %v1604, %v1617
    %v1619 = vcombine.low %v1554, %v1570
    %v1620 = vcombine.high %v1554, %v1570
    %v1622 = vunpack.c.l.s4 1934713408
    %v1623 = vunpack.c.0.s8 %v1622
    %v1624 = vlaneseq
    %v1625 = vshrl.u32 %v1624, 7
    %v1626 = vsub.s32 %v1623, %v1625
    %v1627 = vrot.slane %v1619, %v1626
    %v1629 = vunpack.c.l.s4 1934713408
    %v1630 = vunpack.c.0.s8 %v1629
    %v1631 = vlaneseq
    %v1632 = vshrl.u32 %v1631, 7
    %v1633 = vsub.s32 %v1630, %v1632
    %v1634 = vrot.slane %v1620, %v1633
    %v1635 = vcombine.low %v1579, %v1595
    %v1636 = vcombine.high %v1579, %v1595
    %v1638 = vunpack.c.l.s4 1934713408
    %v1639 = vunpack.c.0.s8 %v1638
    %v1640 = vlaneseq
    %v1641 = vshrl.u32 %v1640, 7
    %v1642 = vsub.s32 %v1639, %v1641
    %v1643 = vrot.slane %v1635, %v1642
    %v1645 = vunpack.c.l.s4 1934713408
    %v1646 = vunpack.c.0.s8 %v1645
    %v1647 = vlaneseq
    %v1648 = vshrl.u32 %v1647, 7
    %v1649 = vsub.s32 %v1646, %v1648
    %v1650 = vrot.slane %v1636, %v1649
    %v1651 = vcombine.low %v1586, %v1602
    %v1652 = vcombine.high %v1586, %v1602
    %v1654 = vunpack.c.l.s4 1934713408
    %v1655 = vunpack.c.0.s8 %v1654
    %v1656 = vlaneseq
    %v1657 = vshrl.u32 %v1656, 7
    %v1658 = vsub.s32 %v1655, %v1657
    %v1659 = vrot.slane %v1651, %v1658
    %v1661 = vunpack.c.l.s4 1934713408
    %v1662 = vunpack.c.0.s8 %v1661
    %v1663 = vlaneseq
    %v1664 = vshrl.u32 %v1663, 7
    %v1665 = vsub.s32 %v1662, %v1664
    %v1666 = vrot.slane %v1652, %v1665
    %v1667 = vcombine.low %v1611, %v1643
    %v1668 = vcombine.high %v1611, %v1643
    %v1669 = vcombine.low %v1618, %v1650
    %v1670 = vcombine.high %v1618, %v1650
    %v1671 = vcombine.low %v1627, %v1659
    %v1672 = vcombine.high %v1627, %v1659
    %v1673 = vcombine.low %v1634, %v1666
    %v1674 = vcombine.high %v1634, %v1666
    %v1675 = vcombine.low %v843, %v847
    %v1676 = vcombine.high %v843, %v847
    %v1678 = vunpack.c.l.s4 1983009808
    %v1679 = vunpack.c.0.s8 %v1678
    %v1680 = vlaneseq
    %v1681 = vshrl.u32 %v1680, 7
    %v1682 = vsub.s32 %v1679, %v1681
    %v1683 = vrot.slane %v1675, %v1682
    %v1685 = vunpack.c.l.s4 1983009808
    %v1686 = vunpack.c.0.s8 %v1685
    %v1687 = vlaneseq
    %v1688 = vshrl.u32 %v1687, 7
    %v1689 = vsub.s32 %v1686, %v1688
    %v1690 = vrot.slane %v1676, %v1689
    %v1691 = vcombine.low %v845, %v849
    %v1692 = vcombine.high %v845, %v849
    %v1694 = vunpack.c.l.s4 1983009808
    %v1695 = vunpack.c.0.s8 %v1694
    %v1696 = vlaneseq
    %v1697 = vshrl.u32 %v1696, 7
    %v1698 = vsub.s32 %v1695, %v1697
    %v1699 = vrot.slane %v1691, %v1698
    %v1701 = vunpack.c.l.s4 1983009808
    %v1702 = vunpack.c.0.s8 %v1701
    %v1703 = vlaneseq
    %v1704 = vshrl.u32 %v1703, 7
    %v1705 = vsub.s32 %v1702, %v1704
    %v1706 = vrot.slane %v1692, %v1705
    %v1707 = vcombine.low %v851, %v855
    %v1708 = vcombine.high %v851, %v855
    %v1710 = vunpack.c.l.s4 1983009808
    %v1711 = vunpack.c.0.s8 %v1710
    %v1712 = vlaneseq
    %v1713 = vshrl.u32 %v1712, 7
    %v1714 = vsub.s32 %v1711, %v1713
    %v1715 = vrot.slane %v1707, %v1714
    %v1717 = vunpack.c.l.s4 1983009808
    %v1718 = vunpack.c.0.s8 %v1717
    %v1719 = vlaneseq
    %v1720 = vshrl.u32 %v1719, 7
    %v1721 = vsub.s32 %v1718, %v1720
    %v1722 = vrot.slane %v1708, %v1721
    %v1723 = vcombine.low %v853, %v857
    %v1724 = vcombine.high %v853, %v857
    %v1726 = vunpack.c.l.s4 1983009808
    %v1727 = vunpack.c.0.s8 %v1726
    %v1728 = vlaneseq
    %v1729 = vshrl.u32 %v1728, 7
    %v1730 = vsub.s32 %v1727, %v1729
    %v1731 = vrot.slane %v1723, %v1730
    %v1733 = vunpack.c.l.s4 1983009808
    %v1734 = vunpack.c.0.s8 %v1733
    %v1735 = vlaneseq
    %v1736 = vshrl.u32 %v1735, 7
    %v1737 = vsub.s32 %v1734, %v1736
    %v1738 = vrot.slane %v1724, %v1737
    %v1739 = vcombine.low %v1683, %v1699
    %v1740 = vcombine.high %v1683, %v1699
    %v1742 = vunpack.c.l.s4 1934713408
    %v1743 = vunpack.c.0.s8 %v1742
    %v1744 = vlaneseq
    %v1745 = vshrl.u32 %v1744, 7
    %v1746 = vsub.s32 %v1743, %v1745
    %v1747 = vrot.slane %v1739, %v1746
    %v1749 = vunpack.c.l.s4 1934713408
    %v1750 = vunpack.c.0.s8 %v1749
    %v1751 = vlaneseq
    %v1752 = vshrl.u32 %v1751, 7
    %v1753 = vsub.s32 %v1750, %v1752
    %v1754 = vrot.slane %v1740, %v1753
    %v1755 = vcombine.low %v1690, %v1706
    %v1756 = vcombine.high %v1690, %v1706
    %v1758 = vunpack.c.l.s4 1934713408
    %v1759 = vunpack.c.0.s8 %v1758
    %v1760 = vlaneseq
    %v1761 = vshrl.u32 %v1760, 7
    %v1762 = vsub.s32 %v1759, %v1761
    %v1763 = vrot.slane %v1755, %v1762
    %v1765 = vunpack.c.l.s4 1934713408
    %v1766 = vunpack.c.0.s8 %v1765
    %v1767 = vlaneseq
    %v1768 = vshrl.u32 %v1767, 7
    %v1769 = vsub.s32 %v1766, %v1768
    %v1770 = vrot.slane %v1756, %v1769
    %v1771 = vcombine.low %v1715, %v1731
    %v1772 = vcombine.high %v1715, %v1731
    %v1774 = vunpack.c.l.s4 1934713408
    %v1775 = vunpack.c.0.s8 %v1774
    %v1776 = vlaneseq
    %v1777 = vshrl.u32 %v1776, 7
    %v1778 = vsub.s32 %v1775, %v1777
    %v1779 = vrot.slane %v1771, %v1778
    %v1781 = vunpack.c.l.s4 1934713408
    %v1782 = vunpack.c.0.s8 %v1781
    %v1783 = vlaneseq
    %v1784 = vshrl.u32 %v1783, 7
    %v1785 = vsub.s32 %v1782, %v1784
    %v1786 = vrot.slane %v1772, %v1785
    %v1787 = vcombine.low %v1722, %v1738
    %v1788 = vcombine.high %v1722, %v1738
    %v1790 = vunpack.c.l.s4 1934713408
    %v1791 = vunpack.c.0.s8 %v1790
    %v1792 = vlaneseq
    %v1793 = vshrl.u32 %v1792, 7
    %v1794 = vsub.s32 %v1791, %v1793
    %v1795 = vrot.slane %v1787, %v1794
    %v1797 = vunpack.c.l.s4 1934713408
    %v1798 = vunpack.c.0.s8 %v1797
    %v1799 = vlaneseq
    %v1800 = vshrl.u32 %v1799, 7
    %v1801 = vsub.s32 %v1798, %v1800
    %v1802 = vrot.slane %v1788, %v1801
    %v1803 = vcombine.low %v1747, %v1779
    %v1804 = vcombine.high %v1747, %v1779
    %v1805 = vcombine.low %v1754, %v1786
    %v1806 = vcombine.high %v1754, %v1786
    %v1807 = vcombine.low %v1763, %v1795
    %v1808 = vcombine.high %v1763, %v1795
    %v1809 = vcombine.low %v1770, %v1802
    %v1810 = vcombine.high %v1770, %v1802
    %v1811 = vcombine.low %v844, %v848
    %v1812 = vcombine.high %v844, %v848
    %v1814 = vunpack.c.l.s4 1983009808
    %v1815 = vunpack.c.0.s8 %v1814
    %v1816 = vlaneseq
    %v1817 = vshrl.u32 %v1816, 7
    %v1818 = vsub.s32 %v1815, %v1817
    %v1819 = vrot.slane %v1811, %v1818
    %v1821 = vunpack.c.l.s4 1983009808
    %v1822 = vunpack.c.0.s8 %v1821
    %v1823 = vlaneseq
    %v1824 = vshrl.u32 %v1823, 7
    %v1825 = vsub.s32 %v1822, %v1824
    %v1826 = vrot.slane %v1812, %v1825
    %v1827 = vcombine.low %v846, %v850
    %v1828 = vcombine.high %v846, %v850
    %v1830 = vunpack.c.l.s4 1983009808
    %v1831 = vunpack.c.0.s8 %v1830
    %v1832 = vlaneseq
    %v1833 = vshrl.u32 %v1832, 7
    %v1834 = vsub.s32 %v1831, %v1833
    %v1835 = vrot.slane %v1827, %v1834
    %v1837 = vunpack.c.l.s4 1983009808
    %v1838 = vunpack.c.0.s8 %v1837
    %v1839 = vlaneseq
    %v1840 = vshrl.u32 %v1839, 7
    %v1841 = vsub.s32 %v1838, %v1840
    %v1842 = vrot.slane %v1828, %v1841
    %v1843 = vcombine.low %v852, %v856
    %v1844 = vcombine.high %v852, %v856
    %v1846 = vunpack.c.l.s4 1983009808
    %v1847 = vunpack.c.0.s8 %v1846
    %v1848 = vlaneseq
    %v1849 = vshrl.u32 %v1848, 7
    %v1850 = vsub.s32 %v1847, %v1849
    %v1851 = vrot.slane %v1843, %v1850
    %v1853 = vunpack.c.l.s4 1983009808
    %v1854 = vunpack.c.0.s8 %v1853
    %v1855 = vlaneseq
    %v1856 = vshrl.u32 %v1855, 7
    %v1857 = vsub.s32 %v1854, %v1856
    %v1858 = vrot.slane %v1844, %v1857
    %v1859 = vcombine.low %v854, %v858
    %v1860 = vcombine.high %v854, %v858
    %v1862 = vunpack.c.l.s4 1983009808
    %v1863 = vunpack.c.0.s8 %v1862
    %v1864 = vlaneseq
    %v1865 = vshrl.u32 %v1864, 7
    %v1866 = vsub.s32 %v1863, %v1865
    %v1867 = vrot.slane %v1859, %v1866
    %v1869 = vunpack.c.l.s4 1983009808
    %v1870 = vunpack.c.0.s8 %v1869
    %v1871 = vlaneseq
    %v1872 = vshrl.u32 %v1871, 7
    %v1873 = vsub.s32 %v1870, %v1872
    %v1874 = vrot.slane %v1860, %v1873
    %v1875 = vcombine.low %v1819, %v1835
    %v1876 = vcombine.high %v1819, %v1835
    %v1878 = vunpack.c.l.s4 1934713408
    %v1879 = vunpack.c.0.s8 %v1878
    %v1880 = vlaneseq
    %v1881 = vshrl.u32 %v1880, 7
    %v1882 = vsub.s32 %v1879, %v1881
    %v1883 = vrot.slane %v1875, %v1882
    %v1885 = vunpack.c.l.s4 1934713408
    %v1886 = vunpack.c.0.s8 %v1885
    %v1887 = vlaneseq
    %v1888 = vshrl.u32 %v1887, 7
    %v1889 = vsub.s32 %v1886, %v1888
    %v1890 = vrot.slane %v1876, %v1889
    %v1891 = vcombine.low %v1826, %v1842
    %v1892 = vcombine.high %v1826, %v1842
    %v1894 = vunpack.c.l.s4 1934713408
    %v1895 = vunpack.c.0.s8 %v1894
    %v1896 = vlaneseq
    %v1897 = vshrl.u32 %v1896, 7
    %v1898 = vsub.s32 %v1895, %v1897
    %v1899 = vrot.slane %v1891, %v1898
    %v1901 = vunpack.c.l.s4 1934713408
    %v1902 = vunpack.c.0.s8 %v1901
    %v1903 = vlaneseq
    %v1904 = vshrl.u32 %v1903, 7
    %v1905 = vsub.s32 %v1902, %v1904
    %v1906 = vrot.slane %v1892, %v1905
    %v1907 = vcombine.low %v1851, %v1867
    %v1908 = vcombine.high %v1851, %v1867
    %v1910 = vunpack.c.l.s4 1934713408
    %v1911 = vunpack.c.0.s8 %v1910
    %v1912 = vlaneseq
    %v1913 = vshrl.u32 %v1912, 7
    %v1914 = vsub.s32 %v1911, %v1913
    %v1915 = vrot.slane %v1907, %v1914
    %v1917 = vunpack.c.l.s4 1934713408
    %v1918 = vunpack.c.0.s8 %v1917
    %v1919 = vlaneseq
    %v1920 = vshrl.u32 %v1919, 7
    %v1921 = vsub.s32 %v1918, %v1920
    %v1922 = vrot.slane %v1908, %v1921
    %v1923 = vcombine.low %v1858, %v1874
    %v1924 = vcombine.high %v1858, %v1874
    %v1926 = vunpack.c.l.s4 1934713408
    %v1927 = vunpack.c.0.s8 %v1926
    %v1928 = vlaneseq
    %v1929 = vshrl.u32 %v1928, 7
    %v1930 = vsub.s32 %v1927, %v1929
    %v1931 = vrot.slane %v1923, %v1930
    %v1933 = vunpack.c.l.s4 1934713408
    %v1934 = vunpack.c.0.s8 %v1933
    %v1935 = vlaneseq
    %v1936 = vshrl.u32 %v1935, 7
    %v1937 = vsub.s32 %v1934, %v1936
    %v1938 = vrot.slane %v1924, %v1937
    %v1939 = vcombine.low %v1883, %v1915
    %v1940 = vcombine.high %v1883, %v1915
    %v1941 = vcombine.low %v1890, %v1922
    %v1942 = vcombine.high %v1890, %v1922
    %v1943 = vcombine.low %v1899, %v1931
    %v1944 = vcombine.high %v1899, %v1931
    %v1945 = vcombine.low %v1906, %v1938
    %v1946 = vcombine.high %v1906, %v1938
    %1951 = vrot.lane.b32.xlu0 %v988, 2
    %v1952 = vpop.permute.xlu0 %1951
    %1953 = vrot.lane.b32.xlu0 %v1260, 2
    %v1954 = vpop.permute.xlu0 %1953
    %1955 = vrot.lane.b32.xlu0 %v1532, 2
    %v1956 = vpop.permute.xlu0 %1955
    %1957 = vrot.lane.b32.xlu0 %v1804, 2
    %v1958 = vpop.permute.xlu0 %1957
    %1967 = vrot.lane.b32.xlu0 %v989, 4
    %v1968 = vpop.permute.xlu0 %1967
    %1969 = vrot.lane.b32.xlu0 %v1261, 4
    %v1970 = vpop.permute.xlu0 %1969
    %1971 = vrot.lane.b32.xlu0 %v1533, 4
    %v1972 = vpop.permute.xlu0 %1971
    %1973 = vrot.lane.b32.xlu0 %v1805, 4
    %v1974 = vpop.permute.xlu0 %1973
    %1983 = vrot.lane.b32.xlu0 %v990, 6
    %v1984 = vpop.permute.xlu0 %1983
    %1985 = vrot.lane.b32.xlu0 %v1262, 6
    %v1986 = vpop.permute.xlu0 %1985
    %1987 = vrot.lane.b32.xlu0 %v1534, 6
    %v1988 = vpop.permute.xlu0 %1987
    %1989 = vrot.lane.b32.xlu0 %v1806, 6
    %v1990 = vpop.permute.xlu0 %1989
    %1999 = vrot.lane.b32.xlu0 %v991, 8
    %v2000 = vpop.permute.xlu0 %1999
    %2001 = vrot.lane.b32.xlu0 %v1263, 8
    %v2002 = vpop.permute.xlu0 %2001
    %2003 = vrot.lane.b32.xlu0 %v1535, 8
    %v2004 = vpop.permute.xlu0 %2003
    %2005 = vrot.lane.b32.xlu0 %v1807, 8
    %v2006 = vpop.permute.xlu0 %2005
    %2015 = vrot.lane.b32.xlu0 %v992, 10
    %v2016 = vpop.permute.xlu0 %2015
    %2017 = vrot.lane.b32.xlu0 %v1264, 10
    %v2018 = vpop.permute.xlu0 %2017
    %2019 = vrot.lane.b32.xlu0 %v1536, 10
    %v2020 = vpop.permute.xlu0 %2019
    %2021 = vrot.lane.b32.xlu0 %v1808, 10
    %v2022 = vpop.permute.xlu0 %2021
    %2031 = vrot.lane.b32.xlu0 %v993, 12
    %v2032 = vpop.permute.xlu0 %2031
    %2033 = vrot.lane.b32.xlu0 %v1265, 12
    %v2034 = vpop.permute.xlu0 %2033
    %2035 = vrot.lane.b32.xlu0 %v1537, 12
    %v2036 = vpop.permute.xlu0 %2035
    %2037 = vrot.lane.b32.xlu0 %v1809, 12
    %v2038 = vpop.permute.xlu0 %2037
    %2047 = vrot.lane.b32.xlu0 %v994, 14
    %v2048 = vpop.permute.xlu0 %2047
    %2049 = vrot.lane.b32.xlu0 %v1266, 14
    %v2050 = vpop.permute.xlu0 %2049
    %2051 = vrot.lane.b32.xlu0 %v1538, 14
    %v2052 = vpop.permute.xlu0 %2051
    %2053 = vrot.lane.b32.xlu0 %v1810, 14
    %v2054 = vpop.permute.xlu0 %2053
    %2063 = vrot.lane.b32.xlu0 %v1123, 16
    %v2064 = vpop.permute.xlu0 %2063
    %2065 = vrot.lane.b32.xlu0 %v1395, 16
    %v2066 = vpop.permute.xlu0 %2065
    %2067 = vrot.lane.b32.xlu0 %v1667, 16
    %v2068 = vpop.permute.xlu0 %2067
    %2069 = vrot.lane.b32.xlu0 %v1939, 16
    %v2070 = vpop.permute.xlu0 %2069
    %2079 = vrot.lane.b32.xlu0 %v1124, 18
    %v2080 = vpop.permute.xlu0 %2079
    %2081 = vrot.lane.b32.xlu0 %v1396, 18
    %v2082 = vpop.permute.xlu0 %2081
    %2083 = vrot.lane.b32.xlu0 %v1668, 18
    %v2084 = vpop.permute.xlu0 %2083
    %2085 = vrot.lane.b32.xlu0 %v1940, 18
    %v2086 = vpop.permute.xlu0 %2085
    %2095 = vrot.lane.b32.xlu0 %v1125, 20
    %v2096 = vpop.permute.xlu0 %2095
    %2097 = vrot.lane.b32.xlu0 %v1397, 20
    %v2098 = vpop.permute.xlu0 %2097
    %2099 = vrot.lane.b32.xlu0 %v1669, 20
    %v2100 = vpop.permute.xlu0 %2099
    %2101 = vrot.lane.b32.xlu0 %v1941, 20
    %v2102 = vpop.permute.xlu0 %2101
    %2111 = vrot.lane.b32.xlu0 %v1126, 22
    %v2112 = vpop.permute.xlu0 %2111
    %2113 = vrot.lane.b32.xlu0 %v1398, 22
    %v2114 = vpop.permute.xlu0 %2113
    %2115 = vrot.lane.b32.xlu0 %v1670, 22
    %v2116 = vpop.permute.xlu0 %2115
    %2117 = vrot.lane.b32.xlu0 %v1942, 22
    %v2118 = vpop.permute.xlu0 %2117
    %2127 = vrot.lane.b32.xlu0 %v1127, 24
    %v2128 = vpop.permute.xlu0 %2127
    %2129 = vrot.lane.b32.xlu0 %v1399, 24
    %v2130 = vpop.permute.xlu0 %2129
    %2131 = vrot.lane.b32.xlu0 %v1671, 24
    %v2132 = vpop.permute.xlu0 %2131
    %2133 = vrot.lane.b32.xlu0 %v1943, 24
    %v2134 = vpop.permute.xlu0 %2133
    %2143 = vrot.lane.b32.xlu0 %v1128, 26
    %v2144 = vpop.permute.xlu0 %2143
    %2145 = vrot.lane.b32.xlu0 %v1400, 26
    %v2146 = vpop.permute.xlu0 %2145
    %2147 = vrot.lane.b32.xlu0 %v1672, 26
    %v2148 = vpop.permute.xlu0 %2147
    %2149 = vrot.lane.b32.xlu0 %v1944, 26
    %v2150 = vpop.permute.xlu0 %2149
    %2159 = vrot.lane.b32.xlu0 %v1129, 28
    %v2160 = vpop.permute.xlu0 %2159
    %2161 = vrot.lane.b32.xlu0 %v1401, 28
    %v2162 = vpop.permute.xlu0 %2161
    %2163 = vrot.lane.b32.xlu0 %v1673, 28
    %v2164 = vpop.permute.xlu0 %2163
    %2165 = vrot.lane.b32.xlu0 %v1945, 28
    %v2166 = vpop.permute.xlu0 %2165
    %2175 = vrot.lane.b32.xlu0 %v1130, 30
    %v2176 = vpop.permute.xlu0 %2175
    %2177 = vrot.lane.b32.xlu0 %v1402, 30
    %v2178 = vpop.permute.xlu0 %2177
    %2179 = vrot.lane.b32.xlu0 %v1674, 30
    %v2180 = vpop.permute.xlu0 %2179
    %2181 = vrot.lane.b32.xlu0 %v1946, 30
    %v2182 = vpop.permute.xlu0 %2181
    %vm2187 = vcmask 15360
    %v2188 = vsel %vm2187, %v987, %v1952
    %v2189 = vsel %vm2187, %v1259, %v1954
    %v2190 = vsel %vm2187, %v1531, %v1956
    %v2191 = vsel %vm2187, %v1803, %v1958
    %vm2192 = vcmask 31744
    %v2193 = vsel %vm2192, %v2188, %v1968
    %v2194 = vsel %vm2192, %v2189, %v1970
    %v2195 = vsel %vm2192, %v2190, %v1972
    %v2196 = vsel %vm2192, %v2191, %v1974
    %vm2197 = vcmask 48128
    %v2198 = vsel %vm2197, %v2193, %v1984
    %v2199 = vsel %vm2197, %v2194, %v1986
    %v2200 = vsel %vm2197, %v2195, %v1988
    %v2201 = vsel %vm2197, %v2196, %v1990
    %vm2202 = vcmask 64512
    %v2203 = vsel %vm2202, %v2198, %v2000
    %v2204 = vsel %vm2202, %v2199, %v2002
    %v2205 = vsel %vm2202, %v2200, %v2004
    %v2206 = vsel %vm2202, %v2201, %v2006
    %vm2207 = vcmask 80896
    %v2208 = vsel %vm2207, %v2203, %v2016
    %v2209 = vsel %vm2207, %v2204, %v2018
    %v2210 = vsel %vm2207, %v2205, %v2020
    %v2211 = vsel %vm2207, %v2206, %v2022
    %vm2212 = vcmask 97280
    %v2213 = vsel %vm2212, %v2208, %v2032
    %v2214 = vsel %vm2212, %v2209, %v2034
    %v2215 = vsel %vm2212, %v2210, %v2036
    %v2216 = vsel %vm2212, %v2211, %v2038
    %vm2217 = vcmask 113664
    %v2218 = vsel %vm2217, %v2213, %v2048
    %v2219 = vsel %vm2217, %v2214, %v2050
    %v2220 = vsel %vm2217, %v2215, %v2052
    %v2221 = vsel %vm2217, %v2216, %v2054
    %vm2222 = vcmask 130048
    %v2223 = vsel %vm2222, %v2218, %v2064
    %v2224 = vsel %vm2222, %v2219, %v2066
    %v2225 = vsel %vm2222, %v2220, %v2068
    %v2226 = vsel %vm2222, %v2221, %v2070
    %vm2227 = vcmask 146432
    %v2228 = vsel %vm2227, %v2223, %v2080
    %v2229 = vsel %vm2227, %v2224, %v2082
    %v2230 = vsel %vm2227, %v2225, %v2084
    %v2231 = vsel %vm2227, %v2226, %v2086
    %vm2232 = vcmask 162816
    %v2233 = vsel %vm2232, %v2228, %v2096
    %v2234 = vsel %vm2232, %v2229, %v2098
    %v2235 = vsel %vm2232, %v2230, %v2100
    %v2236 = vsel %vm2232, %v2231, %v2102
    %vm2237 = vcmask 179200
    %v2238 = vsel %vm2237, %v2233, %v2112
    %v2239 = vsel %vm2237, %v2234, %v2114
    %v2240 = vsel %vm2237, %v2235, %v2116
    %v2241 = vsel %vm2237, %v2236, %v2118
    %vm2242 = vcmask 195584
    %v2243 = vsel %vm2242, %v2238, %v2128
    %v2244 = vsel %vm2242, %v2239, %v2130
    %v2245 = vsel %vm2242, %v2240, %v2132
    %v2246 = vsel %vm2242, %v2241, %v2134
    %vm2247 = vcmask 211968
    %v2248 = vsel %vm2247, %v2243, %v2144
    %v2249 = vsel %vm2247, %v2244, %v2146
    %v2250 = vsel %vm2247, %v2245, %v2148
    %v2251 = vsel %vm2247, %v2246, %v2150
    %vm2252 = vcmask 228352
    %v2253 = vsel %vm2252, %v2248, %v2160
    %v2254 = vsel %vm2252, %v2249, %v2162
    %v2255 = vsel %vm2252, %v2250, %v2164
    %v2256 = vsel %vm2252, %v2251, %v2166
    %vm2257 = vcmask 244736
    %v2258 = vsel %vm2257, %v2253, %v2176
    %v2259 = vsel %vm2257, %v2254, %v2178
    %v2260 = vsel %vm2257, %v2255, %v2180
    %v2261 = vsel %vm2257, %v2256, %v2182
    %v2262 = vlaneseq
    %v2263 = vshrl.u32 %v2262, 7
    %v2264 = vsub.s32 0, %v2263
    %v2265 = vrot.slane %v78, %v2264
    %2267 = vbcast.lane.b32.xlu0 %v2265, 256
    %v2268 = vpop.permute.xlu0 %2267
    %s2270 = sor.u32 256, 8
    %2271 = vbcast.lane.b32.xlu0 %v2265, %s2270
    %v2272 = vpop.permute.xlu0 %2271
    %v2273 = vlaneseq
    %v2274 = vshrl.u32 %v2273, 7
    %v2275 = vsub.s32 1, %v2274
    %v2276 = vrot.slane %v78, %v2275
    %2278 = vbcast.lane.b32.xlu0 %v2276, 256
    %v2279 = vpop.permute.xlu0 %2278
    %s2281 = sor.u32 256, 8
    %2282 = vbcast.lane.b32.xlu0 %v2276, %s2281
    %v2283 = vpop.permute.xlu0 %2282
    %v2284 = vlaneseq
    %v2285 = vshrl.u32 %v2284, 7
    %v2286 = vsub.s32 2, %v2285
    %v2287 = vrot.slane %v78, %v2286
    %2289 = vbcast.lane.b32.xlu0 %v2287, 256
    %v2290 = vpop.permute.xlu0 %2289
    %s2292 = sor.u32 256, 8
    %2293 = vbcast.lane.b32.xlu0 %v2287, %s2292
    %v2294 = vpop.permute.xlu0 %2293
    %v2295 = vlaneseq
    %v2296 = vshrl.u32 %v2295, 7
    %v2297 = vsub.s32 3, %v2296
    %v2298 = vrot.slane %v78, %v2297
    %2300 = vbcast.lane.b32.xlu0 %v2298, 256
    %v2301 = vpop.permute.xlu0 %2300
    %s2303 = sor.u32 256, 8
    %2304 = vbcast.lane.b32.xlu0 %v2298, %s2303
    %v2305 = vpop.permute.xlu0 %2304
    %v2306 = vlaneseq
    %v2307 = vshrl.u32 %v2306, 7
    %v2308 = vsub.s32 4, %v2307
    %v2309 = vrot.slane %v78, %v2308
    %2311 = vbcast.lane.b32.xlu0 %v2309, 256
    %v2312 = vpop.permute.xlu0 %2311
    %s2314 = sor.u32 256, 8
    %2315 = vbcast.lane.b32.xlu0 %v2309, %s2314
    %v2316 = vpop.permute.xlu0 %2315
    %v2317 = vlaneseq
    %v2318 = vshrl.u32 %v2317, 7
    %v2319 = vsub.s32 5, %v2318
    %v2320 = vrot.slane %v78, %v2319
    %2322 = vbcast.lane.b32.xlu0 %v2320, 256
    %v2323 = vpop.permute.xlu0 %2322
    %s2325 = sor.u32 256, 8
    %2326 = vbcast.lane.b32.xlu0 %v2320, %s2325
    %v2327 = vpop.permute.xlu0 %2326
    %v2328 = vlaneseq
    %v2329 = vshrl.u32 %v2328, 7
    %v2330 = vsub.s32 6, %v2329
    %v2331 = vrot.slane %v78, %v2330
    %2333 = vbcast.lane.b32.xlu0 %v2331, 256
    %v2334 = vpop.permute.xlu0 %2333
    %s2336 = sor.u32 256, 8
    %2337 = vbcast.lane.b32.xlu0 %v2331, %s2336
    %v2338 = vpop.permute.xlu0 %2337
    %v2339 = vlaneseq
    %v2340 = vshrl.u32 %v2339, 7
    %v2341 = vsub.s32 7, %v2340
    %v2342 = vrot.slane %v78, %v2341
    %2344 = vbcast.lane.b32.xlu0 %v2342, 256
    %v2345 = vpop.permute.xlu0 %2344
    %s2347 = sor.u32 256, 8
    %2348 = vbcast.lane.b32.xlu0 %v2342, %s2347
    %v2349 = vpop.permute.xlu0 %2348
    %v2350 = vlaneseq
    %v2351 = vshrl.u32 %v2350, 7
    %v2352 = vsub.s32 0, %v2351
    %v2353 = vrot.slane %v79, %v2352
    %2355 = vbcast.lane.b32.xlu0 %v2353, 256
    %v2356 = vpop.permute.xlu0 %2355
    %s2358 = sor.u32 256, 8
    %2359 = vbcast.lane.b32.xlu0 %v2353, %s2358
    %v2360 = vpop.permute.xlu0 %2359
    %v2361 = vlaneseq
    %v2362 = vshrl.u32 %v2361, 7
    %v2363 = vsub.s32 1, %v2362
    %v2364 = vrot.slane %v79, %v2363
    %2366 = vbcast.lane.b32.xlu0 %v2364, 256
    %v2367 = vpop.permute.xlu0 %2366
    %s2369 = sor.u32 256, 8
    %2370 = vbcast.lane.b32.xlu0 %v2364, %s2369
    %v2371 = vpop.permute.xlu0 %2370
    %v2372 = vlaneseq
    %v2373 = vshrl.u32 %v2372, 7
    %v2374 = vsub.s32 2, %v2373
    %v2375 = vrot.slane %v79, %v2374
    %2377 = vbcast.lane.b32.xlu0 %v2375, 256
    %v2378 = vpop.permute.xlu0 %2377
    %s2380 = sor.u32 256, 8
    %2381 = vbcast.lane.b32.xlu0 %v2375, %s2380
    %v2382 = vpop.permute.xlu0 %2381
    %v2383 = vlaneseq
    %v2384 = vshrl.u32 %v2383, 7
    %v2385 = vsub.s32 3, %v2384
    %v2386 = vrot.slane %v79, %v2385
    %2388 = vbcast.lane.b32.xlu0 %v2386, 256
    %v2389 = vpop.permute.xlu0 %2388
    %s2391 = sor.u32 256, 8
    %2392 = vbcast.lane.b32.xlu0 %v2386, %s2391
    %v2393 = vpop.permute.xlu0 %2392
    %v2394 = vlaneseq
    %v2395 = vshrl.u32 %v2394, 7
    %v2396 = vsub.s32 4, %v2395
    %v2397 = vrot.slane %v79, %v2396
    %2399 = vbcast.lane.b32.xlu0 %v2397, 256
    %v2400 = vpop.permute.xlu0 %2399
    %s2402 = sor.u32 256, 8
    %2403 = vbcast.lane.b32.xlu0 %v2397, %s2402
    %v2404 = vpop.permute.xlu0 %2403
    %v2405 = vlaneseq
    %v2406 = vshrl.u32 %v2405, 7
    %v2407 = vsub.s32 5, %v2406
    %v2408 = vrot.slane %v79, %v2407
    %2410 = vbcast.lane.b32.xlu0 %v2408, 256
    %v2411 = vpop.permute.xlu0 %2410
    %s2413 = sor.u32 256, 8
    %2414 = vbcast.lane.b32.xlu0 %v2408, %s2413
    %v2415 = vpop.permute.xlu0 %2414
    %v2416 = vlaneseq
    %v2417 = vshrl.u32 %v2416, 7
    %v2418 = vsub.s32 6, %v2417
    %v2419 = vrot.slane %v79, %v2418
    %2421 = vbcast.lane.b32.xlu0 %v2419, 256
    %v2422 = vpop.permute.xlu0 %2421
    %s2424 = sor.u32 256, 8
    %2425 = vbcast.lane.b32.xlu0 %v2419, %s2424
    %v2426 = vpop.permute.xlu0 %2425
    %v2427 = vlaneseq
    %v2428 = vshrl.u32 %v2427, 7
    %v2429 = vsub.s32 7, %v2428
    %v2430 = vrot.slane %v79, %v2429
    %2432 = vbcast.lane.b32.xlu0 %v2430, 256
    %v2433 = vpop.permute.xlu0 %2432
    %s2435 = sor.u32 256, 8
    %2436 = vbcast.lane.b32.xlu0 %v2430, %s2435
    %v2437 = vpop.permute.xlu0 %2436
    %v2438 = vlaneseq
    %v2439 = vshrl.u32 %v2438, 7
    %v2440 = vsub.s32 0, %v2439
    %v2441 = vrot.slane %v80, %v2440
    %2443 = vbcast.lane.b32.xlu0 %v2441, 256
    %v2444 = vpop.permute.xlu0 %2443
    %s2446 = sor.u32 256, 8
    %2447 = vbcast.lane.b32.xlu0 %v2441, %s2446
    %v2448 = vpop.permute.xlu0 %2447
    %v2449 = vlaneseq
    %v2450 = vshrl.u32 %v2449, 7
    %v2451 = vsub.s32 1, %v2450
    %v2452 = vrot.slane %v80, %v2451
    %2454 = vbcast.lane.b32.xlu0 %v2452, 256
    %v2455 = vpop.permute.xlu0 %2454
    %s2457 = sor.u32 256, 8
    %2458 = vbcast.lane.b32.xlu0 %v2452, %s2457
    %v2459 = vpop.permute.xlu0 %2458
    %v2460 = vlaneseq
    %v2461 = vshrl.u32 %v2460, 7
    %v2462 = vsub.s32 2, %v2461
    %v2463 = vrot.slane %v80, %v2462
    %2465 = vbcast.lane.b32.xlu0 %v2463, 256
    %v2466 = vpop.permute.xlu0 %2465
    %s2468 = sor.u32 256, 8
    %2469 = vbcast.lane.b32.xlu0 %v2463, %s2468
    %v2470 = vpop.permute.xlu0 %2469
    %v2471 = vlaneseq
    %v2472 = vshrl.u32 %v2471, 7
    %v2473 = vsub.s32 3, %v2472
    %v2474 = vrot.slane %v80, %v2473
    %2476 = vbcast.lane.b32.xlu0 %v2474, 256
    %v2477 = vpop.permute.xlu0 %2476
    %s2479 = sor.u32 256, 8
    %2480 = vbcast.lane.b32.xlu0 %v2474, %s2479
    %v2481 = vpop.permute.xlu0 %2480
    %v2482 = vlaneseq
    %v2483 = vshrl.u32 %v2482, 7
    %v2484 = vsub.s32 4, %v2483
    %v2485 = vrot.slane %v80, %v2484
    %2487 = vbcast.lane.b32.xlu0 %v2485, 256
    %v2488 = vpop.permute.xlu0 %2487
    %s2490 = sor.u32 256, 8
    %2491 = vbcast.lane.b32.xlu0 %v2485, %s2490
    %v2492 = vpop.permute.xlu0 %2491
    %v2493 = vlaneseq
    %v2494 = vshrl.u32 %v2493, 7
    %v2495 = vsub.s32 5, %v2494
    %v2496 = vrot.slane %v80, %v2495
    %2498 = vbcast.lane.b32.xlu0 %v2496, 256
    %v2499 = vpop.permute.xlu0 %2498
    %s2501 = sor.u32 256, 8
    %2502 = vbcast.lane.b32.xlu0 %v2496, %s2501
    %v2503 = vpop.permute.xlu0 %2502
    %v2504 = vlaneseq
    %v2505 = vshrl.u32 %v2504, 7
    %v2506 = vsub.s32 6, %v2505
    %v2507 = vrot.slane %v80, %v2506
    %2509 = vbcast.lane.b32.xlu0 %v2507, 256
    %v2510 = vpop.permute.xlu0 %2509
    %s2512 = sor.u32 256, 8
    %2513 = vbcast.lane.b32.xlu0 %v2507, %s2512
    %v2514 = vpop.permute.xlu0 %2513
    %v2515 = vlaneseq
    %v2516 = vshrl.u32 %v2515, 7
    %v2517 = vsub.s32 7, %v2516
    %v2518 = vrot.slane %v80, %v2517
    %2520 = vbcast.lane.b32.xlu0 %v2518, 256
    %v2521 = vpop.permute.xlu0 %2520
    %s2523 = sor.u32 256, 8
    %2524 = vbcast.lane.b32.xlu0 %v2518, %s2523
    %v2525 = vpop.permute.xlu0 %2524
    %v2526 = vlaneseq
    %v2527 = vshrl.u32 %v2526, 7
    %v2528 = vsub.s32 0, %v2527
    %v2529 = vrot.slane %v81, %v2528
    %2531 = vbcast.lane.b32.xlu0 %v2529, 256
    %v2532 = vpop.permute.xlu0 %2531
    %s2534 = sor.u32 256, 8
    %2535 = vbcast.lane.b32.xlu0 %v2529, %s2534
    %v2536 = vpop.permute.xlu0 %2535
    %v2537 = vlaneseq
    %v2538 = vshrl.u32 %v2537, 7
    %v2539 = vsub.s32 1, %v2538
    %v2540 = vrot.slane %v81, %v2539
    %2542 = vbcast.lane.b32.xlu0 %v2540, 256
    %v2543 = vpop.permute.xlu0 %2542
    %s2545 = sor.u32 256, 8
    %2546 = vbcast.lane.b32.xlu0 %v2540, %s2545
    %v2547 = vpop.permute.xlu0 %2546
    %v2548 = vlaneseq
    %v2549 = vshrl.u32 %v2548, 7
    %v2550 = vsub.s32 2, %v2549
    %v2551 = vrot.slane %v81, %v2550
    %2553 = vbcast.lane.b32.xlu0 %v2551, 256
    %v2554 = vpop.permute.xlu0 %2553
    %s2556 = sor.u32 256, 8
    %2557 = vbcast.lane.b32.xlu0 %v2551, %s2556
    %v2558 = vpop.permute.xlu0 %2557
    %v2559 = vlaneseq
    %v2560 = vshrl.u32 %v2559, 7
    %v2561 = vsub.s32 3, %v2560
    %v2562 = vrot.slane %v81, %v2561
    %2564 = vbcast.lane.b32.xlu0 %v2562, 256
    %v2565 = vpop.permute.xlu0 %2564
    %s2567 = sor.u32 256, 8
    %2568 = vbcast.lane.b32.xlu0 %v2562, %s2567
    %v2569 = vpop.permute.xlu0 %2568
    %v2570 = vlaneseq
    %v2571 = vshrl.u32 %v2570, 7
    %v2572 = vsub.s32 4, %v2571
    %v2573 = vrot.slane %v81, %v2572
    %2575 = vbcast.lane.b32.xlu0 %v2573, 256
    %v2576 = vpop.permute.xlu0 %2575
    %s2578 = sor.u32 256, 8
    %2579 = vbcast.lane.b32.xlu0 %v2573, %s2578
    %v2580 = vpop.permute.xlu0 %2579
    %v2581 = vlaneseq
    %v2582 = vshrl.u32 %v2581, 7
    %v2583 = vsub.s32 5, %v2582
    %v2584 = vrot.slane %v81, %v2583
    %2586 = vbcast.lane.b32.xlu0 %v2584, 256
    %v2587 = vpop.permute.xlu0 %2586
    %s2589 = sor.u32 256, 8
    %2590 = vbcast.lane.b32.xlu0 %v2584, %s2589
    %v2591 = vpop.permute.xlu0 %2590
    %v2592 = vlaneseq
    %v2593 = vshrl.u32 %v2592, 7
    %v2594 = vsub.s32 6, %v2593
    %v2595 = vrot.slane %v81, %v2594
    %2597 = vbcast.lane.b32.xlu0 %v2595, 256
    %v2598 = vpop.permute.xlu0 %2597
    %s2600 = sor.u32 256, 8
    %2601 = vbcast.lane.b32.xlu0 %v2595, %s2600
    %v2602 = vpop.permute.xlu0 %2601
    %v2603 = vlaneseq
    %v2604 = vshrl.u32 %v2603, 7
    %v2605 = vsub.s32 7, %v2604
    %v2606 = vrot.slane %v81, %v2605
    %2608 = vbcast.lane.b32.xlu0 %v2606, 256
    %v2609 = vpop.permute.xlu0 %2608
    %s2611 = sor.u32 256, 8
    %2612 = vbcast.lane.b32.xlu0 %v2606, %s2611
    %v2613 = vpop.permute.xlu0 %2612
    %v2614 = vlaneseq
    %v2615 = vshrl.u32 %v2614, 7
    %v2616 = vsub.s32 0, %v2615
    %v2617 = vrot.slane %v86, %v2616
    %2619 = vbcast.lane.b32.xlu0 %v2617, 256
    %v2620 = vpop.permute.xlu0 %2619
    %s2622 = sor.u32 256, 8
    %2623 = vbcast.lane.b32.xlu0 %v2617, %s2622
    %v2624 = vpop.permute.xlu0 %2623
    %v2625 = vlaneseq
    %v2626 = vshrl.u32 %v2625, 7
    %v2627 = vsub.s32 1, %v2626
    %v2628 = vrot.slane %v86, %v2627
    %2630 = vbcast.lane.b32.xlu0 %v2628, 256
    %v2631 = vpop.permute.xlu0 %2630
    %s2633 = sor.u32 256, 8
    %2634 = vbcast.lane.b32.xlu0 %v2628, %s2633
    %v2635 = vpop.permute.xlu0 %2634
    %v2636 = vlaneseq
    %v2637 = vshrl.u32 %v2636, 7
    %v2638 = vsub.s32 2, %v2637
    %v2639 = vrot.slane %v86, %v2638
    %2641 = vbcast.lane.b32.xlu0 %v2639, 256
    %v2642 = vpop.permute.xlu0 %2641
    %s2644 = sor.u32 256, 8
    %2645 = vbcast.lane.b32.xlu0 %v2639, %s2644
    %v2646 = vpop.permute.xlu0 %2645
    %v2647 = vlaneseq
    %v2648 = vshrl.u32 %v2647, 7
    %v2649 = vsub.s32 3, %v2648
    %v2650 = vrot.slane %v86, %v2649
    %2652 = vbcast.lane.b32.xlu0 %v2650, 256
    %v2653 = vpop.permute.xlu0 %2652
    %s2655 = sor.u32 256, 8
    %2656 = vbcast.lane.b32.xlu0 %v2650, %s2655
    %v2657 = vpop.permute.xlu0 %2656
    %v2658 = vlaneseq
    %v2659 = vshrl.u32 %v2658, 7
    %v2660 = vsub.s32 4, %v2659
    %v2661 = vrot.slane %v86, %v2660
    %2663 = vbcast.lane.b32.xlu0 %v2661, 256
    %v2664 = vpop.permute.xlu0 %2663
    %s2666 = sor.u32 256, 8
    %2667 = vbcast.lane.b32.xlu0 %v2661, %s2666
    %v2668 = vpop.permute.xlu0 %2667
    %v2669 = vlaneseq
    %v2670 = vshrl.u32 %v2669, 7
    %v2671 = vsub.s32 5, %v2670
    %v2672 = vrot.slane %v86, %v2671
    %2674 = vbcast.lane.b32.xlu0 %v2672, 256
    %v2675 = vpop.permute.xlu0 %2674
    %s2677 = sor.u32 256, 8
    %2678 = vbcast.lane.b32.xlu0 %v2672, %s2677
    %v2679 = vpop.permute.xlu0 %2678
    %v2680 = vlaneseq
    %v2681 = vshrl.u32 %v2680, 7
    %v2682 = vsub.s32 6, %v2681
    %v2683 = vrot.slane %v86, %v2682
    %2685 = vbcast.lane.b32.xlu0 %v2683, 256
    %v2686 = vpop.permute.xlu0 %2685
    %s2688 = sor.u32 256, 8
    %2689 = vbcast.lane.b32.xlu0 %v2683, %s2688
    %v2690 = vpop.permute.xlu0 %2689
    %v2691 = vlaneseq
    %v2692 = vshrl.u32 %v2691, 7
    %v2693 = vsub.s32 7, %v2692
    %v2694 = vrot.slane %v86, %v2693
    %2696 = vbcast.lane.b32.xlu0 %v2694, 256
    %v2697 = vpop.permute.xlu0 %2696
    %s2699 = sor.u32 256, 8
    %2700 = vbcast.lane.b32.xlu0 %v2694, %s2699
    %v2701 = vpop.permute.xlu0 %2700
    %v2702 = vlaneseq
    %v2703 = vshrl.u32 %v2702, 7
    %v2704 = vsub.s32 0, %v2703
    %v2705 = vrot.slane %v87, %v2704
    %2707 = vbcast.lane.b32.xlu0 %v2705, 256
    %v2708 = vpop.permute.xlu0 %2707
    %s2710 = sor.u32 256, 8
    %2711 = vbcast.lane.b32.xlu0 %v2705, %s2710
    %v2712 = vpop.permute.xlu0 %2711
    %v2713 = vlaneseq
    %v2714 = vshrl.u32 %v2713, 7
    %v2715 = vsub.s32 1, %v2714
    %v2716 = vrot.slane %v87, %v2715
    %2718 = vbcast.lane.b32.xlu0 %v2716, 256
    %v2719 = vpop.permute.xlu0 %2718
    %s2721 = sor.u32 256, 8
    %2722 = vbcast.lane.b32.xlu0 %v2716, %s2721
    %v2723 = vpop.permute.xlu0 %2722
    %v2724 = vlaneseq
    %v2725 = vshrl.u32 %v2724, 7
    %v2726 = vsub.s32 2, %v2725
    %v2727 = vrot.slane %v87, %v2726
    %2729 = vbcast.lane.b32.xlu0 %v2727, 256
    %v2730 = vpop.permute.xlu0 %2729
    %s2732 = sor.u32 256, 8
    %2733 = vbcast.lane.b32.xlu0 %v2727, %s2732
    %v2734 = vpop.permute.xlu0 %2733
    %v2735 = vlaneseq
    %v2736 = vshrl.u32 %v2735, 7
    %v2737 = vsub.s32 3, %v2736
    %v2738 = vrot.slane %v87, %v2737
    %2740 = vbcast.lane.b32.xlu0 %v2738, 256
    %v2741 = vpop.permute.xlu0 %2740
    %s2743 = sor.u32 256, 8
    %2744 = vbcast.lane.b32.xlu0 %v2738, %s2743
    %v2745 = vpop.permute.xlu0 %2744
    %v2746 = vlaneseq
    %v2747 = vshrl.u32 %v2746, 7
    %v2748 = vsub.s32 4, %v2747
    %v2749 = vrot.slane %v87, %v2748
    %2751 = vbcast.lane.b32.xlu0 %v2749, 256
    %v2752 = vpop.permute.xlu0 %2751
    %s2754 = sor.u32 256, 8
    %2755 = vbcast.lane.b32.xlu0 %v2749, %s2754
    %v2756 = vpop.permute.xlu0 %2755
    %v2757 = vlaneseq
    %v2758 = vshrl.u32 %v2757, 7
    %v2759 = vsub.s32 5, %v2758
    %v2760 = vrot.slane %v87, %v2759
    %2762 = vbcast.lane.b32.xlu0 %v2760, 256
    %v2763 = vpop.permute.xlu0 %2762
    %s2765 = sor.u32 256, 8
    %2766 = vbcast.lane.b32.xlu0 %v2760, %s2765
    %v2767 = vpop.permute.xlu0 %2766
    %v2768 = vlaneseq
    %v2769 = vshrl.u32 %v2768, 7
    %v2770 = vsub.s32 6, %v2769
    %v2771 = vrot.slane %v87, %v2770
    %2773 = vbcast.lane.b32.xlu0 %v2771, 256
    %v2774 = vpop.permute.xlu0 %2773
    %s2776 = sor.u32 256, 8
    %2777 = vbcast.lane.b32.xlu0 %v2771, %s2776
    %v2778 = vpop.permute.xlu0 %2777
    %v2779 = vlaneseq
    %v2780 = vshrl.u32 %v2779, 7
    %v2781 = vsub.s32 7, %v2780
    %v2782 = vrot.slane %v87, %v2781
    %2784 = vbcast.lane.b32.xlu0 %v2782, 256
    %v2785 = vpop.permute.xlu0 %2784
    %s2787 = sor.u32 256, 8
    %2788 = vbcast.lane.b32.xlu0 %v2782, %s2787
    %v2789 = vpop.permute.xlu0 %2788
    %v2790 = vlaneseq
    %v2791 = vshrl.u32 %v2790, 7
    %v2792 = vsub.s32 0, %v2791
    %v2793 = vrot.slane %v88, %v2792
    %2795 = vbcast.lane.b32.xlu0 %v2793, 256
    %v2796 = vpop.permute.xlu0 %2795
    %s2798 = sor.u32 256, 8
    %2799 = vbcast.lane.b32.xlu0 %v2793, %s2798
    %v2800 = vpop.permute.xlu0 %2799
    %v2801 = vlaneseq
    %v2802 = vshrl.u32 %v2801, 7
    %v2803 = vsub.s32 1, %v2802
    %v2804 = vrot.slane %v88, %v2803
    %2806 = vbcast.lane.b32.xlu0 %v2804, 256
    %v2807 = vpop.permute.xlu0 %2806
    %s2809 = sor.u32 256, 8
    %2810 = vbcast.lane.b32.xlu0 %v2804, %s2809
    %v2811 = vpop.permute.xlu0 %2810
    %v2812 = vlaneseq
    %v2813 = vshrl.u32 %v2812, 7
    %v2814 = vsub.s32 2, %v2813
    %v2815 = vrot.slane %v88, %v2814
    %2817 = vbcast.lane.b32.xlu0 %v2815, 256
    %v2818 = vpop.permute.xlu0 %2817
    %s2820 = sor.u32 256, 8
    %2821 = vbcast.lane.b32.xlu0 %v2815, %s2820
    %v2822 = vpop.permute.xlu0 %2821
    %v2823 = vlaneseq
    %v2824 = vshrl.u32 %v2823, 7
    %v2825 = vsub.s32 3, %v2824
    %v2826 = vrot.slane %v88, %v2825
    %2828 = vbcast.lane.b32.xlu0 %v2826, 256
    %v2829 = vpop.permute.xlu0 %2828
    %s2831 = sor.u32 256, 8
    %2832 = vbcast.lane.b32.xlu0 %v2826, %s2831
    %v2833 = vpop.permute.xlu0 %2832
    %v2834 = vlaneseq
    %v2835 = vshrl.u32 %v2834, 7
    %v2836 = vsub.s32 4, %v2835
    %v2837 = vrot.slane %v88, %v2836
    %2839 = vbcast.lane.b32.xlu0 %v2837, 256
    %v2840 = vpop.permute.xlu0 %2839
    %s2842 = sor.u32 256, 8
    %2843 = vbcast.lane.b32.xlu0 %v2837, %s2842
    %v2844 = vpop.permute.xlu0 %2843
    %v2845 = vlaneseq
    %v2846 = vshrl.u32 %v2845, 7
    %v2847 = vsub.s32 5, %v2846
    %v2848 = vrot.slane %v88, %v2847
    %2850 = vbcast.lane.b32.xlu0 %v2848, 256
    %v2851 = vpop.permute.xlu0 %2850
    %s2853 = sor.u32 256, 8
    %2854 = vbcast.lane.b32.xlu0 %v2848, %s2853
    %v2855 = vpop.permute.xlu0 %2854
    %v2856 = vlaneseq
    %v2857 = vshrl.u32 %v2856, 7
    %v2858 = vsub.s32 6, %v2857
    %v2859 = vrot.slane %v88, %v2858
    %2861 = vbcast.lane.b32.xlu0 %v2859, 256
    %v2862 = vpop.permute.xlu0 %2861
    %s2864 = sor.u32 256, 8
    %2865 = vbcast.lane.b32.xlu0 %v2859, %s2864
    %v2866 = vpop.permute.xlu0 %2865
    %v2867 = vlaneseq
    %v2868 = vshrl.u32 %v2867, 7
    %v2869 = vsub.s32 7, %v2868
    %v2870 = vrot.slane %v88, %v2869
    %2872 = vbcast.lane.b32.xlu0 %v2870, 256
    %v2873 = vpop.permute.xlu0 %2872
    %s2875 = sor.u32 256, 8
    %2876 = vbcast.lane.b32.xlu0 %v2870, %s2875
    %v2877 = vpop.permute.xlu0 %2876
    %v2878 = vlaneseq
    %v2879 = vshrl.u32 %v2878, 7
    %v2880 = vsub.s32 0, %v2879
    %v2881 = vrot.slane %v89, %v2880
    %2883 = vbcast.lane.b32.xlu0 %v2881, 256
    %v2884 = vpop.permute.xlu0 %2883
    %s2886 = sor.u32 256, 8
    %2887 = vbcast.lane.b32.xlu0 %v2881, %s2886
    %v2888 = vpop.permute.xlu0 %2887
    %v2889 = vlaneseq
    %v2890 = vshrl.u32 %v2889, 7
    %v2891 = vsub.s32 1, %v2890
    %v2892 = vrot.slane %v89, %v2891
    %2894 = vbcast.lane.b32.xlu0 %v2892, 256
    %v2895 = vpop.permute.xlu0 %2894
    %s2897 = sor.u32 256, 8
    %2898 = vbcast.lane.b32.xlu0 %v2892, %s2897
    %v2899 = vpop.permute.xlu0 %2898
    %v2900 = vlaneseq
    %v2901 = vshrl.u32 %v2900, 7
    %v2902 = vsub.s32 2, %v2901
    %v2903 = vrot.slane %v89, %v2902
    %2905 = vbcast.lane.b32.xlu0 %v2903, 256
    %v2906 = vpop.permute.xlu0 %2905
    %s2908 = sor.u32 256, 8
    %2909 = vbcast.lane.b32.xlu0 %v2903, %s2908
    %v2910 = vpop.permute.xlu0 %2909
    %v2911 = vlaneseq
    %v2912 = vshrl.u32 %v2911, 7
    %v2913 = vsub.s32 3, %v2912
    %v2914 = vrot.slane %v89, %v2913
    %2916 = vbcast.lane.b32.xlu0 %v2914, 256
    %v2917 = vpop.permute.xlu0 %2916
    %s2919 = sor.u32 256, 8
    %2920 = vbcast.lane.b32.xlu0 %v2914, %s2919
    %v2921 = vpop.permute.xlu0 %2920
    %v2922 = vlaneseq
    %v2923 = vshrl.u32 %v2922, 7
    %v2924 = vsub.s32 4, %v2923
    %v2925 = vrot.slane %v89, %v2924
    %2927 = vbcast.lane.b32.xlu0 %v2925, 256
    %v2928 = vpop.permute.xlu0 %2927
    %s2930 = sor.u32 256, 8
    %2931 = vbcast.lane.b32.xlu0 %v2925, %s2930
    %v2932 = vpop.permute.xlu0 %2931
    %v2933 = vlaneseq
    %v2934 = vshrl.u32 %v2933, 7
    %v2935 = vsub.s32 5, %v2934
    %v2936 = vrot.slane %v89, %v2935
    %2938 = vbcast.lane.b32.xlu0 %v2936, 256
    %v2939 = vpop.permute.xlu0 %2938
    %s2941 = sor.u32 256, 8
    %2942 = vbcast.lane.b32.xlu0 %v2936, %s2941
    %v2943 = vpop.permute.xlu0 %2942
    %v2944 = vlaneseq
    %v2945 = vshrl.u32 %v2944, 7
    %v2946 = vsub.s32 6, %v2945
    %v2947 = vrot.slane %v89, %v2946
    %2949 = vbcast.lane.b32.xlu0 %v2947, 256
    %v2950 = vpop.permute.xlu0 %2949
    %s2952 = sor.u32 256, 8
    %2953 = vbcast.lane.b32.xlu0 %v2947, %s2952
    %v2954 = vpop.permute.xlu0 %2953
    %v2955 = vlaneseq
    %v2956 = vshrl.u32 %v2955, 7
    %v2957 = vsub.s32 7, %v2956
    %v2958 = vrot.slane %v89, %v2957
    %2960 = vbcast.lane.b32.xlu0 %v2958, 256
    %v2961 = vpop.permute.xlu0 %2960
    %s2963 = sor.u32 256, 8
    %2964 = vbcast.lane.b32.xlu0 %v2958, %s2963
    %v2965 = vpop.permute.xlu0 %2964
    %v2966 = vsel %vm794, %v2268, %v2620
    %v2967 = vsel %vm794, %v2272, %v2624
    %v2968 = vsel %vm794, %v2279, %v2631
    %v2969 = vsel %vm794, %v2283, %v2635
    %v2970 = vsel %vm794, %v2290, %v2642
    %v2971 = vsel %vm794, %v2294, %v2646
    %v2972 = vsel %vm794, %v2301, %v2653
    %v2973 = vsel %vm794, %v2305, %v2657
    %v2974 = vsel %vm794, %v2312, %v2664
    %v2975 = vsel %vm794, %v2316, %v2668
    %v2976 = vsel %vm794, %v2323, %v2675
    %v2977 = vsel %vm794, %v2327, %v2679
    %v2978 = vsel %vm794, %v2334, %v2686
    %v2979 = vsel %vm794, %v2338, %v2690
    %v2980 = vsel %vm794, %v2345, %v2697
    %v2981 = vsel %vm794, %v2349, %v2701
    %v2982 = vsel %vm794, %v2356, %v2708
    %v2983 = vsel %vm794, %v2360, %v2712
    %v2984 = vsel %vm794, %v2367, %v2719
    %v2985 = vsel %vm794, %v2371, %v2723
    %v2986 = vsel %vm794, %v2378, %v2730
    %v2987 = vsel %vm794, %v2382, %v2734
    %v2988 = vsel %vm794, %v2389, %v2741
    %v2989 = vsel %vm794, %v2393, %v2745
    %v2990 = vsel %vm794, %v2400, %v2752
    %v2991 = vsel %vm794, %v2404, %v2756
    %v2992 = vsel %vm794, %v2411, %v2763
    %v2993 = vsel %vm794, %v2415, %v2767
    %v2994 = vsel %vm794, %v2422, %v2774
    %v2995 = vsel %vm794, %v2426, %v2778
    %v2996 = vsel %vm794, %v2433, %v2785
    %v2997 = vsel %vm794, %v2437, %v2789
    %v2998 = vsel %vm794, %v2444, %v2796
    %v2999 = vsel %vm794, %v2448, %v2800
    %v3000 = vsel %vm794, %v2455, %v2807
    %v3001 = vsel %vm794, %v2459, %v2811
    %v3002 = vsel %vm794, %v2466, %v2818
    %v3003 = vsel %vm794, %v2470, %v2822
    %v3004 = vsel %vm794, %v2477, %v2829
    %v3005 = vsel %vm794, %v2481, %v2833
    %v3006 = vsel %vm794, %v2488, %v2840
    %v3007 = vsel %vm794, %v2492, %v2844
    %v3008 = vsel %vm794, %v2499, %v2851
    %v3009 = vsel %vm794, %v2503, %v2855
    %v3010 = vsel %vm794, %v2510, %v2862
    %v3011 = vsel %vm794, %v2514, %v2866
    %v3012 = vsel %vm794, %v2521, %v2873
    %v3013 = vsel %vm794, %v2525, %v2877
    %v3014 = vsel %vm794, %v2532, %v2884
    %v3015 = vsel %vm794, %v2536, %v2888
    %v3016 = vsel %vm794, %v2543, %v2895
    %v3017 = vsel %vm794, %v2547, %v2899
    %v3018 = vsel %vm794, %v2554, %v2906
    %v3019 = vsel %vm794, %v2558, %v2910
    %v3020 = vsel %vm794, %v2565, %v2917
    %v3021 = vsel %vm794, %v2569, %v2921
    %v3022 = vsel %vm794, %v2576, %v2928
    %v3023 = vsel %vm794, %v2580, %v2932
    %v3024 = vsel %vm794, %v2587, %v2939
    %v3025 = vsel %vm794, %v2591, %v2943
    %v3026 = vsel %vm794, %v2598, %v2950
    %v3027 = vsel %vm794, %v2602, %v2954
    %v3028 = vsel %vm794, %v2609, %v2961
    %v3029 = vsel %vm794, %v2613, %v2965
    %v3030 = vcombine.low %v2966, %v2970
    %v3031 = vcombine.high %v2966, %v2970
    %v3033 = vunpack.c.l.s4 1983009808
    %v3034 = vunpack.c.0.s8 %v3033
    %v3035 = vlaneseq
    %v3036 = vshrl.u32 %v3035, 7
    %v3037 = vsub.s32 %v3034, %v3036
    %v3038 = vrot.slane %v3030, %v3037
    %v3040 = vunpack.c.l.s4 1983009808
    %v3041 = vunpack.c.0.s8 %v3040
    %v3042 = vlaneseq
    %v3043 = vshrl.u32 %v3042, 7
    %v3044 = vsub.s32 %v3041, %v3043
    %v3045 = vrot.slane %v3031, %v3044
    %v3046 = vcombine.low %v2968, %v2972
    %v3047 = vcombine.high %v2968, %v2972
    %v3049 = vunpack.c.l.s4 1983009808
    %v3050 = vunpack.c.0.s8 %v3049
    %v3051 = vlaneseq
    %v3052 = vshrl.u32 %v3051, 7
    %v3053 = vsub.s32 %v3050, %v3052
    %v3054 = vrot.slane %v3046, %v3053
    %v3056 = vunpack.c.l.s4 1983009808
    %v3057 = vunpack.c.0.s8 %v3056
    %v3058 = vlaneseq
    %v3059 = vshrl.u32 %v3058, 7
    %v3060 = vsub.s32 %v3057, %v3059
    %v3061 = vrot.slane %v3047, %v3060
    %v3062 = vcombine.low %v2974, %v2978
    %v3063 = vcombine.high %v2974, %v2978
    %v3065 = vunpack.c.l.s4 1983009808
    %v3066 = vunpack.c.0.s8 %v3065
    %v3067 = vlaneseq
    %v3068 = vshrl.u32 %v3067, 7
    %v3069 = vsub.s32 %v3066, %v3068
    %v3070 = vrot.slane %v3062, %v3069
    %v3072 = vunpack.c.l.s4 1983009808
    %v3073 = vunpack.c.0.s8 %v3072
    %v3074 = vlaneseq
    %v3075 = vshrl.u32 %v3074, 7
    %v3076 = vsub.s32 %v3073, %v3075
    %v3077 = vrot.slane %v3063, %v3076
    %v3078 = vcombine.low %v2976, %v2980
    %v3079 = vcombine.high %v2976, %v2980
    %v3081 = vunpack.c.l.s4 1983009808
    %v3082 = vunpack.c.0.s8 %v3081
    %v3083 = vlaneseq
    %v3084 = vshrl.u32 %v3083, 7
    %v3085 = vsub.s32 %v3082, %v3084
    %v3086 = vrot.slane %v3078, %v3085
    %v3088 = vunpack.c.l.s4 1983009808
    %v3089 = vunpack.c.0.s8 %v3088
    %v3090 = vlaneseq
    %v3091 = vshrl.u32 %v3090, 7
    %v3092 = vsub.s32 %v3089, %v3091
    %v3093 = vrot.slane %v3079, %v3092
    %v3094 = vcombine.low %v3038, %v3054
    %v3095 = vcombine.high %v3038, %v3054
    %v3097 = vunpack.c.l.s4 1934713408
    %v3098 = vunpack.c.0.s8 %v3097
    %v3099 = vlaneseq
    %v3100 = vshrl.u32 %v3099, 7
    %v3101 = vsub.s32 %v3098, %v3100
    %v3102 = vrot.slane %v3094, %v3101
    %v3104 = vunpack.c.l.s4 1934713408
    %v3105 = vunpack.c.0.s8 %v3104
    %v3106 = vlaneseq
    %v3107 = vshrl.u32 %v3106, 7
    %v3108 = vsub.s32 %v3105, %v3107
    %v3109 = vrot.slane %v3095, %v3108
    %v3110 = vcombine.low %v3045, %v3061
    %v3111 = vcombine.high %v3045, %v3061
    %v3113 = vunpack.c.l.s4 1934713408
    %v3114 = vunpack.c.0.s8 %v3113
    %v3115 = vlaneseq
    %v3116 = vshrl.u32 %v3115, 7
    %v3117 = vsub.s32 %v3114, %v3116
    %v3118 = vrot.slane %v3110, %v3117
    %v3120 = vunpack.c.l.s4 1934713408
    %v3121 = vunpack.c.0.s8 %v3120
    %v3122 = vlaneseq
    %v3123 = vshrl.u32 %v3122, 7
    %v3124 = vsub.s32 %v3121, %v3123
    %v3125 = vrot.slane %v3111, %v3124
    %v3126 = vcombine.low %v3070, %v3086
    %v3127 = vcombine.high %v3070, %v3086
    %v3129 = vunpack.c.l.s4 1934713408
    %v3130 = vunpack.c.0.s8 %v3129
    %v3131 = vlaneseq
    %v3132 = vshrl.u32 %v3131, 7
    %v3133 = vsub.s32 %v3130, %v3132
    %v3134 = vrot.slane %v3126, %v3133
    %v3136 = vunpack.c.l.s4 1934713408
    %v3137 = vunpack.c.0.s8 %v3136
    %v3138 = vlaneseq
    %v3139 = vshrl.u32 %v3138, 7
    %v3140 = vsub.s32 %v3137, %v3139
    %v3141 = vrot.slane %v3127, %v3140
    %v3142 = vcombine.low %v3077, %v3093
    %v3143 = vcombine.high %v3077, %v3093
    %v3145 = vunpack.c.l.s4 1934713408
    %v3146 = vunpack.c.0.s8 %v3145
    %v3147 = vlaneseq
    %v3148 = vshrl.u32 %v3147, 7
    %v3149 = vsub.s32 %v3146, %v3148
    %v3150 = vrot.slane %v3142, %v3149
    %v3152 = vunpack.c.l.s4 1934713408
    %v3153 = vunpack.c.0.s8 %v3152
    %v3154 = vlaneseq
    %v3155 = vshrl.u32 %v3154, 7
    %v3156 = vsub.s32 %v3153, %v3155
    %v3157 = vrot.slane %v3143, %v3156
    %v3158 = vcombine.low %v3102, %v3134
    %v3159 = vcombine.high %v3102, %v3134
    %v3160 = vcombine.low %v3109, %v3141
    %v3161 = vcombine.high %v3109, %v3141
    %v3162 = vcombine.low %v3118, %v3150
    %v3163 = vcombine.high %v3118, %v3150
    %v3164 = vcombine.low %v3125, %v3157
    %v3165 = vcombine.high %v3125, %v3157
    %v3166 = vcombine.low %v2967, %v2971
    %v3167 = vcombine.high %v2967, %v2971
    %v3169 = vunpack.c.l.s4 1983009808
    %v3170 = vunpack.c.0.s8 %v3169
    %v3171 = vlaneseq
    %v3172 = vshrl.u32 %v3171, 7
    %v3173 = vsub.s32 %v3170, %v3172
    %v3174 = vrot.slane %v3166, %v3173
    %v3176 = vunpack.c.l.s4 1983009808
    %v3177 = vunpack.c.0.s8 %v3176
    %v3178 = vlaneseq
    %v3179 = vshrl.u32 %v3178, 7
    %v3180 = vsub.s32 %v3177, %v3179
    %v3181 = vrot.slane %v3167, %v3180
    %v3182 = vcombine.low %v2969, %v2973
    %v3183 = vcombine.high %v2969, %v2973
    %v3185 = vunpack.c.l.s4 1983009808
    %v3186 = vunpack.c.0.s8 %v3185
    %v3187 = vlaneseq
    %v3188 = vshrl.u32 %v3187, 7
    %v3189 = vsub.s32 %v3186, %v3188
    %v3190 = vrot.slane %v3182, %v3189
    %v3192 = vunpack.c.l.s4 1983009808
    %v3193 = vunpack.c.0.s8 %v3192
    %v3194 = vlaneseq
    %v3195 = vshrl.u32 %v3194, 7
    %v3196 = vsub.s32 %v3193, %v3195
    %v3197 = vrot.slane %v3183, %v3196
    %v3198 = vcombine.low %v2975, %v2979
    %v3199 = vcombine.high %v2975, %v2979
    %v3201 = vunpack.c.l.s4 1983009808
    %v3202 = vunpack.c.0.s8 %v3201
    %v3203 = vlaneseq
    %v3204 = vshrl.u32 %v3203, 7
    %v3205 = vsub.s32 %v3202, %v3204
    %v3206 = vrot.slane %v3198, %v3205
    %v3208 = vunpack.c.l.s4 1983009808
    %v3209 = vunpack.c.0.s8 %v3208
    %v3210 = vlaneseq
    %v3211 = vshrl.u32 %v3210, 7
    %v3212 = vsub.s32 %v3209, %v3211
    %v3213 = vrot.slane %v3199, %v3212
    %v3214 = vcombine.low %v2977, %v2981
    %v3215 = vcombine.high %v2977, %v2981
    %v3217 = vunpack.c.l.s4 1983009808
    %v3218 = vunpack.c.0.s8 %v3217
    %v3219 = vlaneseq
    %v3220 = vshrl.u32 %v3219, 7
    %v3221 = vsub.s32 %v3218, %v3220
    %v3222 = vrot.slane %v3214, %v3221
    %v3224 = vunpack.c.l.s4 1983009808
    %v3225 = vunpack.c.0.s8 %v3224
    %v3226 = vlaneseq
    %v3227 = vshrl.u32 %v3226, 7
    %v3228 = vsub.s32 %v3225, %v3227
    %v3229 = vrot.slane %v3215, %v3228
    %v3230 = vcombine.low %v3174, %v3190
    %v3231 = vcombine.high %v3174, %v3190
    %v3233 = vunpack.c.l.s4 1934713408
    %v3234 = vunpack.c.0.s8 %v3233
    %v3235 = vlaneseq
    %v3236 = vshrl.u32 %v3235, 7
    %v3237 = vsub.s32 %v3234, %v3236
    %v3238 = vrot.slane %v3230, %v3237
    %v3240 = vunpack.c.l.s4 1934713408
    %v3241 = vunpack.c.0.s8 %v3240
    %v3242 = vlaneseq
    %v3243 = vshrl.u32 %v3242, 7
    %v3244 = vsub.s32 %v3241, %v3243
    %v3245 = vrot.slane %v3231, %v3244
    %v3246 = vcombine.low %v3181, %v3197
    %v3247 = vcombine.high %v3181, %v3197
    %v3249 = vunpack.c.l.s4 1934713408
    %v3250 = vunpack.c.0.s8 %v3249
    %v3251 = vlaneseq
    %v3252 = vshrl.u32 %v3251, 7
    %v3253 = vsub.s32 %v3250, %v3252
    %v3254 = vrot.slane %v3246, %v3253
    %v3256 = vunpack.c.l.s4 1934713408
    %v3257 = vunpack.c.0.s8 %v3256
    %v3258 = vlaneseq
    %v3259 = vshrl.u32 %v3258, 7
    %v3260 = vsub.s32 %v3257, %v3259
    %v3261 = vrot.slane %v3247, %v3260
    %v3262 = vcombine.low %v3206, %v3222
    %v3263 = vcombine.high %v3206, %v3222
    %v3265 = vunpack.c.l.s4 1934713408
    %v3266 = vunpack.c.0.s8 %v3265
    %v3267 = vlaneseq
    %v3268 = vshrl.u32 %v3267, 7
    %v3269 = vsub.s32 %v3266, %v3268
    %v3270 = vrot.slane %v3262, %v3269
    %v3272 = vunpack.c.l.s4 1934713408
    %v3273 = vunpack.c.0.s8 %v3272
    %v3274 = vlaneseq
    %v3275 = vshrl.u32 %v3274, 7
    %v3276 = vsub.s32 %v3273, %v3275
    %v3277 = vrot.slane %v3263, %v3276
    %v3278 = vcombine.low %v3213, %v3229
    %v3279 = vcombine.high %v3213, %v3229
    %v3281 = vunpack.c.l.s4 1934713408
    %v3282 = vunpack.c.0.s8 %v3281
    %v3283 = vlaneseq
    %v3284 = vshrl.u32 %v3283, 7
    %v3285 = vsub.s32 %v3282, %v3284
    %v3286 = vrot.slane %v3278, %v3285
    %v3288 = vunpack.c.l.s4 1934713408
    %v3289 = vunpack.c.0.s8 %v3288
    %v3290 = vlaneseq
    %v3291 = vshrl.u32 %v3290, 7
    %v3292 = vsub.s32 %v3289, %v3291
    %v3293 = vrot.slane %v3279, %v3292
    %v3294 = vcombine.low %v3238, %v3270
    %v3295 = vcombine.high %v3238, %v3270
    %v3296 = vcombine.low %v3245, %v3277
    %v3297 = vcombine.high %v3245, %v3277
    %v3298 = vcombine.low %v3254, %v3286
    %v3299 = vcombine.high %v3254, %v3286
    %v3300 = vcombine.low %v3261, %v3293
    %v3301 = vcombine.high %v3261, %v3293
    %v3302 = vcombine.low %v2982, %v2986
    %v3303 = vcombine.high %v2982, %v2986
    %v3305 = vunpack.c.l.s4 1983009808
    %v3306 = vunpack.c.0.s8 %v3305
    %v3307 = vlaneseq
    %v3308 = vshrl.u32 %v3307, 7
    %v3309 = vsub.s32 %v3306, %v3308
    %v3310 = vrot.slane %v3302, %v3309
    %v3312 = vunpack.c.l.s4 1983009808
    %v3313 = vunpack.c.0.s8 %v3312
    %v3314 = vlaneseq
    %v3315 = vshrl.u32 %v3314, 7
    %v3316 = vsub.s32 %v3313, %v3315
    %v3317 = vrot.slane %v3303, %v3316
    %v3318 = vcombine.low %v2984, %v2988
    %v3319 = vcombine.high %v2984, %v2988
    %v3321 = vunpack.c.l.s4 1983009808
    %v3322 = vunpack.c.0.s8 %v3321
    %v3323 = vlaneseq
    %v3324 = vshrl.u32 %v3323, 7
    %v3325 = vsub.s32 %v3322, %v3324
    %v3326 = vrot.slane %v3318, %v3325
    %v3328 = vunpack.c.l.s4 1983009808
    %v3329 = vunpack.c.0.s8 %v3328
    %v3330 = vlaneseq
    %v3331 = vshrl.u32 %v3330, 7
    %v3332 = vsub.s32 %v3329, %v3331
    %v3333 = vrot.slane %v3319, %v3332
    %v3334 = vcombine.low %v2990, %v2994
    %v3335 = vcombine.high %v2990, %v2994
    %v3337 = vunpack.c.l.s4 1983009808
    %v3338 = vunpack.c.0.s8 %v3337
    %v3339 = vlaneseq
    %v3340 = vshrl.u32 %v3339, 7
    %v3341 = vsub.s32 %v3338, %v3340
    %v3342 = vrot.slane %v3334, %v3341
    %v3344 = vunpack.c.l.s4 1983009808
    %v3345 = vunpack.c.0.s8 %v3344
    %v3346 = vlaneseq
    %v3347 = vshrl.u32 %v3346, 7
    %v3348 = vsub.s32 %v3345, %v3347
    %v3349 = vrot.slane %v3335, %v3348
    %v3350 = vcombine.low %v2992, %v2996
    %v3351 = vcombine.high %v2992, %v2996
    %v3353 = vunpack.c.l.s4 1983009808
    %v3354 = vunpack.c.0.s8 %v3353
    %v3355 = vlaneseq
    %v3356 = vshrl.u32 %v3355, 7
    %v3357 = vsub.s32 %v3354, %v3356
    %v3358 = vrot.slane %v3350, %v3357
    %v3360 = vunpack.c.l.s4 1983009808
    %v3361 = vunpack.c.0.s8 %v3360
    %v3362 = vlaneseq
    %v3363 = vshrl.u32 %v3362, 7
    %v3364 = vsub.s32 %v3361, %v3363
    %v3365 = vrot.slane %v3351, %v3364
    %v3366 = vcombine.low %v3310, %v3326
    %v3367 = vcombine.high %v3310, %v3326
    %v3369 = vunpack.c.l.s4 1934713408
    %v3370 = vunpack.c.0.s8 %v3369
    %v3371 = vlaneseq
    %v3372 = vshrl.u32 %v3371, 7
    %v3373 = vsub.s32 %v3370, %v3372
    %v3374 = vrot.slane %v3366, %v3373
    %v3376 = vunpack.c.l.s4 1934713408
    %v3377 = vunpack.c.0.s8 %v3376
    %v3378 = vlaneseq
    %v3379 = vshrl.u32 %v3378, 7
    %v3380 = vsub.s32 %v3377, %v3379
    %v3381 = vrot.slane %v3367, %v3380
    %v3382 = vcombine.low %v3317, %v3333
    %v3383 = vcombine.high %v3317, %v3333
    %v3385 = vunpack.c.l.s4 1934713408
    %v3386 = vunpack.c.0.s8 %v3385
    %v3387 = vlaneseq
    %v3388 = vshrl.u32 %v3387, 7
    %v3389 = vsub.s32 %v3386, %v3388
    %v3390 = vrot.slane %v3382, %v3389
    %v3392 = vunpack.c.l.s4 1934713408
    %v3393 = vunpack.c.0.s8 %v3392
    %v3394 = vlaneseq
    %v3395 = vshrl.u32 %v3394, 7
    %v3396 = vsub.s32 %v3393, %v3395
    %v3397 = vrot.slane %v3383, %v3396
    %v3398 = vcombine.low %v3342, %v3358
    %v3399 = vcombine.high %v3342, %v3358
    %v3401 = vunpack.c.l.s4 1934713408
    %v3402 = vunpack.c.0.s8 %v3401
    %v3403 = vlaneseq
    %v3404 = vshrl.u32 %v3403, 7
    %v3405 = vsub.s32 %v3402, %v3404
    %v3406 = vrot.slane %v3398, %v3405
    %v3408 = vunpack.c.l.s4 1934713408
    %v3409 = vunpack.c.0.s8 %v3408
    %v3410 = vlaneseq
    %v3411 = vshrl.u32 %v3410, 7
    %v3412 = vsub.s32 %v3409, %v3411
    %v3413 = vrot.slane %v3399, %v3412
    %v3414 = vcombine.low %v3349, %v3365
    %v3415 = vcombine.high %v3349, %v3365
    %v3417 = vunpack.c.l.s4 1934713408
    %v3418 = vunpack.c.0.s8 %v3417
    %v3419 = vlaneseq
    %v3420 = vshrl.u32 %v3419, 7
    %v3421 = vsub.s32 %v3418, %v3420
    %v3422 = vrot.slane %v3414, %v3421
    %v3424 = vunpack.c.l.s4 1934713408
    %v3425 = vunpack.c.0.s8 %v3424
    %v3426 = vlaneseq
    %v3427 = vshrl.u32 %v3426, 7
    %v3428 = vsub.s32 %v3425, %v3427
    %v3429 = vrot.slane %v3415, %v3428
    %v3430 = vcombine.low %v3374, %v3406
    %v3431 = vcombine.high %v3374, %v3406
    %v3432 = vcombine.low %v3381, %v3413
    %v3433 = vcombine.high %v3381, %v3413
    %v3434 = vcombine.low %v3390, %v3422
    %v3435 = vcombine.high %v3390, %v3422
    %v3436 = vcombine.low %v3397, %v3429
    %v3437 = vcombine.high %v3397, %v3429
    %v3438 = vcombine.low %v2983, %v2987
    %v3439 = vcombine.high %v2983, %v2987
    %v3441 = vunpack.c.l.s4 1983009808
    %v3442 = vunpack.c.0.s8 %v3441
    %v3443 = vlaneseq
    %v3444 = vshrl.u32 %v3443, 7
    %v3445 = vsub.s32 %v3442, %v3444
    %v3446 = vrot.slane %v3438, %v3445
    %v3448 = vunpack.c.l.s4 1983009808
    %v3449 = vunpack.c.0.s8 %v3448
    %v3450 = vlaneseq
    %v3451 = vshrl.u32 %v3450, 7
    %v3452 = vsub.s32 %v3449, %v3451
    %v3453 = vrot.slane %v3439, %v3452
    %v3454 = vcombine.low %v2985, %v2989
    %v3455 = vcombine.high %v2985, %v2989
    %v3457 = vunpack.c.l.s4 1983009808
    %v3458 = vunpack.c.0.s8 %v3457
    %v3459 = vlaneseq
    %v3460 = vshrl.u32 %v3459, 7
    %v3461 = vsub.s32 %v3458, %v3460
    %v3462 = vrot.slane %v3454, %v3461
    %v3464 = vunpack.c.l.s4 1983009808
    %v3465 = vunpack.c.0.s8 %v3464
    %v3466 = vlaneseq
    %v3467 = vshrl.u32 %v3466, 7
    %v3468 = vsub.s32 %v3465, %v3467
    %v3469 = vrot.slane %v3455, %v3468
    %v3470 = vcombine.low %v2991, %v2995
    %v3471 = vcombine.high %v2991, %v2995
    %v3473 = vunpack.c.l.s4 1983009808
    %v3474 = vunpack.c.0.s8 %v3473
    %v3475 = vlaneseq
    %v3476 = vshrl.u32 %v3475, 7
    %v3477 = vsub.s32 %v3474, %v3476
    %v3478 = vrot.slane %v3470, %v3477
    %v3480 = vunpack.c.l.s4 1983009808
    %v3481 = vunpack.c.0.s8 %v3480
    %v3482 = vlaneseq
    %v3483 = vshrl.u32 %v3482, 7
    %v3484 = vsub.s32 %v3481, %v3483
    %v3485 = vrot.slane %v3471, %v3484
    %v3486 = vcombine.low %v2993, %v2997
    %v3487 = vcombine.high %v2993, %v2997
    %v3489 = vunpack.c.l.s4 1983009808
    %v3490 = vunpack.c.0.s8 %v3489
    %v3491 = vlaneseq
    %v3492 = vshrl.u32 %v3491, 7
    %v3493 = vsub.s32 %v3490, %v3492
    %v3494 = vrot.slane %v3486, %v3493
    %v3496 = vunpack.c.l.s4 1983009808
    %v3497 = vunpack.c.0.s8 %v3496
    %v3498 = vlaneseq
    %v3499 = vshrl.u32 %v3498, 7
    %v3500 = vsub.s32 %v3497, %v3499
    %v3501 = vrot.slane %v3487, %v3500
    %v3502 = vcombine.low %v3446, %v3462
    %v3503 = vcombine.high %v3446, %v3462
    %v3505 = vunpack.c.l.s4 1934713408
    %v3506 = vunpack.c.0.s8 %v3505
    %v3507 = vlaneseq
    %v3508 = vshrl.u32 %v3507, 7
    %v3509 = vsub.s32 %v3506, %v3508
    %v3510 = vrot.slane %v3502, %v3509
    %v3512 = vunpack.c.l.s4 1934713408
    %v3513 = vunpack.c.0.s8 %v3512
    %v3514 = vlaneseq
    %v3515 = vshrl.u32 %v3514, 7
    %v3516 = vsub.s32 %v3513, %v3515
    %v3517 = vrot.slane %v3503, %v3516
    %v3518 = vcombine.low %v3453, %v3469
    %v3519 = vcombine.high %v3453, %v3469
    %v3521 = vunpack.c.l.s4 1934713408
    %v3522 = vunpack.c.0.s8 %v3521
    %v3523 = vlaneseq
    %v3524 = vshrl.u32 %v3523, 7
    %v3525 = vsub.s32 %v3522, %v3524
    %v3526 = vrot.slane %v3518, %v3525
    %v3528 = vunpack.c.l.s4 1934713408
    %v3529 = vunpack.c.0.s8 %v3528
    %v3530 = vlaneseq
    %v3531 = vshrl.u32 %v3530, 7
    %v3532 = vsub.s32 %v3529, %v3531
    %v3533 = vrot.slane %v3519, %v3532
    %v3534 = vcombine.low %v3478, %v3494
    %v3535 = vcombine.high %v3478, %v3494
    %v3537 = vunpack.c.l.s4 1934713408
    %v3538 = vunpack.c.0.s8 %v3537
    %v3539 = vlaneseq
    %v3540 = vshrl.u32 %v3539, 7
    %v3541 = vsub.s32 %v3538, %v3540
    %v3542 = vrot.slane %v3534, %v3541
    %v3544 = vunpack.c.l.s4 1934713408
    %v3545 = vunpack.c.0.s8 %v3544
    %v3546 = vlaneseq
    %v3547 = vshrl.u32 %v3546, 7
    %v3548 = vsub.s32 %v3545, %v3547
    %v3549 = vrot.slane %v3535, %v3548
    %v3550 = vcombine.low %v3485, %v3501
    %v3551 = vcombine.high %v3485, %v3501
    %v3553 = vunpack.c.l.s4 1934713408
    %v3554 = vunpack.c.0.s8 %v3553
    %v3555 = vlaneseq
    %v3556 = vshrl.u32 %v3555, 7
    %v3557 = vsub.s32 %v3554, %v3556
    %v3558 = vrot.slane %v3550, %v3557
    %v3560 = vunpack.c.l.s4 1934713408
    %v3561 = vunpack.c.0.s8 %v3560
    %v3562 = vlaneseq
    %v3563 = vshrl.u32 %v3562, 7
    %v3564 = vsub.s32 %v3561, %v3563
    %v3565 = vrot.slane %v3551, %v3564
    %v3566 = vcombine.low %v3510, %v3542
    %v3567 = vcombine.high %v3510, %v3542
    %v3568 = vcombine.low %v3517, %v3549
    %v3569 = vcombine.high %v3517, %v3549
    %v3570 = vcombine.low %v3526, %v3558
    %v3571 = vcombine.high %v3526, %v3558
    %v3572 = vcombine.low %v3533, %v3565
    %v3573 = vcombine.high %v3533, %v3565
    %v3574 = vcombine.low %v2998, %v3002
    %v3575 = vcombine.high %v2998, %v3002
    %v3577 = vunpack.c.l.s4 1983009808
    %v3578 = vunpack.c.0.s8 %v3577
    %v3579 = vlaneseq
    %v3580 = vshrl.u32 %v3579, 7
    %v3581 = vsub.s32 %v3578, %v3580
    %v3582 = vrot.slane %v3574, %v3581
    %v3584 = vunpack.c.l.s4 1983009808
    %v3585 = vunpack.c.0.s8 %v3584
    %v3586 = vlaneseq
    %v3587 = vshrl.u32 %v3586, 7
    %v3588 = vsub.s32 %v3585, %v3587
    %v3589 = vrot.slane %v3575, %v3588
    %v3590 = vcombine.low %v3000, %v3004
    %v3591 = vcombine.high %v3000, %v3004
    %v3593 = vunpack.c.l.s4 1983009808
    %v3594 = vunpack.c.0.s8 %v3593
    %v3595 = vlaneseq
    %v3596 = vshrl.u32 %v3595, 7
    %v3597 = vsub.s32 %v3594, %v3596
    %v3598 = vrot.slane %v3590, %v3597
    %v3600 = vunpack.c.l.s4 1983009808
    %v3601 = vunpack.c.0.s8 %v3600
    %v3602 = vlaneseq
    %v3603 = vshrl.u32 %v3602, 7
    %v3604 = vsub.s32 %v3601, %v3603
    %v3605 = vrot.slane %v3591, %v3604
    %v3606 = vcombine.low %v3006, %v3010
    %v3607 = vcombine.high %v3006, %v3010
    %v3609 = vunpack.c.l.s4 1983009808
    %v3610 = vunpack.c.0.s8 %v3609
    %v3611 = vlaneseq
    %v3612 = vshrl.u32 %v3611, 7
    %v3613 = vsub.s32 %v3610, %v3612
    %v3614 = vrot.slane %v3606, %v3613
    %v3616 = vunpack.c.l.s4 1983009808
    %v3617 = vunpack.c.0.s8 %v3616
    %v3618 = vlaneseq
    %v3619 = vshrl.u32 %v3618, 7
    %v3620 = vsub.s32 %v3617, %v3619
    %v3621 = vrot.slane %v3607, %v3620
    %v3622 = vcombine.low %v3008, %v3012
    %v3623 = vcombine.high %v3008, %v3012
    %v3625 = vunpack.c.l.s4 1983009808
    %v3626 = vunpack.c.0.s8 %v3625
    %v3627 = vlaneseq
    %v3628 = vshrl.u32 %v3627, 7
    %v3629 = vsub.s32 %v3626, %v3628
    %v3630 = vrot.slane %v3622, %v3629
    %v3632 = vunpack.c.l.s4 1983009808
    %v3633 = vunpack.c.0.s8 %v3632
    %v3634 = vlaneseq
    %v3635 = vshrl.u32 %v3634, 7
    %v3636 = vsub.s32 %v3633, %v3635
    %v3637 = vrot.slane %v3623, %v3636
    %v3638 = vcombine.low %v3582, %v3598
    %v3639 = vcombine.high %v3582, %v3598
    %v3641 = vunpack.c.l.s4 1934713408
    %v3642 = vunpack.c.0.s8 %v3641
    %v3643 = vlaneseq
    %v3644 = vshrl.u32 %v3643, 7
    %v3645 = vsub.s32 %v3642, %v3644
    %v3646 = vrot.slane %v3638, %v3645
    %v3648 = vunpack.c.l.s4 1934713408
    %v3649 = vunpack.c.0.s8 %v3648
    %v3650 = vlaneseq
    %v3651 = vshrl.u32 %v3650, 7
    %v3652 = vsub.s32 %v3649, %v3651
    %v3653 = vrot.slane %v3639, %v3652
    %v3654 = vcombine.low %v3589, %v3605
    %v3655 = vcombine.high %v3589, %v3605
    %v3657 = vunpack.c.l.s4 1934713408
    %v3658 = vunpack.c.0.s8 %v3657
    %v3659 = vlaneseq
    %v3660 = vshrl.u32 %v3659, 7
    %v3661 = vsub.s32 %v3658, %v3660
    %v3662 = vrot.slane %v3654, %v3661
    %v3664 = vunpack.c.l.s4 1934713408
    %v3665 = vunpack.c.0.s8 %v3664
    %v3666 = vlaneseq
    %v3667 = vshrl.u32 %v3666, 7
    %v3668 = vsub.s32 %v3665, %v3667
    %v3669 = vrot.slane %v3655, %v3668
    %v3670 = vcombine.low %v3614, %v3630
    %v3671 = vcombine.high %v3614, %v3630
    %v3673 = vunpack.c.l.s4 1934713408
    %v3674 = vunpack.c.0.s8 %v3673
    %v3675 = vlaneseq
    %v3676 = vshrl.u32 %v3675, 7
    %v3677 = vsub.s32 %v3674, %v3676
    %v3678 = vrot.slane %v3670, %v3677
    %v3680 = vunpack.c.l.s4 1934713408
    %v3681 = vunpack.c.0.s8 %v3680
    %v3682 = vlaneseq
    %v3683 = vshrl.u32 %v3682, 7
    %v3684 = vsub.s32 %v3681, %v3683
    %v3685 = vrot.slane %v3671, %v3684
    %v3686 = vcombine.low %v3621, %v3637
    %v3687 = vcombine.high %v3621, %v3637
    %v3689 = vunpack.c.l.s4 1934713408
    %v3690 = vunpack.c.0.s8 %v3689
    %v3691 = vlaneseq
    %v3692 = vshrl.u32 %v3691, 7
    %v3693 = vsub.s32 %v3690, %v3692
    %v3694 = vrot.slane %v3686, %v3693
    %v3696 = vunpack.c.l.s4 1934713408
    %v3697 = vunpack.c.0.s8 %v3696
    %v3698 = vlaneseq
    %v3699 = vshrl.u32 %v3698, 7
    %v3700 = vsub.s32 %v3697, %v3699
    %v3701 = vrot.slane %v3687, %v3700
    %v3702 = vcombine.low %v3646, %v3678
    %v3703 = vcombine.high %v3646, %v3678
    %v3704 = vcombine.low %v3653, %v3685
    %v3705 = vcombine.high %v3653, %v3685
    %v3706 = vcombine.low %v3662, %v3694
    %v3707 = vcombine.high %v3662, %v3694
    %v3708 = vcombine.low %v3669, %v3701
    %v3709 = vcombine.high %v3669, %v3701
    %v3710 = vcombine.low %v2999, %v3003
    %v3711 = vcombine.high %v2999, %v3003
    %v3713 = vunpack.c.l.s4 1983009808
    %v3714 = vunpack.c.0.s8 %v3713
    %v3715 = vlaneseq
    %v3716 = vshrl.u32 %v3715, 7
    %v3717 = vsub.s32 %v3714, %v3716
    %v3718 = vrot.slane %v3710, %v3717
    %v3720 = vunpack.c.l.s4 1983009808
    %v3721 = vunpack.c.0.s8 %v3720
    %v3722 = vlaneseq
    %v3723 = vshrl.u32 %v3722, 7
    %v3724 = vsub.s32 %v3721, %v3723
    %v3725 = vrot.slane %v3711, %v3724
    %v3726 = vcombine.low %v3001, %v3005
    %v3727 = vcombine.high %v3001, %v3005
    %v3729 = vunpack.c.l.s4 1983009808
    %v3730 = vunpack.c.0.s8 %v3729
    %v3731 = vlaneseq
    %v3732 = vshrl.u32 %v3731, 7
    %v3733 = vsub.s32 %v3730, %v3732
    %v3734 = vrot.slane %v3726, %v3733
    %v3736 = vunpack.c.l.s4 1983009808
    %v3737 = vunpack.c.0.s8 %v3736
    %v3738 = vlaneseq
    %v3739 = vshrl.u32 %v3738, 7
    %v3740 = vsub.s32 %v3737, %v3739
    %v3741 = vrot.slane %v3727, %v3740
    %v3742 = vcombine.low %v3007, %v3011
    %v3743 = vcombine.high %v3007, %v3011
    %v3745 = vunpack.c.l.s4 1983009808
    %v3746 = vunpack.c.0.s8 %v3745
    %v3747 = vlaneseq
    %v3748 = vshrl.u32 %v3747, 7
    %v3749 = vsub.s32 %v3746, %v3748
    %v3750 = vrot.slane %v3742, %v3749
    %v3752 = vunpack.c.l.s4 1983009808
    %v3753 = vunpack.c.0.s8 %v3752
    %v3754 = vlaneseq
    %v3755 = vshrl.u32 %v3754, 7
    %v3756 = vsub.s32 %v3753, %v3755
    %v3757 = vrot.slane %v3743, %v3756
    %v3758 = vcombine.low %v3009, %v3013
    %v3759 = vcombine.high %v3009, %v3013
    %v3761 = vunpack.c.l.s4 1983009808
    %v3762 = vunpack.c.0.s8 %v3761
    %v3763 = vlaneseq
    %v3764 = vshrl.u32 %v3763, 7
    %v3765 = vsub.s32 %v3762, %v3764
    %v3766 = vrot.slane %v3758, %v3765
    %v3768 = vunpack.c.l.s4 1983009808
    %v3769 = vunpack.c.0.s8 %v3768
    %v3770 = vlaneseq
    %v3771 = vshrl.u32 %v3770, 7
    %v3772 = vsub.s32 %v3769, %v3771
    %v3773 = vrot.slane %v3759, %v3772
    %v3774 = vcombine.low %v3718, %v3734
    %v3775 = vcombine.high %v3718, %v3734
    %v3777 = vunpack.c.l.s4 1934713408
    %v3778 = vunpack.c.0.s8 %v3777
    %v3779 = vlaneseq
    %v3780 = vshrl.u32 %v3779, 7
    %v3781 = vsub.s32 %v3778, %v3780
    %v3782 = vrot.slane %v3774, %v3781
    %v3784 = vunpack.c.l.s4 1934713408
    %v3785 = vunpack.c.0.s8 %v3784
    %v3786 = vlaneseq
    %v3787 = vshrl.u32 %v3786, 7
    %v3788 = vsub.s32 %v3785, %v3787
    %v3789 = vrot.slane %v3775, %v3788
    %v3790 = vcombine.low %v3725, %v3741
    %v3791 = vcombine.high %v3725, %v3741
    %v3793 = vunpack.c.l.s4 1934713408
    %v3794 = vunpack.c.0.s8 %v3793
    %v3795 = vlaneseq
    %v3796 = vshrl.u32 %v3795, 7
    %v3797 = vsub.s32 %v3794, %v3796
    %v3798 = vrot.slane %v3790, %v3797
    %v3800 = vunpack.c.l.s4 1934713408
    %v3801 = vunpack.c.0.s8 %v3800
    %v3802 = vlaneseq
    %v3803 = vshrl.u32 %v3802, 7
    %v3804 = vsub.s32 %v3801, %v3803
    %v3805 = vrot.slane %v3791, %v3804
    %v3806 = vcombine.low %v3750, %v3766
    %v3807 = vcombine.high %v3750, %v3766
    %v3809 = vunpack.c.l.s4 1934713408
    %v3810 = vunpack.c.0.s8 %v3809
    %v3811 = vlaneseq
    %v3812 = vshrl.u32 %v3811, 7
    %v3813 = vsub.s32 %v3810, %v3812
    %v3814 = vrot.slane %v3806, %v3813
    %v3816 = vunpack.c.l.s4 1934713408
    %v3817 = vunpack.c.0.s8 %v3816
    %v3818 = vlaneseq
    %v3819 = vshrl.u32 %v3818, 7
    %v3820 = vsub.s32 %v3817, %v3819
    %v3821 = vrot.slane %v3807, %v3820
    %v3822 = vcombine.low %v3757, %v3773
    %v3823 = vcombine.high %v3757, %v3773
    %v3825 = vunpack.c.l.s4 1934713408
    %v3826 = vunpack.c.0.s8 %v3825
    %v3827 = vlaneseq
    %v3828 = vshrl.u32 %v3827, 7
    %v3829 = vsub.s32 %v3826, %v3828
    %v3830 = vrot.slane %v3822, %v3829
    %v3832 = vunpack.c.l.s4 1934713408
    %v3833 = vunpack.c.0.s8 %v3832
    %v3834 = vlaneseq
    %v3835 = vshrl.u32 %v3834, 7
    %v3836 = vsub.s32 %v3833, %v3835
    %v3837 = vrot.slane %v3823, %v3836
    %v3838 = vcombine.low %v3782, %v3814
    %v3839 = vcombine.high %v3782, %v3814
    %v3840 = vcombine.low %v3789, %v3821
    %v3841 = vcombine.high %v3789, %v3821
    %v3842 = vcombine.low %v3798, %v3830
    %v3843 = vcombine.high %v3798, %v3830
    %v3844 = vcombine.low %v3805, %v3837
    %v3845 = vcombine.high %v3805, %v3837
    %v3846 = vcombine.low %v3014, %v3018
    %v3847 = vcombine.high %v3014, %v3018
    %v3849 = vunpack.c.l.s4 1983009808
    %v3850 = vunpack.c.0.s8 %v3849
    %v3851 = vlaneseq
    %v3852 = vshrl.u32 %v3851, 7
    %v3853 = vsub.s32 %v3850, %v3852
    %v3854 = vrot.slane %v3846, %v3853
    %v3856 = vunpack.c.l.s4 1983009808
    %v3857 = vunpack.c.0.s8 %v3856
    %v3858 = vlaneseq
    %v3859 = vshrl.u32 %v3858, 7
    %v3860 = vsub.s32 %v3857, %v3859
    %v3861 = vrot.slane %v3847, %v3860
    %v3862 = vcombine.low %v3016, %v3020
    %v3863 = vcombine.high %v3016, %v3020
    %v3865 = vunpack.c.l.s4 1983009808
    %v3866 = vunpack.c.0.s8 %v3865
    %v3867 = vlaneseq
    %v3868 = vshrl.u32 %v3867, 7
    %v3869 = vsub.s32 %v3866, %v3868
    %v3870 = vrot.slane %v3862, %v3869
    %v3872 = vunpack.c.l.s4 1983009808
    %v3873 = vunpack.c.0.s8 %v3872
    %v3874 = vlaneseq
    %v3875 = vshrl.u32 %v3874, 7
    %v3876 = vsub.s32 %v3873, %v3875
    %v3877 = vrot.slane %v3863, %v3876
    %v3878 = vcombine.low %v3022, %v3026
    %v3879 = vcombine.high %v3022, %v3026
    %v3881 = vunpack.c.l.s4 1983009808
    %v3882 = vunpack.c.0.s8 %v3881
    %v3883 = vlaneseq
    %v3884 = vshrl.u32 %v3883, 7
    %v3885 = vsub.s32 %v3882, %v3884
    %v3886 = vrot.slane %v3878, %v3885
    %v3888 = vunpack.c.l.s4 1983009808
    %v3889 = vunpack.c.0.s8 %v3888
    %v3890 = vlaneseq
    %v3891 = vshrl.u32 %v3890, 7
    %v3892 = vsub.s32 %v3889, %v3891
    %v3893 = vrot.slane %v3879, %v3892
    %v3894 = vcombine.low %v3024, %v3028
    %v3895 = vcombine.high %v3024, %v3028
    %v3897 = vunpack.c.l.s4 1983009808
    %v3898 = vunpack.c.0.s8 %v3897
    %v3899 = vlaneseq
    %v3900 = vshrl.u32 %v3899, 7
    %v3901 = vsub.s32 %v3898, %v3900
    %v3902 = vrot.slane %v3894, %v3901
    %v3904 = vunpack.c.l.s4 1983009808
    %v3905 = vunpack.c.0.s8 %v3904
    %v3906 = vlaneseq
    %v3907 = vshrl.u32 %v3906, 7
    %v3908 = vsub.s32 %v3905, %v3907
    %v3909 = vrot.slane %v3895, %v3908
    %v3910 = vcombine.low %v3854, %v3870
    %v3911 = vcombine.high %v3854, %v3870
    %v3913 = vunpack.c.l.s4 1934713408
    %v3914 = vunpack.c.0.s8 %v3913
    %v3915 = vlaneseq
    %v3916 = vshrl.u32 %v3915, 7
    %v3917 = vsub.s32 %v3914, %v3916
    %v3918 = vrot.slane %v3910, %v3917
    %v3920 = vunpack.c.l.s4 1934713408
    %v3921 = vunpack.c.0.s8 %v3920
    %v3922 = vlaneseq
    %v3923 = vshrl.u32 %v3922, 7
    %v3924 = vsub.s32 %v3921, %v3923
    %v3925 = vrot.slane %v3911, %v3924
    %v3926 = vcombine.low %v3861, %v3877
    %v3927 = vcombine.high %v3861, %v3877
    %v3929 = vunpack.c.l.s4 1934713408
    %v3930 = vunpack.c.0.s8 %v3929
    %v3931 = vlaneseq
    %v3932 = vshrl.u32 %v3931, 7
    %v3933 = vsub.s32 %v3930, %v3932
    %v3934 = vrot.slane %v3926, %v3933
    %v3936 = vunpack.c.l.s4 1934713408
    %v3937 = vunpack.c.0.s8 %v3936
    %v3938 = vlaneseq
    %v3939 = vshrl.u32 %v3938, 7
    %v3940 = vsub.s32 %v3937, %v3939
    %v3941 = vrot.slane %v3927, %v3940
    %v3942 = vcombine.low %v3886, %v3902
    %v3943 = vcombine.high %v3886, %v3902
    %v3945 = vunpack.c.l.s4 1934713408
    %v3946 = vunpack.c.0.s8 %v3945
    %v3947 = vlaneseq
    %v3948 = vshrl.u32 %v3947, 7
    %v3949 = vsub.s32 %v3946, %v3948
    %v3950 = vrot.slane %v3942, %v3949
    %v3952 = vunpack.c.l.s4 1934713408
    %v3953 = vunpack.c.0.s8 %v3952
    %v3954 = vlaneseq
    %v3955 = vshrl.u32 %v3954, 7
    %v3956 = vsub.s32 %v3953, %v3955
    %v3957 = vrot.slane %v3943, %v3956
    %v3958 = vcombine.low %v3893, %v3909
    %v3959 = vcombine.high %v3893, %v3909
    %v3961 = vunpack.c.l.s4 1934713408
    %v3962 = vunpack.c.0.s8 %v3961
    %v3963 = vlaneseq
    %v3964 = vshrl.u32 %v3963, 7
    %v3965 = vsub.s32 %v3962, %v3964
    %v3966 = vrot.slane %v3958, %v3965
    %v3968 = vunpack.c.l.s4 1934713408
    %v3969 = vunpack.c.0.s8 %v3968
    %v3970 = vlaneseq
    %v3971 = vshrl.u32 %v3970, 7
    %v3972 = vsub.s32 %v3969, %v3971
    %v3973 = vrot.slane %v3959, %v3972
    %v3974 = vcombine.low %v3918, %v3950
    %v3975 = vcombine.high %v3918, %v3950
    %v3976 = vcombine.low %v3925, %v3957
    %v3977 = vcombine.high %v3925, %v3957
    %v3978 = vcombine.low %v3934, %v3966
    %v3979 = vcombine.high %v3934, %v3966
    %v3980 = vcombine.low %v3941, %v3973
    %v3981 = vcombine.high %v3941, %v3973
    %v3982 = vcombine.low %v3015, %v3019
    %v3983 = vcombine.high %v3015, %v3019
    %v3985 = vunpack.c.l.s4 1983009808
    %v3986 = vunpack.c.0.s8 %v3985
    %v3987 = vlaneseq
    %v3988 = vshrl.u32 %v3987, 7
    %v3989 = vsub.s32 %v3986, %v3988
    %v3990 = vrot.slane %v3982, %v3989
    %v3992 = vunpack.c.l.s4 1983009808
    %v3993 = vunpack.c.0.s8 %v3992
    %v3994 = vlaneseq
    %v3995 = vshrl.u32 %v3994, 7
    %v3996 = vsub.s32 %v3993, %v3995
    %v3997 = vrot.slane %v3983, %v3996
    %v3998 = vcombine.low %v3017, %v3021
    %v3999 = vcombine.high %v3017, %v3021
    %v4001 = vunpack.c.l.s4 1983009808
    %v4002 = vunpack.c.0.s8 %v4001
    %v4003 = vlaneseq
    %v4004 = vshrl.u32 %v4003, 7
    %v4005 = vsub.s32 %v4002, %v4004
    %v4006 = vrot.slane %v3998, %v4005
    %v4008 = vunpack.c.l.s4 1983009808
    %v4009 = vunpack.c.0.s8 %v4008
    %v4010 = vlaneseq
    %v4011 = vshrl.u32 %v4010, 7
    %v4012 = vsub.s32 %v4009, %v4011
    %v4013 = vrot.slane %v3999, %v4012
    %v4014 = vcombine.low %v3023, %v3027
    %v4015 = vcombine.high %v3023, %v3027
    %v4017 = vunpack.c.l.s4 1983009808
    %v4018 = vunpack.c.0.s8 %v4017
    %v4019 = vlaneseq
    %v4020 = vshrl.u32 %v4019, 7
    %v4021 = vsub.s32 %v4018, %v4020
    %v4022 = vrot.slane %v4014, %v4021
    %v4024 = vunpack.c.l.s4 1983009808
    %v4025 = vunpack.c.0.s8 %v4024
    %v4026 = vlaneseq
    %v4027 = vshrl.u32 %v4026, 7
    %v4028 = vsub.s32 %v4025, %v4027
    %v4029 = vrot.slane %v4015, %v4028
    %v4030 = vcombine.low %v3025, %v3029
    %v4031 = vcombine.high %v3025, %v3029
    %v4033 = vunpack.c.l.s4 1983009808
    %v4034 = vunpack.c.0.s8 %v4033
    %v4035 = vlaneseq
    %v4036 = vshrl.u32 %v4035, 7
    %v4037 = vsub.s32 %v4034, %v4036
    %v4038 = vrot.slane %v4030, %v4037
    %v4040 = vunpack.c.l.s4 1983009808
    %v4041 = vunpack.c.0.s8 %v4040
    %v4042 = vlaneseq
    %v4043 = vshrl.u32 %v4042, 7
    %v4044 = vsub.s32 %v4041, %v4043
    %v4045 = vrot.slane %v4031, %v4044
    %v4046 = vcombine.low %v3990, %v4006
    %v4047 = vcombine.high %v3990, %v4006
    %v4049 = vunpack.c.l.s4 1934713408
    %v4050 = vunpack.c.0.s8 %v4049
    %v4051 = vlaneseq
    %v4052 = vshrl.u32 %v4051, 7
    %v4053 = vsub.s32 %v4050, %v4052
    %v4054 = vrot.slane %v4046, %v4053
    %v4056 = vunpack.c.l.s4 1934713408
    %v4057 = vunpack.c.0.s8 %v4056
    %v4058 = vlaneseq
    %v4059 = vshrl.u32 %v4058, 7
    %v4060 = vsub.s32 %v4057, %v4059
    %v4061 = vrot.slane %v4047, %v4060
    %v4062 = vcombine.low %v3997, %v4013
    %v4063 = vcombine.high %v3997, %v4013
    %v4065 = vunpack.c.l.s4 1934713408
    %v4066 = vunpack.c.0.s8 %v4065
    %v4067 = vlaneseq
    %v4068 = vshrl.u32 %v4067, 7
    %v4069 = vsub.s32 %v4066, %v4068
    %v4070 = vrot.slane %v4062, %v4069
    %v4072 = vunpack.c.l.s4 1934713408
    %v4073 = vunpack.c.0.s8 %v4072
    %v4074 = vlaneseq
    %v4075 = vshrl.u32 %v4074, 7
    %v4076 = vsub.s32 %v4073, %v4075
    %v4077 = vrot.slane %v4063, %v4076
    %v4078 = vcombine.low %v4022, %v4038
    %v4079 = vcombine.high %v4022, %v4038
    %v4081 = vunpack.c.l.s4 1934713408
    %v4082 = vunpack.c.0.s8 %v4081
    %v4083 = vlaneseq
    %v4084 = vshrl.u32 %v4083, 7
    %v4085 = vsub.s32 %v4082, %v4084
    %v4086 = vrot.slane %v4078, %v4085
    %v4088 = vunpack.c.l.s4 1934713408
    %v4089 = vunpack.c.0.s8 %v4088
    %v4090 = vlaneseq
    %v4091 = vshrl.u32 %v4090, 7
    %v4092 = vsub.s32 %v4089, %v4091
    %v4093 = vrot.slane %v4079, %v4092
    %v4094 = vcombine.low %v4029, %v4045
    %v4095 = vcombine.high %v4029, %v4045
    %v4097 = vunpack.c.l.s4 1934713408
    %v4098 = vunpack.c.0.s8 %v4097
    %v4099 = vlaneseq
    %v4100 = vshrl.u32 %v4099, 7
    %v4101 = vsub.s32 %v4098, %v4100
    %v4102 = vrot.slane %v4094, %v4101
    %v4104 = vunpack.c.l.s4 1934713408
    %v4105 = vunpack.c.0.s8 %v4104
    %v4106 = vlaneseq
    %v4107 = vshrl.u32 %v4106, 7
    %v4108 = vsub.s32 %v4105, %v4107
    %v4109 = vrot.slane %v4095, %v4108
    %v4110 = vcombine.low %v4054, %v4086
    %v4111 = vcombine.high %v4054, %v4086
    %v4112 = vcombine.low %v4061, %v4093
    %v4113 = vcombine.high %v4061, %v4093
    %v4114 = vcombine.low %v4070, %v4102
    %v4115 = vcombine.high %v4070, %v4102
    %v4116 = vcombine.low %v4077, %v4109
    %v4117 = vcombine.high %v4077, %v4109
    %4122 = vrot.lane.b32.xlu0 %v3159, 2
    %v4123 = vpop.permute.xlu0 %4122
    %4124 = vrot.lane.b32.xlu0 %v3431, 2
    %v4125 = vpop.permute.xlu0 %4124
    %4126 = vrot.lane.b32.xlu0 %v3703, 2
    %v4127 = vpop.permute.xlu0 %4126
    %4128 = vrot.lane.b32.xlu0 %v3975, 2
    %v4129 = vpop.permute.xlu0 %4128
    %4138 = vrot.lane.b32.xlu0 %v3160, 4
    %v4139 = vpop.permute.xlu0 %4138
    %4140 = vrot.lane.b32.xlu0 %v3432, 4
    %v4141 = vpop.permute.xlu0 %4140
    %4142 = vrot.lane.b32.xlu0 %v3704, 4
    %v4143 = vpop.permute.xlu0 %4142
    %4144 = vrot.lane.b32.xlu0 %v3976, 4
    %v4145 = vpop.permute.xlu0 %4144
    %4154 = vrot.lane.b32.xlu0 %v3161, 6
    %v4155 = vpop.permute.xlu0 %4154
    %4156 = vrot.lane.b32.xlu0 %v3433, 6
    %v4157 = vpop.permute.xlu0 %4156
    %4158 = vrot.lane.b32.xlu0 %v3705, 6
    %v4159 = vpop.permute.xlu0 %4158
    %4160 = vrot.lane.b32.xlu0 %v3977, 6
    %v4161 = vpop.permute.xlu0 %4160
    %4170 = vrot.lane.b32.xlu0 %v3162, 8
    %v4171 = vpop.permute.xlu0 %4170
    %4172 = vrot.lane.b32.xlu0 %v3434, 8
    %v4173 = vpop.permute.xlu0 %4172
    %4174 = vrot.lane.b32.xlu0 %v3706, 8
    %v4175 = vpop.permute.xlu0 %4174
    %4176 = vrot.lane.b32.xlu0 %v3978, 8
    %v4177 = vpop.permute.xlu0 %4176
    %4186 = vrot.lane.b32.xlu0 %v3163, 10
    %v4187 = vpop.permute.xlu0 %4186
    %4188 = vrot.lane.b32.xlu0 %v3435, 10
    %v4189 = vpop.permute.xlu0 %4188
    %4190 = vrot.lane.b32.xlu0 %v3707, 10
    %v4191 = vpop.permute.xlu0 %4190
    %4192 = vrot.lane.b32.xlu0 %v3979, 10
    %v4193 = vpop.permute.xlu0 %4192
    %4202 = vrot.lane.b32.xlu0 %v3164, 12
    %v4203 = vpop.permute.xlu0 %4202
    %4204 = vrot.lane.b32.xlu0 %v3436, 12
    %v4205 = vpop.permute.xlu0 %4204
    %4206 = vrot.lane.b32.xlu0 %v3708, 12
    %v4207 = vpop.permute.xlu0 %4206
    %4208 = vrot.lane.b32.xlu0 %v3980, 12
    %v4209 = vpop.permute.xlu0 %4208
    %4218 = vrot.lane.b32.xlu0 %v3165, 14
    %v4219 = vpop.permute.xlu0 %4218
    %4220 = vrot.lane.b32.xlu0 %v3437, 14
    %v4221 = vpop.permute.xlu0 %4220
    %4222 = vrot.lane.b32.xlu0 %v3709, 14
    %v4223 = vpop.permute.xlu0 %4222
    %4224 = vrot.lane.b32.xlu0 %v3981, 14
    %v4225 = vpop.permute.xlu0 %4224
    %4234 = vrot.lane.b32.xlu0 %v3294, 16
    %v4235 = vpop.permute.xlu0 %4234
    %4236 = vrot.lane.b32.xlu0 %v3566, 16
    %v4237 = vpop.permute.xlu0 %4236
    %4238 = vrot.lane.b32.xlu0 %v3838, 16
    %v4239 = vpop.permute.xlu0 %4238
    %4240 = vrot.lane.b32.xlu0 %v4110, 16
    %v4241 = vpop.permute.xlu0 %4240
    %4250 = vrot.lane.b32.xlu0 %v3295, 18
    %v4251 = vpop.permute.xlu0 %4250
    %4252 = vrot.lane.b32.xlu0 %v3567, 18
    %v4253 = vpop.permute.xlu0 %4252
    %4254 = vrot.lane.b32.xlu0 %v3839, 18
    %v4255 = vpop.permute.xlu0 %4254
    %4256 = vrot.lane.b32.xlu0 %v4111, 18
    %v4257 = vpop.permute.xlu0 %4256
    %4266 = vrot.lane.b32.xlu0 %v3296, 20
    %v4267 = vpop.permute.xlu0 %4266
    %4268 = vrot.lane.b32.xlu0 %v3568, 20
    %v4269 = vpop.permute.xlu0 %4268
    %4270 = vrot.lane.b32.xlu0 %v3840, 20
    %v4271 = vpop.permute.xlu0 %4270
    %4272 = vrot.lane.b32.xlu0 %v4112, 20
    %v4273 = vpop.permute.xlu0 %4272
    %4282 = vrot.lane.b32.xlu0 %v3297, 22
    %v4283 = vpop.permute.xlu0 %4282
    %4284 = vrot.lane.b32.xlu0 %v3569, 22
    %v4285 = vpop.permute.xlu0 %4284
    %4286 = vrot.lane.b32.xlu0 %v3841, 22
    %v4287 = vpop.permute.xlu0 %4286
    %4288 = vrot.lane.b32.xlu0 %v4113, 22
    %v4289 = vpop.permute.xlu0 %4288
    %4298 = vrot.lane.b32.xlu0 %v3298, 24
    %v4299 = vpop.permute.xlu0 %4298
    %4300 = vrot.lane.b32.xlu0 %v3570, 24
    %v4301 = vpop.permute.xlu0 %4300
    %4302 = vrot.lane.b32.xlu0 %v3842, 24
    %v4303 = vpop.permute.xlu0 %4302
    %4304 = vrot.lane.b32.xlu0 %v4114, 24
    %v4305 = vpop.permute.xlu0 %4304
    %4314 = vrot.lane.b32.xlu0 %v3299, 26
    %v4315 = vpop.permute.xlu0 %4314
    %4316 = vrot.lane.b32.xlu0 %v3571, 26
    %v4317 = vpop.permute.xlu0 %4316
    %4318 = vrot.lane.b32.xlu0 %v3843, 26
    %v4319 = vpop.permute.xlu0 %4318
    %4320 = vrot.lane.b32.xlu0 %v4115, 26
    %v4321 = vpop.permute.xlu0 %4320
    %4330 = vrot.lane.b32.xlu0 %v3300, 28
    %v4331 = vpop.permute.xlu0 %4330
    %4332 = vrot.lane.b32.xlu0 %v3572, 28
    %v4333 = vpop.permute.xlu0 %4332
    %4334 = vrot.lane.b32.xlu0 %v3844, 28
    %v4335 = vpop.permute.xlu0 %4334
    %4336 = vrot.lane.b32.xlu0 %v4116, 28
    %v4337 = vpop.permute.xlu0 %4336
    %4346 = vrot.lane.b32.xlu0 %v3301, 30
    %v4347 = vpop.permute.xlu0 %4346
    %4348 = vrot.lane.b32.xlu0 %v3573, 30
    %v4349 = vpop.permute.xlu0 %4348
    %4350 = vrot.lane.b32.xlu0 %v3845, 30
    %v4351 = vpop.permute.xlu0 %4350
    %4352 = vrot.lane.b32.xlu0 %v4117, 30
    %v4353 = vpop.permute.xlu0 %4352
    %v4358 = vsel %vm2187, %v3158, %v4123
    %v4359 = vsel %vm2187, %v3430, %v4125
    %v4360 = vsel %vm2187, %v3702, %v4127
    %v4361 = vsel %vm2187, %v3974, %v4129
    %v4362 = vsel %vm2192, %v4358, %v4139
    %v4363 = vsel %vm2192, %v4359, %v4141
    %v4364 = vsel %vm2192, %v4360, %v4143
    %v4365 = vsel %vm2192, %v4361, %v4145
    %v4366 = vsel %vm2197, %v4362, %v4155
    %v4367 = vsel %vm2197, %v4363, %v4157
    %v4368 = vsel %vm2197, %v4364, %v4159
    %v4369 = vsel %vm2197, %v4365, %v4161
    %v4370 = vsel %vm2202, %v4366, %v4171
    %v4371 = vsel %vm2202, %v4367, %v4173
    %v4372 = vsel %vm2202, %v4368, %v4175
    %v4373 = vsel %vm2202, %v4369, %v4177
    %v4374 = vsel %vm2207, %v4370, %v4187
    %v4375 = vsel %vm2207, %v4371, %v4189
    %v4376 = vsel %vm2207, %v4372, %v4191
    %v4377 = vsel %vm2207, %v4373, %v4193
    %v4378 = vsel %vm2212, %v4374, %v4203
    %v4379 = vsel %vm2212, %v4375, %v4205
    %v4380 = vsel %vm2212, %v4376, %v4207
    %v4381 = vsel %vm2212, %v4377, %v4209
    %v4382 = vsel %vm2217, %v4378, %v4219
    %v4383 = vsel %vm2217, %v4379, %v4221
    %v4384 = vsel %vm2217, %v4380, %v4223
    %v4385 = vsel %vm2217, %v4381, %v4225
    %v4386 = vsel %vm2222, %v4382, %v4235
    %v4387 = vsel %vm2222, %v4383, %v4237
    %v4388 = vsel %vm2222, %v4384, %v4239
    %v4389 = vsel %vm2222, %v4385, %v4241
    %v4390 = vsel %vm2227, %v4386, %v4251
    %v4391 = vsel %vm2227, %v4387, %v4253
    %v4392 = vsel %vm2227, %v4388, %v4255
    %v4393 = vsel %vm2227, %v4389, %v4257
    %v4394 = vsel %vm2232, %v4390, %v4267
    %v4395 = vsel %vm2232, %v4391, %v4269
    %v4396 = vsel %vm2232, %v4392, %v4271
    %v4397 = vsel %vm2232, %v4393, %v4273
    %v4398 = vsel %vm2237, %v4394, %v4283
    %v4399 = vsel %vm2237, %v4395, %v4285
    %v4400 = vsel %vm2237, %v4396, %v4287
    %v4401 = vsel %vm2237, %v4397, %v4289
    %v4402 = vsel %vm2242, %v4398, %v4299
    %v4403 = vsel %vm2242, %v4399, %v4301
    %v4404 = vsel %vm2242, %v4400, %v4303
    %v4405 = vsel %vm2242, %v4401, %v4305
    %v4406 = vsel %vm2247, %v4402, %v4315
    %v4407 = vsel %vm2247, %v4403, %v4317
    %v4408 = vsel %vm2247, %v4404, %v4319
    %v4409 = vsel %vm2247, %v4405, %v4321
    %v4410 = vsel %vm2252, %v4406, %v4331
    %v4411 = vsel %vm2252, %v4407, %v4333
    %v4412 = vsel %vm2252, %v4408, %v4335
    %v4413 = vsel %vm2252, %v4409, %v4337
    %v4414 = vsel %vm2257, %v4410, %v4347
    %v4415 = vsel %vm2257, %v4411, %v4349
    %v4416 = vsel %vm2257, %v4412, %v4351
    %v4417 = vsel %vm2257, %v4413, %v4353
    %4422 = vrot.lane.b32.xlu0 %v4414, 32
    %v4423 = vpop.permute.xlu0 %4422
    %4424 = vrot.lane.b32.xlu0 %v4415, 32
    %v4425 = vpop.permute.xlu0 %4424
    %4426 = vrot.lane.b32.xlu0 %v4416, 32
    %v4427 = vpop.permute.xlu0 %4426
    %4428 = vrot.lane.b32.xlu0 %v4417, 32
    %v4429 = vpop.permute.xlu0 %4428
    %vm4434 = vcmask 261120
    %v4435 = vsel %vm4434, %v2258, %v4423
    %v4436 = vsel %vm4434, %v2259, %v4425
    %v4437 = vsel %vm4434, %v2260, %v4427
    %v4438 = vsel %vm4434, %v2261, %v4429
    %vm4439 = vcmask 523264
    %4440 = vst.msk [vmem:[#allocation5] sm:$0xff] %vm4439, %v4435
    %4441 = vst.msk [vmem:[#allocation5 + $0x8] sm:$0xff] %vm4439, %v4436
    %4442 = vst.msk [vmem:[#allocation5 + $0x10] sm:$0xff] %vm4439, %v4437
    %4443 = vst.msk [vmem:[#allocation5 + $0x18] sm:$0xff] %vm4439, %v4438
    // Predicated region
    $region10: #{tpu_custom_call.1} parent=1 // pred_check
      _
    $region11: #{tpu_custom_call.1} parent=1 // pred_check_branch
      %4445 = sbr.rel (0) target = $region13
    $region12: #{tpu_custom_call.1} parent=1 // pred_region
      %s4447 = ssub.s32 512, 512
      %4448 = vsyncadd [#allocation4], %s4447
      %s4449 = sshll.u32 [#allocation5], 4
      %s4450 = int_to_ptr.vmem [resolvable:$true] %s4449
      %4455 = dma.vmem_to_hbm [thread:$0]  %s4450, 512, %s1, [#allocation4], 128, 128, 8
    $region13: #{tpu_custom_call.1} parent=1 // pred_fallthru
      _
    // Predicated region
    $region14: #{tpu_custom_call.1} parent=1 // pred_check
      _
    $region15: #{tpu_custom_call.1} parent=1 // pred_check_branch
      %4457 = sbr.rel (0) target = $region17
    $region16: #{tpu_custom_call.1} parent=1 // pred_region
      %4458 = dma.done [#allocation4], 512
    $region17: #{tpu_custom_call.1} parent=1 // pred_fallthru
      _
    %4459 = vsyncpa [#allocation3], 1
    %4460 = vsyncpa [#allocation4], 1

// kernel: tpu_custom_call.1
$region0: #{tpu_custom_call.1}
  #allocation0 [shape = 'u32[]', space=smem, size = 0x4, offset = 0x4, fixed_abs, tag = 'smem constant byte address 0x4 - core index']
  #allocation1 [shape = 'u32[144,128]{1,0:T(1,128)}', space=vmem, size = 0x12000, scoped, tag = 'internal scratch']
  %s0 = inlined_call_operand.hbm [shape: f32[8,4,16,16], index: 0, kind: input, shape index: {}]
  %s1 = inlined_call_operand.hbm [shape: f32[8,4,16,16], index: 1, kind: output, shape index: {}]
  %s2 = sld [smem:[#allocation0]]
  $region18: #{tpu_custom_call.1} parent=0
    _
  %s4 = ssub.s32 1, %s2
  %s5 = scalar_select 0, %s4, %s2
  $region1: #{tpu_custom_call.1} parent=0
    #allocation2 [shape = 'u8[262144]{0}', space=vmem, size = 0x40000, scoped, tag = 'input window, operand 0, single buffered']
    #allocation3 [shape = 's32[1]{0}', space=sflag, size = 0x4, scoped, tag = 'scoped memory for tpu_custom_call.1']
    #allocation4 [shape = 's32[1]{0}', space=sflag, size = 0x4, scoped, tag = 'scoped memory for tpu_custom_call.1']
    #allocation5 [shape = 'u8[262144]{0}', space=vmem, size = 0x40000, scoped, tag = 'output window, operand 0, single buffered']
    %6 = vsyncpa [#allocation3], 0
    %7 = vsyncpa [#allocation4], 0
    // Predicated region
    $region2: #{tpu_custom_call.1} parent=1 // pred_check
      _
    $region3: #{tpu_custom_call.1} parent=1 // pred_check_branch
      %9 = sbr.rel (0) target = $region5
    $region4: #{tpu_custom_call.1} parent=1 // pred_region
      %s11 = ssub.s32 8192, 8192
      %12 = vsyncadd [#allocation3], %s11
      %s13 = sshll.u32 [#allocation2], 4
      %s14 = int_to_ptr.vmem [resolvable:$true] %s13
      %19 = dma.hbm_to_vmem [thread:$0]  %s0, 8192, %s14, [#allocation3], 128, 128, 8
    $region5: #{tpu_custom_call.1} parent=1 // pred_fallthru
      _
    // Predicated region
    $region6: #{tpu_custom_call.1} parent=1 // pred_check
      _
    $region7: #{tpu_custom_call.1} parent=1 // pred_check_branch
      %21 = sbr.rel (0) target = $region9
    $region8: #{tpu_custom_call.1} parent=1 // pred_region
      %22 = dma.done [#allocation3], 8192
    $region9: #{tpu_custom_call.1} parent=1 // pred_fallthru
      _
    %v23 = vld [vmem:[#allocation2] sm:$0xff]
    %v24 = vld [vmem:[#allocation2 + $0x8] sm:$0xff]
    %v25 = vld [vmem:[#allocation2 + $0x40] sm:$0xff]
    %v26 = vld [vmem:[#allocation2 + $0x48] sm:$0xff]
    %v27 = vld [vmem:[#allocation2 + $0x80] sm:$0xff]
    %v28 = vld [vmem:[#allocation2 + $0x88] sm:$0xff]
    %v29 = vld [vmem:[#allocation2 + $0xc0] sm:$0xff]
    %v30 = vld [vmem:[#allocation2 + $0xc8] sm:$0xff]
    %v31 = vld [vmem:[#allocation2 + $0x100] sm:$0xff]
    %v32 = vld [vmem:[#allocation2 + $0x108] sm:$0xff]
    %v33 = vld [vmem:[#allocation2 + $0x140] sm:$0xff]
    %v34 = vld [vmem:[#allocation2 + $0x148] sm:$0xff]
    %v35 = vld [vmem:[#allocation2 + $0x180] sm:$0xff]
    %v36 = vld [vmem:[#allocation2 + $0x188] sm:$0xff]
    %v37 = vld [vmem:[#allocation2 + $0x1c0] sm:$0xff]
    %v38 = vld [vmem:[#allocation2 + $0x1c8] sm:$0xff]
    %s39 = scalar_lea.vmem [#allocation2], 16
    %v40 = vld [vmem:[%s39] sm:$0xff]
    %v41 = vld [vmem:[%s39 + $0x8] sm:$0xff]
    %v42 = vld [vmem:[%s39 + $0x40] sm:$0xff]
    %v43 = vld [vmem:[%s39 + $0x48] sm:$0xff]
    %v44 = vld [vmem:[%s39 + $0x80] sm:$0xff]
    %v45 = vld [vmem:[%s39 + $0x88] sm:$0xff]
    %v46 = vld [vmem:[%s39 + $0xc0] sm:$0xff]
    %v47 = vld [vmem:[%s39 + $0xc8] sm:$0xff]
    %v48 = vld [vmem:[%s39 + $0x100] sm:$0xff]
    %v49 = vld [vmem:[%s39 + $0x108] sm:$0xff]
    %v50 = vld [vmem:[%s39 + $0x140] sm:$0xff]
    %v51 = vld [vmem:[%s39 + $0x148] sm:$0xff]
    %v52 = vld [vmem:[%s39 + $0x180] sm:$0xff]
    %v53 = vld [vmem:[%s39 + $0x188] sm:$0xff]
    %v54 = vld [vmem:[%s39 + $0x1c0] sm:$0xff]
    %v55 = vld [vmem:[%s39 + $0x1c8] sm:$0xff]
    %s56 = scalar_lea.vmem [#allocation2], 32
    %v57 = vld [vmem:[%s56] sm:$0xff]
    %v58 = vld [vmem:[%s56 + $0x8] sm:$0xff]
    %v59 = vld [vmem:[%s56 + $0x40] sm:$0xff]
    %v60 = vld [vmem:[%s56 + $0x48] sm:$0xff]
    %v61 = vld [vmem:[%s56 + $0x80] sm:$0xff]
    %v62 = vld [vmem:[%s56 + $0x88] sm:$0xff]
    %v63 = vld [vmem:[%s56 + $0xc0] sm:$0xff]
    %v64 = vld [vmem:[%s56 + $0xc8] sm:$0xff]
    %v65 = vld [vmem:[%s56 + $0x100] sm:$0xff]
    %v66 = vld [vmem:[%s56 + $0x108] sm:$0xff]
    %v67 = vld [vmem:[%s56 + $0x140] sm:$0xff]
    %v68 = vld [vmem:[%s56 + $0x148] sm:$0xff]
    %v69 = vld [vmem:[%s56 + $0x180] sm:$0xff]
    %v70 = vld [vmem:[%s56 + $0x188] sm:$0xff]
    %v71 = vld [vmem:[%s56 + $0x1c0] sm:$0xff]
    %v72 = vld [vmem:[%s56 + $0x1c8] sm:$0xff]
    %s73 = scalar_lea.vmem [#allocation2], 48
    %v74 = vld [vmem:[%s73] sm:$0xff]
    %v75 = vld [vmem:[%s73 + $0x8] sm:$0xff]
    %v76 = vld [vmem:[%s73 + $0x40] sm:$0xff]
    %v77 = vld [vmem:[%s73 + $0x48] sm:$0xff]
    %v78 = vld [vmem:[%s73 + $0x80] sm:$0xff]
    %v79 = vld [vmem:[%s73 + $0x88] sm:$0xff]
    %v80 = vld [vmem:[%s73 + $0xc0] sm:$0xff]
    %v81 = vld [vmem:[%s73 + $0xc8] sm:$0xff]
    %v82 = vld [vmem:[%s73 + $0x100] sm:$0xff]
    %v83 = vld [vmem:[%s73 + $0x108] sm:$0xff]
    %v84 = vld [vmem:[%s73 + $0x140] sm:$0xff]
    %v85 = vld [vmem:[%s73 + $0x148] sm:$0xff]
    %v86 = vld [vmem:[%s73 + $0x180] sm:$0xff]
    %v87 = vld [vmem:[%s73 + $0x188] sm:$0xff]
    %v88 = vld [vmem:[%s73 + $0x1c0] sm:$0xff]
    %v89 = vld [vmem:[%s73 + $0x1c8] sm:$0xff]
    %v90 = vadd.f32 %v23, %v40
    %v91 = vadd.f32 %v24, %v41
    %v92 = vadd.f32 %v25, %v42
    %v93 = vadd.f32 %v26, %v43
    %v94 = vadd.f32 %v27, %v44
    %v95 = vadd.f32 %v28, %v45
    %v96 = vadd.f32 %v29, %v46
    %v97 = vadd.f32 %v30, %v47
    %v98 = vadd.f32 %v31, %v48
    %v99 = vadd.f32 %v32, %v49
    %v100 = vadd.f32 %v33, %v50
    %v101 = vadd.f32 %v34, %v51
    %v102 = vadd.f32 %v35, %v52
    %v103 = vadd.f32 %v36, %v53
    %v104 = vadd.f32 %v37, %v54
    %v105 = vadd.f32 %v38, %v55
    %v106 = vsub.f32 %v23, %v40
    %v107 = vsub.f32 %v24, %v41
    %v108 = vsub.f32 %v25, %v42
    %v109 = vsub.f32 %v26, %v43
    %v110 = vsub.f32 %v27, %v44
    %v111 = vsub.f32 %v28, %v45
    %v112 = vsub.f32 %v29, %v46
    %v113 = vsub.f32 %v30, %v47
    %v114 = vsub.f32 %v31, %v48
    %v115 = vsub.f32 %v32, %v49
    %v116 = vsub.f32 %v33, %v50
    %v117 = vsub.f32 %v34, %v51
    %v118 = vsub.f32 %v35, %v52
    %v119 = vsub.f32 %v36, %v53
    %v120 = vsub.f32 %v37, %v54
    %v121 = vsub.f32 %v38, %v55
    %v122 = vadd.f32 %v57, %v74
    %v123 = vadd.f32 %v58, %v75
    %v124 = vadd.f32 %v59, %v76
    %v125 = vadd.f32 %v60, %v77
    %v126 = vadd.f32 %v61, %v78
    %v127 = vadd.f32 %v62, %v79
    %v128 = vadd.f32 %v63, %v80
    %v129 = vadd.f32 %v64, %v81
    %v130 = vadd.f32 %v65, %v82
    %v131 = vadd.f32 %v66, %v83
    %v132 = vadd.f32 %v67, %v84
    %v133 = vadd.f32 %v68, %v85
    %v134 = vadd.f32 %v69, %v86
    %v135 = vadd.f32 %v70, %v87
    %v136 = vadd.f32 %v71, %v88
    %v137 = vadd.f32 %v72, %v89
    %v138 = vsub.f32 %v57, %v74
    %v139 = vsub.f32 %v58, %v75
    %v140 = vsub.f32 %v59, %v76
    %v141 = vsub.f32 %v60, %v77
    %v142 = vsub.f32 %v61, %v78
    %v143 = vsub.f32 %v62, %v79
    %v144 = vsub.f32 %v63, %v80
    %v145 = vsub.f32 %v64, %v81
    %v146 = vsub.f32 %v65, %v82
    %v147 = vsub.f32 %v66, %v83
    %v148 = vsub.f32 %v67, %v84
    %v149 = vsub.f32 %v68, %v85
    %v150 = vsub.f32 %v69, %v86
    %v151 = vsub.f32 %v70, %v87
    %v152 = vsub.f32 %v71, %v88
    %v153 = vsub.f32 %v72, %v89
    %v154 = vadd.f32 %v90, %v122
    %v155 = vadd.f32 %v91, %v123
    %v156 = vadd.f32 %v92, %v124
    %v157 = vadd.f32 %v93, %v125
    %v158 = vadd.f32 %v94, %v126
    %v159 = vadd.f32 %v95, %v127
    %v160 = vadd.f32 %v96, %v128
    %v161 = vadd.f32 %v97, %v129
    %v162 = vadd.f32 %v98, %v130
    %v163 = vadd.f32 %v99, %v131
    %v164 = vadd.f32 %v100, %v132
    %v165 = vadd.f32 %v101, %v133
    %v166 = vadd.f32 %v102, %v134
    %v167 = vadd.f32 %v103, %v135
    %v168 = vadd.f32 %v104, %v136
    %v169 = vadd.f32 %v105, %v137
    %v170 = vmul.f32 %v154, 0.5
    %v171 = vmul.f32 %v155, 0.5
    %v172 = vmul.f32 %v156, 0.5
    %v173 = vmul.f32 %v157, 0.5
    %v174 = vmul.f32 %v158, 0.5
    %v175 = vmul.f32 %v159, 0.5
    %v176 = vmul.f32 %v160, 0.5
    %v177 = vmul.f32 %v161, 0.5
    %v178 = vmul.f32 %v162, 0.5
    %v179 = vmul.f32 %v163, 0.5
    %v180 = vmul.f32 %v164, 0.5
    %v181 = vmul.f32 %v165, 0.5
    %v182 = vmul.f32 %v166, 0.5
    %v183 = vmul.f32 %v167, 0.5
    %v184 = vmul.f32 %v168, 0.5
    %v185 = vmul.f32 %v169, 0.5
    %v186 = vsub.f32 %v90, %v122
    %v187 = vsub.f32 %v91, %v123
    %v188 = vsub.f32 %v92, %v124
    %v189 = vsub.f32 %v93, %v125
    %v190 = vsub.f32 %v94, %v126
    %v191 = vsub.f32 %v95, %v127
    %v192 = vsub.f32 %v96, %v128
    %v193 = vsub.f32 %v97, %v129
    %v194 = vsub.f32 %v98, %v130
    %v195 = vsub.f32 %v99, %v131
    %v196 = vsub.f32 %v100, %v132
    %v197 = vsub.f32 %v101, %v133
    %v198 = vsub.f32 %v102, %v134
    %v199 = vsub.f32 %v103, %v135
    %v200 = vsub.f32 %v104, %v136
    %v201 = vsub.f32 %v105, %v137
    %v202 = vmul.f32 %v186, 0.5
    %v203 = vmul.f32 %v187, 0.5
    %v204 = vmul.f32 %v188, 0.5
    %v205 = vmul.f32 %v189, 0.5
    %v206 = vmul.f32 %v190, 0.5
    %v207 = vmul.f32 %v191, 0.5
    %v208 = vmul.f32 %v192, 0.5
    %v209 = vmul.f32 %v193, 0.5
    %v210 = vmul.f32 %v194, 0.5
    %v211 = vmul.f32 %v195, 0.5
    %v212 = vmul.f32 %v196, 0.5
    %v213 = vmul.f32 %v197, 0.5
    %v214 = vmul.f32 %v198, 0.5
    %v215 = vmul.f32 %v199, 0.5
    %v216 = vmul.f32 %v200, 0.5
    %v217 = vmul.f32 %v201, 0.5
    %v218 = vadd.f32 %v106, %v138
    %v219 = vadd.f32 %v107, %v139
    %v220 = vadd.f32 %v108, %v140
    %v221 = vadd.f32 %v109, %v141
    %v222 = vadd.f32 %v110, %v142
    %v223 = vadd.f32 %v111, %v143
    %v224 = vadd.f32 %v112, %v144
    %v225 = vadd.f32 %v113, %v145
    %v226 = vadd.f32 %v114, %v146
    %v227 = vadd.f32 %v115, %v147
    %v228 = vadd.f32 %v116, %v148
    %v229 = vadd.f32 %v117, %v149
    %v230 = vadd.f32 %v118, %v150
    %v231 = vadd.f32 %v119, %v151
    %v232 = vadd.f32 %v120, %v152
    %v233 = vadd.f32 %v121, %v153
    %v234 = vmul.f32 %v218, 0.5
    %v235 = vmul.f32 %v219, 0.5
    %v236 = vmul.f32 %v220, 0.5
    %v237 = vmul.f32 %v221, 0.5
    %v238 = vmul.f32 %v222, 0.5
    %v239 = vmul.f32 %v223, 0.5
    %v240 = vmul.f32 %v224, 0.5
    %v241 = vmul.f32 %v225, 0.5
    %v242 = vmul.f32 %v226, 0.5
    %v243 = vmul.f32 %v227, 0.5
    %v244 = vmul.f32 %v228, 0.5
    %v245 = vmul.f32 %v229, 0.5
    %v246 = vmul.f32 %v230, 0.5
    %v247 = vmul.f32 %v231, 0.5
    %v248 = vmul.f32 %v232, 0.5
    %v249 = vmul.f32 %v233, 0.5
    %v250 = vsub.f32 %v106, %v138
    %v251 = vsub.f32 %v107, %v139
    %v252 = vsub.f32 %v108, %v140
    %v253 = vsub.f32 %v109, %v141
    %v254 = vsub.f32 %v110, %v142
    %v255 = vsub.f32 %v111, %v143
    %v256 = vsub.f32 %v112, %v144
    %v257 = vsub.f32 %v113, %v145
    %v258 = vsub.f32 %v114, %v146
    %v259 = vsub.f32 %v115, %v147
    %v260 = vsub.f32 %v116, %v148
    %v261 = vsub.f32 %v117, %v149
    %v262 = vsub.f32 %v118, %v150
    %v263 = vsub.f32 %v119, %v151
    %v264 = vsub.f32 %v120, %v152
    %v265 = vsub.f32 %v121, %v153
    %v266 = vmul.f32 %v250, 0.5
    %v267 = vmul.f32 %v251, 0.5
    %v268 = vmul.f32 %v252, 0.5
    %v269 = vmul.f32 %v253, 0.5
    %v270 = vmul.f32 %v254, 0.5
    %v271 = vmul.f32 %v255, 0.5
    %v272 = vmul.f32 %v256, 0.5
    %v273 = vmul.f32 %v257, 0.5
    %v274 = vmul.f32 %v258, 0.5
    %v275 = vmul.f32 %v259, 0.5
    %v276 = vmul.f32 %v260, 0.5
    %v277 = vmul.f32 %v261, 0.5
    %v278 = vmul.f32 %v262, 0.5
    %v279 = vmul.f32 %v263, 0.5
    %v280 = vmul.f32 %v264, 0.5
    %v281 = vmul.f32 %v265, 0.5
    %vm282 = vcmask 130048
    %283 = vst.msk [vmem:[#allocation5] sm:$0xff] %vm282, %v170
    %284 = vst.msk [vmem:[#allocation5 + $0x8] sm:$0xff] %vm282, %v171
    %285 = vst.msk [vmem:[#allocation5 + $0x40] sm:$0xff] %vm282, %v172
    %286 = vst.msk [vmem:[#allocation5 + $0x48] sm:$0xff] %vm282, %v173
    %287 = vst.msk [vmem:[#allocation5 + $0x80] sm:$0xff] %vm282, %v174
    %288 = vst.msk [vmem:[#allocation5 + $0x88] sm:$0xff] %vm282, %v175
    %289 = vst.msk [vmem:[#allocation5 + $0xc0] sm:$0xff] %vm282, %v176
    %290 = vst.msk [vmem:[#allocation5 + $0xc8] sm:$0xff] %vm282, %v177
    %291 = vst.msk [vmem:[#allocation5 + $0x100] sm:$0xff] %vm282, %v178
    %292 = vst.msk [vmem:[#allocation5 + $0x108] sm:$0xff] %vm282, %v179
    %293 = vst.msk [vmem:[#allocation5 + $0x140] sm:$0xff] %vm282, %v180
    %294 = vst.msk [vmem:[#allocation5 + $0x148] sm:$0xff] %vm282, %v181
    %295 = vst.msk [vmem:[#allocation5 + $0x180] sm:$0xff] %vm282, %v182
    %296 = vst.msk [vmem:[#allocation5 + $0x188] sm:$0xff] %vm282, %v183
    %297 = vst.msk [vmem:[#allocation5 + $0x1c0] sm:$0xff] %vm282, %v184
    %298 = vst.msk [vmem:[#allocation5 + $0x1c8] sm:$0xff] %vm282, %v185
    %s299 = scalar_lea.vmem [#allocation5], 16
    %300 = vst.msk [vmem:[%s299] sm:$0xff] %vm282, %v202
    %301 = vst.msk [vmem:[%s299 + $0x8] sm:$0xff] %vm282, %v203
    %302 = vst.msk [vmem:[%s299 + $0x40] sm:$0xff] %vm282, %v204
    %303 = vst.msk [vmem:[%s299 + $0x48] sm:$0xff] %vm282, %v205
    %304 = vst.msk [vmem:[%s299 + $0x80] sm:$0xff] %vm282, %v206
    %305 = vst.msk [vmem:[%s299 + $0x88] sm:$0xff] %vm282, %v207
    %306 = vst.msk [vmem:[%s299 + $0xc0] sm:$0xff] %vm282, %v208
    %307 = vst.msk [vmem:[%s299 + $0xc8] sm:$0xff] %vm282, %v209
    %308 = vst.msk [vmem:[%s299 + $0x100] sm:$0xff] %vm282, %v210
    %309 = vst.msk [vmem:[%s299 + $0x108] sm:$0xff] %vm282, %v211
    %310 = vst.msk [vmem:[%s299 + $0x140] sm:$0xff] %vm282, %v212
    %311 = vst.msk [vmem:[%s299 + $0x148] sm:$0xff] %vm282, %v213
    %312 = vst.msk [vmem:[%s299 + $0x180] sm:$0xff] %vm282, %v214
    %313 = vst.msk [vmem:[%s299 + $0x188] sm:$0xff] %vm282, %v215
    %314 = vst.msk [vmem:[%s299 + $0x1c0] sm:$0xff] %vm282, %v216
    %315 = vst.msk [vmem:[%s299 + $0x1c8] sm:$0xff] %vm282, %v217
    %s316 = scalar_lea.vmem [#allocation5], 32
    %317 = vst.msk [vmem:[%s316] sm:$0xff] %vm282, %v234
    %318 = vst.msk [vmem:[%s316 + $0x8] sm:$0xff] %vm282, %v235
    %319 = vst.msk [vmem:[%s316 + $0x40] sm:$0xff] %vm282, %v236
    %320 = vst.msk [vmem:[%s316 + $0x48] sm:$0xff] %vm282, %v237
    %321 = vst.msk [vmem:[%s316 + $0x80] sm:$0xff] %vm282, %v238
    %322 = vst.msk [vmem:[%s316 + $0x88] sm:$0xff] %vm282, %v239
    %323 = vst.msk [vmem:[%s316 + $0xc0] sm:$0xff] %vm282, %v240
    %324 = vst.msk [vmem:[%s316 + $0xc8] sm:$0xff] %vm282, %v241
    %325 = vst.msk [vmem:[%s316 + $0x100] sm:$0xff] %vm282, %v242
    %326 = vst.msk [vmem:[%s316 + $0x108] sm:$0xff] %vm282, %v243
    %327 = vst.msk [vmem:[%s316 + $0x140] sm:$0xff] %vm282, %v244
    %328 = vst.msk [vmem:[%s316 + $0x148] sm:$0xff] %vm282, %v245
    %329 = vst.msk [vmem:[%s316 + $0x180] sm:$0xff] %vm282, %v246
    %330 = vst.msk [vmem:[%s316 + $0x188] sm:$0xff] %vm282, %v247
    %331 = vst.msk [vmem:[%s316 + $0x1c0] sm:$0xff] %vm282, %v248
    %332 = vst.msk [vmem:[%s316 + $0x1c8] sm:$0xff] %vm282, %v249
    %s333 = scalar_lea.vmem [#allocation5], 48
    %334 = vst.msk [vmem:[%s333] sm:$0xff] %vm282, %v266
    %335 = vst.msk [vmem:[%s333 + $0x8] sm:$0xff] %vm282, %v267
    %336 = vst.msk [vmem:[%s333 + $0x40] sm:$0xff] %vm282, %v268
    %337 = vst.msk [vmem:[%s333 + $0x48] sm:$0xff] %vm282, %v269
    %338 = vst.msk [vmem:[%s333 + $0x80] sm:$0xff] %vm282, %v270
    %339 = vst.msk [vmem:[%s333 + $0x88] sm:$0xff] %vm282, %v271
    %340 = vst.msk [vmem:[%s333 + $0xc0] sm:$0xff] %vm282, %v272
    %341 = vst.msk [vmem:[%s333 + $0xc8] sm:$0xff] %vm282, %v273
    %342 = vst.msk [vmem:[%s333 + $0x100] sm:$0xff] %vm282, %v274
    %343 = vst.msk [vmem:[%s333 + $0x108] sm:$0xff] %vm282, %v275
    %344 = vst.msk [vmem:[%s333 + $0x140] sm:$0xff] %vm282, %v276
    %345 = vst.msk [vmem:[%s333 + $0x148] sm:$0xff] %vm282, %v277
    %346 = vst.msk [vmem:[%s333 + $0x180] sm:$0xff] %vm282, %v278
    %347 = vst.msk [vmem:[%s333 + $0x188] sm:$0xff] %vm282, %v279
    %348 = vst.msk [vmem:[%s333 + $0x1c0] sm:$0xff] %vm282, %v280
    %349 = vst.msk [vmem:[%s333 + $0x1c8] sm:$0xff] %vm282, %v281
    // Predicated region
    $region10: #{tpu_custom_call.1} parent=1 // pred_check
      _
    $region11: #{tpu_custom_call.1} parent=1 // pred_check_branch
      %351 = sbr.rel (0) target = $region13
    $region12: #{tpu_custom_call.1} parent=1 // pred_region
      %s353 = ssub.s32 8192, 8192
      %354 = vsyncadd [#allocation4], %s353
      %s355 = sshll.u32 [#allocation5], 4
      %s356 = int_to_ptr.vmem [resolvable:$true] %s355
      %361 = dma.vmem_to_hbm [thread:$0]  %s356, 8192, %s1, [#allocation4], 128, 128, 8
    $region13: #{tpu_custom_call.1} parent=1 // pred_fallthru
      _
    // Predicated region
    $region14: #{tpu_custom_call.1} parent=1 // pred_check
      _
    $region15: #{tpu_custom_call.1} parent=1 // pred_check_branch
      %363 = sbr.rel (0) target = $region17
    $region16: #{tpu_custom_call.1} parent=1 // pred_region
      %364 = dma.done [#allocation4], 8192
    $region17: #{tpu_custom_call.1} parent=1 // pred_fallthru
      _
    %365 = vsyncpa [#allocation3], 1
    %366 = vsyncpa [#allocation4], 1

</llo_original>
